<compile_context>
chip_gen: v7x
topology: tpu7x:2x2x1
jax: 0.10.0
libtpu: 0.0.40
codegen_flags: <defaults>
</compile_context>

<pallas_src>
import functools
import math

import jax
import jax.numpy as jnp
from jax.experimental import pallas as pl
from jax.experimental.pallas import tpu as pltpu


# ---------------------------------------------------------------------------
# Per-generation tiling / VMEM configuration
# ---------------------------------------------------------------------------

def _round_up(x, m):
    return (x + m - 1) // m * m


@functools.lru_cache(maxsize=None)
def _tile_config():
    """(vmem_limit_bytes, tm, tn, tk) derived from physical VMEM capacity."""
    cap = 64 * 1024 * 1024                     # conservative default (v7x)
    try:
        info = pltpu.get_tpu_info()
        cap = int(getattr(info, "vmem_capacity_bytes", cap) or cap)
    except Exception:
        pass
    if cap > 96 * 1024 * 1024:                 # v5e / v6e: 128 MiB VMEM
        return 80 * 1024 * 1024, 256, 256, 1024
    # v7x (64 MiB per TensorCore) or unknown: stay under the safe scoped budget
    return 32 * 1024 * 1024, 256, 256, 512


def _fit_tile(dim, target, align):
    """Return (padded_dim, tile, nblocks); prefers a divisor tile (no pad)."""
    if dim <= target:
        return dim, dim, 1                     # whole-dim block, always legal
    t = target
    while t >= align:
        if dim % t == 0 and t % align == 0:
            return dim, t, dim // t
        t //= 2
    pad = _round_up(dim, target)               # pathological fallback
    return pad, target, pad // target


def _pad2d(a, rows, cols):
    pr, pc = rows - a.shape[0], cols - a.shape[1]
    if pr == 0 and pc == 0:
        return a
    return jnp.pad(a, ((0, pr), (0, pc)))


# ---------------------------------------------------------------------------
# Kernel 1: tiled matmul + bias (+ optional ReLU)
# ---------------------------------------------------------------------------

def _linear_kernel(x_ref, w_ref, b_ref, o_ref, acc_ref, *, activation):
    @pl.when(pl.program_id(2) == 0)
    def _():
        acc_ref[...] = jnp.zeros_like(acc_ref)

    acc_ref[...] += jnp.dot(x_ref[...].astype(jnp.bfloat16),
                            w_ref[...].astype(jnp.bfloat16),
                            preferred_element_type=jnp.float32)

    @pl.when(pl.program_id(2) == pl.num_programs(2) - 1)
    def _():
        r = acc_ref[...] + b_ref[...]          # bias already (1, N) f32
        if activation == "relu":
            r = jnp.maximum(r, 0.0)
        o_ref[...] = r.astype(o_ref.dtype)


def linear(x, w, b, activation="none", out_dtype=jnp.bfloat16):
    """act(x @ w + b). w: bf16 (K, N); b: f32 (1, N)."""
    M, K = x.shape
    N = w.shape[1]
    vmem_limit, TM, TN, TK = _tile_config()
    Mp, tm, nm = _fit_tile(M, TM, 8)
    Np, tn, nn = _fit_tile(N, TN, 128)
    Kp, tk, nk = _fit_tile(K, TK, 128)
    # padding below only triggers on pathological dims; normal path is a no-op
    xp = _pad2d(x, Mp, Kp)
    wp = _pad2d(w, Kp, Np)
    bp = _pad2d(b, 1, Np)

    out = pl.pallas_call(
        functools.partial(_linear_kernel, activation=activation),
        out_shape=jax.ShapeDtypeStruct((Mp, Np), out_dtype),
        grid_spec=pltpu.PrefetchScalarGridSpec(
            num_scalar_prefetch=0,
            grid=(nm, nn, nk),
            in_specs=[pl.BlockSpec((tm, tk), lambda i, j, k: (i, k)),
                      pl.BlockSpec((tk, tn), lambda i, j, k: (k, j)),
                      pl.BlockSpec((1, tn), lambda i, j, k: (0, j))],
            out_specs=pl.BlockSpec((tm, tn), lambda i, j, k: (i, j)),
            scratch_shapes=[pltpu.VMEM((tm, tn), jnp.float32)]),
        compiler_params=pltpu.CompilerParams(
            dimension_semantics=("parallel", "parallel", "arbitrary"),
            vmem_limit_bytes=vmem_limit),
        cost_estimate=pl.CostEstimate(
            flops=2 * Mp * Np * Kp,
            transcendentals=0,
            bytes_accessed=int(xp.size * xp.dtype.itemsize
                               + wp.size * wp.dtype.itemsize
                               + Mp * Np * jnp.dtype(out_dtype).itemsize)),
    )(xp, wp, bp)
    if (Mp, Np) != (M, N):
        out = out[:M, :N]
    return out


# ---------------------------------------------------------------------------
# Kernel 2: tiled matmul + bias + residual add + LayerNorm (post-norm block)
#   out = LayerNorm(x @ w + b + residual) * gamma + beta        (bf16 output)
#   The normalized axis (N = embedding dim) is kept as one whole block.
# ---------------------------------------------------------------------------

def _linear_res_ln_kernel(x_ref, w_ref, b_ref, r_ref, g_ref, beta_ref,
                          o_ref, acc_ref, *, eps):
    @pl.when(pl.program_id(1) == 0)
    def _():
        acc_ref[...] = jnp.zeros_like(acc_ref)

    acc_ref[...] += jnp.dot(x_ref[...].astype(jnp.bfloat16),
                            w_ref[...].astype(jnp.bfloat16),
                            preferred_element_type=jnp.float32)

    @pl.when(pl.program_id(1) == pl.num_programs(1) - 1)
    def _():
        y = acc_ref[...] + b_ref[...] + r_ref[...].astype(jnp.float32)
        mean = jnp.mean(y, axis=-1, keepdims=True)
        c = y - mean
        var = jnp.mean(c * c, axis=-1, keepdims=True)
        inv = jax.lax.rsqrt(var + eps)
        o_ref[...] = (c * inv * g_ref[...] + beta_ref[...]).astype(o_ref.dtype)


def linear_residual_layernorm(x, w, b, residual, gamma, beta, eps=1e-5):
    M, K = x.shape
    N = w.shape[1]                              # normalized axis -> whole block
    vmem_limit, TM, _, TK = _tile_config()
    Mp, tm, nm = _fit_tile(M, TM, 8)
    Kp, tk, nk = _fit_tile(K, TK, 128)
    xp = _pad2d(x, Mp, Kp)
    wp = _pad2d(w, Kp, N)
    rp = _pad2d(residual, Mp, N)

    out = pl.pallas_call(
        functools.partial(_linear_res_ln_kernel, eps=eps),
        out_shape=jax.ShapeDtypeStruct((Mp, N), jnp.bfloat16),
        grid_spec=pltpu.PrefetchScalarGridSpec(
            num_scalar_prefetch=0,
            grid=(nm, nk),
            in_specs=[pl.BlockSpec((tm, tk), lambda i, k: (i, k)),
                      pl.BlockSpec((tk, N), lambda i, k: (k, 0)),
                      pl.BlockSpec((1, N), lambda i, k: (0, 0)),
                      pl.BlockSpec((tm, N), lambda i, k: (i, 0)),
                      pl.BlockSpec((1, N), lambda i, k: (0, 0)),
                      pl.BlockSpec((1, N), lambda i, k: (0, 0))],
            out_specs=pl.BlockSpec((tm, N), lambda i, k: (i, 0)),
            scratch_shapes=[pltpu.VMEM((tm, N), jnp.float32)]),
        compiler_params=pltpu.CompilerParams(
            dimension_semantics=("parallel", "arbitrary"),
            vmem_limit_bytes=vmem_limit),
        cost_estimate=pl.CostEstimate(
            flops=2 * Mp * N * Kp + 8 * Mp * N,
            transcendentals=Mp,
            bytes_accessed=int(xp.size * xp.dtype.itemsize
                               + wp.size * wp.dtype.itemsize
                               + 3 * Mp * N * 2)),
    )(xp, wp, b, rp, gamma, beta)
    return out[:M] if Mp != M else out


# ---------------------------------------------------------------------------
# Kernel 3: multi-head attention over the packed bf16 QKV buffer.
#   Tokens are (S, B, 3E): attention batch = token slot S (gridded),
#   attention sequence = image batch B (PyTorch batch_first=False fed (B,S,E)).
#   Per-head ref slices (no full-block f32 copy), per-head direct stores
#   (no concat); 1/sqrt(Dh) is folded into w_qkv at init.
# ---------------------------------------------------------------------------

def _attention_kernel(qkv_ref, o_ref, *, num_heads, emb_dim):
    E = emb_dim
    Dh = E // num_heads
    for h in range(num_heads):                              # static, unrolled
        q = qkv_ref[:, :, h * Dh:(h + 1) * Dh]              # (ts, B, Dh) bf16
        k = qkv_ref[:, :, E + h * Dh:E + (h + 1) * Dh]
        v = qkv_ref[:, :, 2 * E + h * Dh:2 * E + (h + 1) * Dh]
        s = jnp.einsum("bqd,bkd->bqk", q, k,
                       preferred_element_type=jnp.float32)  # f32 softmax math
        m = jnp.max(s, axis=-1, keepdims=True)
        e = jnp.exp(s - m)
        p = e * pl.reciprocal(jnp.sum(e, axis=-1, keepdims=True), approx=True)
        o = jnp.einsum("bqk,bkd->bqd", p.astype(jnp.bfloat16), v,
                       preferred_element_type=jnp.float32)
        o_ref[:, :, h * Dh:(h + 1) * Dh] = o.astype(o_ref.dtype)


def attention(qkv3d, num_heads, slot_tile):
    S, B, threeE = qkv3d.shape
    E = threeE // 3
    assert S % slot_tile == 0
    ns = S // slot_tile
    vmem_limit, *_ = _tile_config()

    return pl.pallas_call(
        functools.partial(_attention_kernel, num_heads=num_heads, emb_dim=E),
        out_shape=jax.ShapeDtypeStruct((S, B, E), jnp.bfloat16),
        grid_spec=pltpu.PrefetchScalarGridSpec(
            num_scalar_prefetch=0,
            grid=(ns,),
            in_specs=[pl.BlockSpec((slot_tile, B, threeE),
                                   lambda i: (i, 0, 0))],
            out_specs=pl.BlockSpec((slot_tile, B, E), lambda i: (i, 0, 0))),
        compiler_params=pltpu.CompilerParams(
            dimension_semantics=("parallel",),
            vmem_limit_bytes=vmem_limit),
        cost_estimate=pl.CostEstimate(
            flops=4 * S * B * B * E,
            transcendentals=S * B * B * num_heads,
            bytes_accessed=int(2 * S * B * (threeE + E))),
    )(qkv3d)


# ---------------------------------------------------------------------------
# Parameters (deterministic synthetic init; shapes match the PyTorch module)
# All weights bf16, all biases pre-shaped (1, N) f32, classifier lane-padded,
# attention scale folded into the Q projection.
# ---------------------------------------------------------------------------

def init_params(key, in_channels, num_classes, patch_size, embedding_dim,
                num_layers, num_heads, mlp_ratio):
    E = embedding_dim
    F = E * mlp_ratio
    Dh = E // num_heads
    assert Dh * num_heads == E
    patch_dim = in_channels * patch_size * patch_size
    num_patches = (224 // patch_size) ** 2     # module hard-codes input_size=224
    ncls_pad = _round_up(num_classes, 128)     # lane-dense classifier output

    keys = jax.random.split(key, 8 + num_layers)

    def rnd(k, shape):
        return 0.02 * jax.random.normal(k, shape, dtype=jnp.float32)

    fc_w = jnp.pad(rnd(keys[4], (E, num_classes)),
                   ((0, 0), (0, ncls_pad - num_classes))).astype(jnp.bfloat16)
    fc_b = jnp.pad(rnd(keys[5], (num_classes,)),
                   (0, ncls_pad - num_classes)).reshape(1, ncls_pad)

    params = {
        "patch_w": rnd(keys[0], (patch_dim, E)).astype(jnp.bfloat16),
        "patch_b": rnd(keys[1], (E,)).reshape(1, E),
        # PyTorch inits these to zeros; small random values exercise all paths.
        "cls_token": rnd(keys[2], (1, 1, E)).astype(jnp.bfloat16),
        "pos_embed": rnd(keys[3], (1, num_patches + 1, E)).astype(jnp.bfloat16),
        "fc_w": fc_w,
        "fc_b": fc_b,
        "layers": [],
    }
    scale = 1.0 / math.sqrt(Dh)
    for i in range(num_layers):
        lk = jax.random.split(keys[8 + i], 8)
        w_qkv = rnd(lk[0], (E, 3 * E))
        b_qkv = rnd(lk[1], (3 * E,))
        w_qkv = w_qkv.at[:, :E].multiply(scale)    # fold 1/sqrt(Dh) into Q proj
        b_qkv = b_qkv.at[:E].multiply(scale)
        params["layers"].append({
            "w_qkv": w_qkv.astype(jnp.bfloat16),
            "b_qkv": b_qkv.reshape(1, 3 * E),
            "w_o": rnd(lk[2], (E, E)).astype(jnp.bfloat16),
            "b_o": rnd(lk[3], (E,)).reshape(1, E),
            "ln1_g": jnp.ones((1, E), jnp.float32),
            "ln1_b": jnp.zeros((1, E), jnp.float32),
            "w_ff1": rnd(lk[4], (E, F)).astype(jnp.bfloat16),
            "b_ff1": rnd(lk[5], (F,)).reshape(1, F),
            "w_ff2": rnd(lk[6], (F, E)).astype(jnp.bfloat16),
            "b_ff2": rnd(lk[7], (E,)).reshape(1, E),
            "ln2_g": jnp.ones((1, E), jnp.float32),
            "ln2_b": jnp.zeros((1, E), jnp.float32),
        })
    return params


# ---------------------------------------------------------------------------
# Forward pass
# ---------------------------------------------------------------------------

@functools.partial(jax.jit,
                   static_argnames=("patch_size", "num_heads", "num_classes"))
def vit_forward(params, x, *, patch_size, num_heads, num_classes):
    B, C, H, W = x.shape
    P = patch_size
    E = params["pos_embed"].shape[-1]
    HP, WP = H // P, W // P
    NP = HP * WP
    S = NP + 1

    vmem_limit, TM, _, _ = _tile_config()

    # --- patch embedding: stride==kernel conv == matmul over flat patches.
    # Patches laid out sequence-major -> tokens (S, B, E), row = s*B + b.
    # TODO(synk): patch extraction + pos-embed add could be folded into the
    # patch-embed kernel (Element index_maps); left as one-time host XLA ops.
    patches = (x.reshape(B, C, HP, P, WP, P)
                 .transpose(2, 4, 0, 1, 3, 5)          # (HP, WP, B, C, P, P)
                 .reshape(NP * B, C * P * P))
    emb = linear(patches, params["patch_w"], params["patch_b"])   # bf16
    emb = emb.reshape(NP, B, E)

    # --- cls token + positional embedding (bf16) ----------------------------
    cls = jnp.broadcast_to(params["cls_token"].reshape(1, 1, E), (1, B, E))
    t = jnp.concatenate([cls, emb], axis=0)                       # (S, B, E)
    t = t + params["pos_embed"][0, :S, :][:, None, :]

    # --- pad the token axis ONCE; stays padded through the whole encoder ----
    # slot cap keeps the attention working set (double-buffered bf16 in + out)
    # within a quarter of the scoped VMEM budget.
    ts_cap = max(8, (vmem_limit // 4) // max(1, B * 4 * E * 2 * 2))
    if S <= ts_cap and S * B <= TM:
        Sp, ts = S, S                      # single block, no padding
    else:
        row_unit = TM // math.gcd(TM, B)   # makes Sp*B a multiple of TM
        ts = max(row_unit, (min(ts_cap, S) // row_unit) * row_unit)
        Sp = _round_up(S, ts)
    if Sp != S:
        t = jnp.pad(t, ((0, Sp - S), (0, 0), (0, 0)))   # padding stays at tail

    x2d = t.reshape(Sp * B, E)             # bf16, row = s * B + b

    # --- transformer encoder (eval mode: dropout is identity) ---------------
    for layer in params["layers"]:
        qkv = linear(x2d, layer["w_qkv"], layer["b_qkv"])          # bf16 (M,3E)
        attn = attention(qkv.reshape(Sp, B, 3 * E), num_heads, ts) # bf16
        x2d = linear_residual_layernorm(attn.reshape(Sp * B, E),
                                        layer["w_o"], layer["b_o"], x2d,
                                        layer["ln1_g"], layer["ln1_b"])
        h1 = linear(x2d, layer["w_ff1"], layer["b_ff1"], activation="relu")
        x2d = linear_residual_layernorm(h1, layer["w_ff2"], layer["b_ff2"],
                                        x2d, layer["ln2_g"], layer["ln2_b"])

    cls_out = x2d[:B, :]                   # token slot 0 for every image
    logits = linear(cls_out, params["fc_w"], params["fc_b"],
                    out_dtype=jnp.float32)                         # (B, 128p)
    return logits[:, :num_classes]


# ---------------------------------------------------------------------------
# Demo
# ---------------------------------------------------------------------------

if __name__ == "__main__":
    key = jax.random.PRNGKey(0)
    k_params, k_x = jax.random.split(key)

    in_channels = 3
    num_classes = 10
    patch_size = 8
    embedding_dim = 32
    num_layers = 2
    num_heads = 4
    mlp_ratio = 2

    params = init_params(k_params, in_channels, num_classes, patch_size,
                         embedding_dim, num_layers, num_heads, mlp_ratio)

    # small image consistent with the module: NCHW, divisible by patch_size
    x = jax.random.normal(k_x, (2, in_channels, 16, 16), dtype=jnp.float32)

    out = vit_forward(params, x, patch_size=patch_size, num_heads=num_heads,
                      num_classes=num_classes)
    out = jax.block_until_ready(out)

    assert out.shape == (2, num_classes), out.shape
    assert bool(jnp.all(jnp.isfinite(out)))
    print("KERNEL_OK")
</pallas_src>

<mosaic_0001>
module attributes {stable_mosaic.version = 11 : i64} {
  func.func @_linear_kernel(%arg0: i32, %arg1: i32, %arg2: i32, %arg3: memref<8x192xf32, #tpu.memory_space<vmem>>, %arg4: memref<192x32xbf16, #tpu.memory_space<vmem>>, %arg5: memref<1x32xf32, #tpu.memory_space<vmem>>, %arg6: memref<8x32xbf16, #tpu.memory_space<vmem>>, %arg7: memref<8x32xf32, #tpu.memory_space<vmem>>) attributes {dimension_semantics = [#tpu.dimension_semantics<parallel>, #tpu.dimension_semantics<parallel>, #tpu.dimension_semantics<arbitrary>], iteration_bounds = array<i64: 1, 1, 1>, scalar_prefetch = 0 : i64, scratch_operands = 1 : i64, tpu.core_type = #tpu.core_type<tc>, window_params = [{transform_indices = @transform_0, window_bounds = array<i64: 8, 192>}, {transform_indices = @transform_1, window_bounds = array<i64: 192, 32>}, {transform_indices = @transform_2, window_bounds = array<i64: 1, 32>}, {transform_indices = @transform_3, window_bounds = array<i64: 8, 32>}]} {
    %c0_i32 = arith.constant 0 : i32
    %0 = arith.cmpi eq, %arg2, %c0_i32 : i32
    %1 = arith.extui %0 : i1 to i32
    %c0_i32_0 = arith.constant 0 : i32
    %2 = arith.cmpi ne, %1, %c0_i32_0 : i32
    scf.if %2 {
      %cst_10 = arith.constant 0.000000e+00 : f32
      %13 = vector.broadcast %cst_10 : f32 to vector<8x32xf32>
      %c0_11 = arith.constant 0 : index
      %c0_12 = arith.constant 0 : index
      %14 = vector.load %arg7[%c0_11, %c0_12] : memref<8x32xf32, #tpu.memory_space<vmem>>, vector<8x32xf32>
      tpu.vector_store %arg7[%c0_11, %c0_12], %13 {strides = array<i32>} : memref<8x32xf32, #tpu.memory_space<vmem>>, vector<8x32xf32>,
    } else {
    }
    %c0 = arith.constant 0 : index
    %c0_1 = arith.constant 0 : index
    %3 = vector.load %arg7[%c0, %c0_1] : memref<8x32xf32, #tpu.memory_space<vmem>>, vector<8x32xf32>
    %c0_2 = arith.constant 0 : index
    %c0_3 = arith.constant 0 : index
    %4 = vector.load %arg3[%c0_2, %c0_3] : memref<8x192xf32, #tpu.memory_space<vmem>>, vector<8x192xf32>
    %5 = arith.truncf %4 : vector<8x192xf32> to vector<8x192xbf16>
    %c0_4 = arith.constant 0 : index
    %c0_5 = arith.constant 0 : index
    %6 = vector.load %arg4[%c0_4, %c0_5] : memref<192x32xbf16, #tpu.memory_space<vmem>>, vector<192x32xbf16>
    %cst = arith.constant dense<0.000000e+00> : vector<8x32xf32>
    %7 = tpu.matmul %5, %6, %cst {dimension_numbers = #tpu.dot_dimension_numbers<[1], [0], [0], [1], [0, 0, 1, 1], [], []>} : vector<8x192xbf16>, vector<192x32xbf16>, vector<8x32xf32> -> vector<8x32xf32>
    %8 = arith.addf %3, %7 : vector<8x32xf32>
    %c0_6 = arith.constant 0 : index
    %c0_7 = arith.constant 0 : index
    %9 = vector.load %arg7[%c0_6, %c0_7] : memref<8x32xf32, #tpu.memory_space<vmem>>, vector<8x32xf32>
    tpu.vector_store %arg7[%c0_6, %c0_7], %8 {strides = array<i32>} : memref<8x32xf32, #tpu.memory_space<vmem>>, vector<8x32xf32>,
    %c0_i32_8 = arith.constant 0 : i32
    %10 = arith.cmpi eq, %arg2, %c0_i32_8 : i32
    %11 = arith.extui %10 : i1 to i32
    %c0_i32_9 = arith.constant 0 : i32
    %12 = arith.cmpi ne, %11, %c0_i32_9 : i32
    scf.if %12 {
      %c0_10 = arith.constant 0 : index
      %c0_11 = arith.constant 0 : index
      %13 = vector.load %arg7[%c0_10, %c0_11] : memref<8x32xf32, #tpu.memory_space<vmem>>, vector<8x32xf32>
      %c0_12 = arith.constant 0 : index
      %c0_13 = arith.constant 0 : index
      %14 = vector.load %arg5[%c0_12, %c0_13] : memref<1x32xf32, #tpu.memory_space<vmem>>, vector<1x32xf32>
      %15 = vector.broadcast %14 : vector<1x32xf32> to vector<8x32xf32>
      %16 = arith.addf %13, %15 : vector<8x32xf32>
      %17 = arith.truncf %16 : vector<8x32xf32> to vector<8x32xbf16>
      %c0_14 = arith.constant 0 : index
      %c0_15 = arith.constant 0 : index
      %18 = vector.load %arg6[%c0_14, %c0_15] : memref<8x32xbf16, #tpu.memory_space<vmem>>, vector<8x32xbf16>
      tpu.vector_store %arg6[%c0_14, %c0_15], %17 {strides = array<i32>} : memref<8x32xbf16, #tpu.memory_space<vmem>>, vector<8x32xbf16>,
    } else {
    }
    return
  }
  func.func @transform_0(%arg0: i32, %arg1: i32, %arg2: i32) -> (i32, i32) {
    %c0_i32 = arith.constant 0 : i32
    return %arg0, %arg2 : i32, i32
  }
  func.func @transform_1(%arg0: i32, %arg1: i32, %arg2: i32) -> (i32, i32) {
    %c0_i32 = arith.constant 0 : i32
    return %arg2, %arg1 : i32, i32
  }
  func.func @transform_2(%arg0: i32, %arg1: i32, %arg2: i32) -> (i32, i32) {
    %c0_i32 = arith.constant 0 : i32
    %c0_i32_0 = arith.constant 0 : i32
    return %c0_i32, %arg1 : i32, i32
  }
  func.func @transform_3(%arg0: i32, %arg1: i32, %arg2: i32) -> (i32, i32) {
    %c0_i32 = arith.constant 0 : i32
    return %arg0, %arg1 : i32, i32
  }
}

module attributes {stable_mosaic.version = 11 : i64} {
  func.func @_linear_kernel(%arg0: i32, %arg1: i32, %arg2: i32, %arg3: memref<10x32xbf16, #tpu.memory_space<vmem>>, %arg4: memref<32x96xbf16, #tpu.memory_space<vmem>>, %arg5: memref<1x96xf32, #tpu.memory_space<vmem>>, %arg6: memref<10x96xbf16, #tpu.memory_space<vmem>>, %arg7: memref<10x96xf32, #tpu.memory_space<vmem>>) attributes {dimension_semantics = [#tpu.dimension_semantics<parallel>, #tpu.dimension_semantics<parallel>, #tpu.dimension_semantics<arbitrary>], iteration_bounds = array<i64: 1, 1, 1>, scalar_prefetch = 0 : i64, scratch_operands = 1 : i64, tpu.core_type = #tpu.core_type<tc>, window_params = [{transform_indices = @transform_0, window_bounds = array<i64: 10, 32>}, {transform_indices = @transform_1, window_bounds = array<i64: 32, 96>}, {transform_indices = @transform_2, window_bounds = array<i64: 1, 96>}, {transform_indices = @transform_3, window_bounds = array<i64: 10, 96>}]} {
    %c0_i32 = arith.constant 0 : i32
    %0 = arith.cmpi eq, %arg2, %c0_i32 : i32
    %1 = arith.extui %0 : i1 to i32
    %c0_i32_0 = arith.constant 0 : i32
    %2 = arith.cmpi ne, %1, %c0_i32_0 : i32
    scf.if %2 {
      %cst_10 = arith.constant 0.000000e+00 : f32
      %12 = vector.broadcast %cst_10 : f32 to vector<10x96xf32>
      %c0_11 = arith.constant 0 : index
      %c0_12 = arith.constant 0 : index
      %13 = vector.load %arg7[%c0_11, %c0_12] : memref<10x96xf32, #tpu.memory_space<vmem>>, vector<10x96xf32>
      tpu.vector_store %arg7[%c0_11, %c0_12], %12 {strides = array<i32>} : memref<10x96xf32, #tpu.memory_space<vmem>>, vector<10x96xf32>,
    } else {
    }
    %c0 = arith.constant 0 : index
    %c0_1 = arith.constant 0 : index
    %3 = vector.load %arg7[%c0, %c0_1] : memref<10x96xf32, #tpu.memory_space<vmem>>, vector<10x96xf32>
    %c0_2 = arith.constant 0 : index
    %c0_3 = arith.constant 0 : index
    %4 = vector.load %arg3[%c0_2, %c0_3] : memref<10x32xbf16, #tpu.memory_space<vmem>>, vector<10x32xbf16>
    %c0_4 = arith.constant 0 : index
    %c0_5 = arith.constant 0 : index
    %5 = vector.load %arg4[%c0_4, %c0_5] : memref<32x96xbf16, #tpu.memory_space<vmem>>, vector<32x96xbf16>
    %cst = arith.constant dense<0.000000e+00> : vector<10x96xf32>
    %6 = tpu.matmul %4, %5, %cst {dimension_numbers = #tpu.dot_dimension_numbers<[1], [0], [0], [1], [0, 0, 1, 1], [], []>} : vector<10x32xbf16>, vector<32x96xbf16>, vector<10x96xf32> -> vector<10x96xf32>
    %7 = arith.addf %3, %6 : vector<10x96xf32>
    %c0_6 = arith.constant 0 : index
    %c0_7 = arith.constant 0 : index
    %8 = vector.load %arg7[%c0_6, %c0_7] : memref<10x96xf32, #tpu.memory_space<vmem>>, vector<10x96xf32>
    tpu.vector_store %arg7[%c0_6, %c0_7], %7 {strides = array<i32>} : memref<10x96xf32, #tpu.memory_space<vmem>>, vector<10x96xf32>,
    %c0_i32_8 = arith.constant 0 : i32
    %9 = arith.cmpi eq, %arg2, %c0_i32_8 : i32
    %10 = arith.extui %9 : i1 to i32
    %c0_i32_9 = arith.constant 0 : i32
    %11 = arith.cmpi ne, %10, %c0_i32_9 : i32
    scf.if %11 {
      %c0_10 = arith.constant 0 : index
      %c0_11 = arith.constant 0 : index
      %12 = vector.load %arg7[%c0_10, %c0_11] : memref<10x96xf32, #tpu.memory_space<vmem>>, vector<10x96xf32>
      %c0_12 = arith.constant 0 : index
      %c0_13 = arith.constant 0 : index
      %13 = vector.load %arg5[%c0_12, %c0_13] : memref<1x96xf32, #tpu.memory_space<vmem>>, vector<1x96xf32>
      %14 = vector.broadcast %13 : vector<1x96xf32> to vector<10x96xf32>
      %15 = arith.addf %12, %14 : vector<10x96xf32>
      %16 = arith.truncf %15 : vector<10x96xf32> to vector<10x96xbf16>
      %c0_14 = arith.constant 0 : index
      %c0_15 = arith.constant 0 : index
      %17 = vector.load %arg6[%c0_14, %c0_15] : memref<10x96xbf16, #tpu.memory_space<vmem>>, vector<10x96xbf16>
      tpu.vector_store %arg6[%c0_14, %c0_15], %16 {strides = array<i32>} : memref<10x96xbf16, #tpu.memory_space<vmem>>, vector<10x96xbf16>,
    } else {
    }
    return
  }
  func.func @transform_0(%arg0: i32, %arg1: i32, %arg2: i32) -> (i32, i32) {
    %c0_i32 = arith.constant 0 : i32
    return %arg0, %arg2 : i32, i32
  }
  func.func @transform_1(%arg0: i32, %arg1: i32, %arg2: i32) -> (i32, i32) {
    %c0_i32 = arith.constant 0 : i32
    return %arg2, %arg1 : i32, i32
  }
  func.func @transform_2(%arg0: i32, %arg1: i32, %arg2: i32) -> (i32, i32) {
    %c0_i32 = arith.constant 0 : i32
    %c0_i32_0 = arith.constant 0 : i32
    return %c0_i32, %arg1 : i32, i32
  }
  func.func @transform_3(%arg0: i32, %arg1: i32, %arg2: i32) -> (i32, i32) {
    %c0_i32 = arith.constant 0 : i32
    return %arg0, %arg1 : i32, i32
  }
}

module attributes {stable_mosaic.version = 11 : i64} {
  func.func @_linear_res_ln_kernel(%arg0: i32, %arg1: i32, %arg2: memref<10x32xbf16, #tpu.memory_space<vmem>>, %arg3: memref<32x32xbf16, #tpu.memory_space<vmem>>, %arg4: memref<1x32xf32, #tpu.memory_space<vmem>>, %arg5: memref<10x32xbf16, #tpu.memory_space<vmem>>, %arg6: memref<1x32xf32, #tpu.memory_space<vmem>>, %arg7: memref<1x32xf32, #tpu.memory_space<vmem>>, %arg8: memref<10x32xbf16, #tpu.memory_space<vmem>>, %arg9: memref<10x32xf32, #tpu.memory_space<vmem>>) attributes {dimension_semantics = [#tpu.dimension_semantics<parallel>, #tpu.dimension_semantics<arbitrary>], iteration_bounds = array<i64: 1, 1>, scalar_prefetch = 0 : i64, scratch_operands = 1 : i64, tpu.core_type = #tpu.core_type<tc>, window_params = [{transform_indices = @transform_0, window_bounds = array<i64: 10, 32>}, {transform_indices = @transform_1, window_bounds = array<i64: 32, 32>}, {pipeline_mode = #tpu.pipeline_mode<synchronous>, transform_indices = @transform_2, window_bounds = array<i64: 1, 32>}, {transform_indices = @transform_3, window_bounds = array<i64: 10, 32>}, {pipeline_mode = #tpu.pipeline_mode<synchronous>, transform_indices = @transform_4, window_bounds = array<i64: 1, 32>}, {pipeline_mode = #tpu.pipeline_mode<synchronous>, transform_indices = @transform_5, window_bounds = array<i64: 1, 32>}, {transform_indices = @transform_6, window_bounds = array<i64: 10, 32>}]} {
    %c0_i32 = arith.constant 0 : i32
    %0 = arith.cmpi eq, %arg1, %c0_i32 : i32
    %1 = arith.extui %0 : i1 to i32
    %c0_i32_0 = arith.constant 0 : i32
    %2 = arith.cmpi ne, %1, %c0_i32_0 : i32
    scf.if %2 {
      %cst_10 = arith.constant 0.000000e+00 : f32
      %12 = vector.broadcast %cst_10 : f32 to vector<10x32xf32>
      %c0_11 = arith.constant 0 : index
      %c0_12 = arith.constant 0 : index
      %13 = vector.load %arg9[%c0_11, %c0_12] : memref<10x32xf32, #tpu.memory_space<vmem>>, vector<10x32xf32>
      tpu.vector_store %arg9[%c0_11, %c0_12], %12 {strides = array<i32>} : memref<10x32xf32, #tpu.memory_space<vmem>>, vector<10x32xf32>,
    } else {
    }
    %c0 = arith.constant 0 : index
    %c0_1 = arith.constant 0 : index
    %3 = vector.load %arg9[%c0, %c0_1] : memref<10x32xf32, #tpu.memory_space<vmem>>, vector<10x32xf32>
    %c0_2 = arith.constant 0 : index
    %c0_3 = arith.constant 0 : index
    %4 = vector.load %arg2[%c0_2, %c0_3] : memref<10x32xbf16, #tpu.memory_space<vmem>>, vector<10x32xbf16>
    %c0_4 = arith.constant 0 : index
    %c0_5 = arith.constant 0 : index
    %5 = vector.load %arg3[%c0_4, %c0_5] : memref<32x32xbf16, #tpu.memory_space<vmem>>, vector<32x32xbf16>
    %cst = arith.constant dense<0.000000e+00> : vector<10x32xf32>
    %6 = tpu.matmul %4, %5, %cst {dimension_numbers = #tpu.dot_dimension_numbers<[1], [0], [0], [1], [0, 0, 1, 1], [], []>} : vector<10x32xbf16>, vector<32x32xbf16>, vector<10x32xf32> -> vector<10x32xf32>
    %7 = arith.addf %3, %6 : vector<10x32xf32>
    %c0_6 = arith.constant 0 : index
    %c0_7 = arith.constant 0 : index
    %8 = vector.load %arg9[%c0_6, %c0_7] : memref<10x32xf32, #tpu.memory_space<vmem>>, vector<10x32xf32>
    tpu.vector_store %arg9[%c0_6, %c0_7], %7 {strides = array<i32>} : memref<10x32xf32, #tpu.memory_space<vmem>>, vector<10x32xf32>,
    %c0_i32_8 = arith.constant 0 : i32
    %9 = arith.cmpi eq, %arg1, %c0_i32_8 : i32
    %10 = arith.extui %9 : i1 to i32
    %c0_i32_9 = arith.constant 0 : i32
    %11 = arith.cmpi ne, %10, %c0_i32_9 : i32
    scf.if %11 {
      %c0_10 = arith.constant 0 : index
      %c0_11 = arith.constant 0 : index
      %12 = vector.load %arg9[%c0_10, %c0_11] : memref<10x32xf32, #tpu.memory_space<vmem>>, vector<10x32xf32>
      %c0_12 = arith.constant 0 : index
      %c0_13 = arith.constant 0 : index
      %13 = vector.load %arg4[%c0_12, %c0_13] : memref<1x32xf32, #tpu.memory_space<vmem>>, vector<1x32xf32>
      %14 = vector.broadcast %13 : vector<1x32xf32> to vector<10x32xf32>
      %15 = arith.addf %12, %14 : vector<10x32xf32>
      %c0_14 = arith.constant 0 : index
      %c0_15 = arith.constant 0 : index
      %16 = vector.load %arg5[%c0_14, %c0_15] : memref<10x32xbf16, #tpu.memory_space<vmem>>, vector<10x32xbf16>
      %17 = arith.extf %16 : vector<10x32xbf16> to vector<10x32xf32>
      %18 = arith.addf %15, %17 : vector<10x32xf32>
      %cst_16 = arith.constant dense<0.000000e+00> : vector<10xf32>
      %19 = vector.multi_reduction <add>, %18, %cst_16 [1] : vector<10x32xf32> to vector<10xf32>
      %20 = vector.shape_cast %19 : vector<10xf32> to vector<10x1xf32>
      %cst_17 = arith.constant 3.200000e+01 : f32
      %21 = vector.broadcast %cst_17 : f32 to vector<10x1xf32>
      %22 = arith.divf %20, %21 : vector<10x1xf32>
      %23 = vector.broadcast %22 : vector<10x1xf32> to vector<10x32xf32>
      %24 = arith.subf %18, %23 : vector<10x32xf32>
      %25 = arith.mulf %24, %24 : vector<10x32xf32>
      %cst_18 = arith.constant dense<0.000000e+00> : vector<10xf32>
      %26 = vector.multi_reduction <add>, %25, %cst_18 [1] : vector<10x32xf32> to vector<10xf32>
      %27 = vector.shape_cast %26 : vector<10xf32> to vector<10x1xf32>
      %cst_19 = arith.constant 3.200000e+01 : f32
      %28 = vector.broadcast %cst_19 : f32 to vector<10x1xf32>
      %29 = arith.divf %27, %28 : vector<10x1xf32>
      %cst_20 = arith.constant 9.99999974E-6 : f32
      %30 = vector.broadcast %cst_20 : f32 to vector<10x1xf32>
      %31 = arith.addf %29, %30 : vector<10x1xf32>
      %32 = math.rsqrt %31 : vector<10x1xf32>
      %33 = vector.broadcast %32 : vector<10x1xf32> to vector<10x32xf32>
      %34 = arith.mulf %24, %33 : vector<10x32xf32>
      %c0_21 = arith.constant 0 : index
      %c0_22 = arith.constant 0 : index
      %35 = vector.load %arg6[%c0_21, %c0_22] : memref<1x32xf32, #tpu.memory_space<vmem>>, vector<1x32xf32>
      %36 = vector.broadcast %35 : vector<1x32xf32> to vector<10x32xf32>
      %37 = arith.mulf %34, %36 : vector<10x32xf32>
      %c0_23 = arith.constant 0 : index
      %c0_24 = arith.constant 0 : index
      %38 = vector.load %arg7[%c0_23, %c0_24] : memref<1x32xf32, #tpu.memory_space<vmem>>, vector<1x32xf32>
      %39 = vector.broadcast %38 : vector<1x32xf32> to vector<10x32xf32>
      %40 = arith.addf %37, %39 : vector<10x32xf32>
      %41 = arith.truncf %40 : vector<10x32xf32> to vector<10x32xbf16>
      %c0_25 = arith.constant 0 : index
      %c0_26 = arith.constant 0 : index
      %42 = vector.load %arg8[%c0_25, %c0_26] : memref<10x32xbf16, #tpu.memory_space<vmem>>, vector<10x32xbf16>
      tpu.vector_store %arg8[%c0_25, %c0_26], %41 {strides = array<i32>} : memref<10x32xbf16, #tpu.memory_space<vmem>>, vector<10x32xbf16>,
    } else {
    }
    return
  }
  func.func @transform_0(%arg0: i32, %arg1: i32) -> (i32, i32) {
    %c0_i32 = arith.constant 0 : i32
    return %arg0, %arg1 : i32, i32
  }
  func.func @transform_1(%arg0: i32, %arg1: i32) -> (i32, i32) {
    %c0_i32 = arith.constant 0 : i32
    %c0_i32_0 = arith.constant 0 : i32
    return %arg1, %c0_i32 : i32, i32
  }
  func.func @transform_2(%arg0: i32, %arg1: i32) -> (i32, i32) {
    %c0_i32 = arith.constant 0 : i32
    %c0_i32_0 = arith.constant 0 : i32
    %c0_i32_1 = arith.constant 0 : i32
    return %c0_i32, %c0_i32_0 : i32, i32
  }
  func.func @transform_3(%arg0: i32, %arg1: i32) -> (i32, i32) {
    %c0_i32 = arith.constant 0 : i32
    %c0_i32_0 = arith.constant 0 : i32
    return %arg0, %c0_i32 : i32, i32
  }
  func.func @transform_4(%arg0: i32, %arg1: i32) -> (i32, i32) {
    %c0_i32 = arith.constant 0 : i32
    %c0_i32_0 = arith.constant 0 : i32
    %c0_i32_1 = arith.constant 0 : i32
    return %c0_i32, %c0_i32_0 : i32, i32
  }
  func.func @transform_5(%arg0: i32, %arg1: i32) -> (i32, i32) {
    %c0_i32 = arith.constant 0 : i32
    %c0_i32_0 = arith.constant 0 : i32
    %c0_i32_1 = arith.constant 0 : i32
    return %c0_i32, %c0_i32_0 : i32, i32
  }
  func.func @transform_6(%arg0: i32, %arg1: i32) -> (i32, i32) {
    %c0_i32 = arith.constant 0 : i32
    %c0_i32_0 = arith.constant 0 : i32
    return %arg0, %c0_i32 : i32, i32
  }
}

module attributes {stable_mosaic.version = 11 : i64} {
  func.func @_attention_kernel(%arg0: i32, %arg1: memref<5x2x96xbf16, #tpu.memory_space<vmem>>, %arg2: memref<5x2x32xbf16, #tpu.memory_space<vmem>>) attributes {dimension_semantics = [#tpu.dimension_semantics<parallel>], iteration_bounds = array<i64: 1>, scalar_prefetch = 0 : i64, scratch_operands = 0 : i64, tpu.core_type = #tpu.core_type<tc>, window_params = [{transform_indices = @transform_0, window_bounds = array<i64: 5, 2, 96>}, {transform_indices = @transform_1, window_bounds = array<i64: 5, 2, 32>}]} {
    %c0 = arith.constant 0 : index
    %c0_0 = arith.constant 0 : index
    %c0_1 = arith.constant 0 : index
    %0 = vector.load %arg1[%c0, %c0_0, %c0_1] : memref<5x2x96xbf16, #tpu.memory_space<vmem>>, vector<5x2x8xbf16>
    %c0_2 = arith.constant 0 : index
    %c0_3 = arith.constant 0 : index
    %c32 = arith.constant 32 : index
    %1 = vector.load %arg1[%c0_2, %c0_3, %c32] : memref<5x2x96xbf16, #tpu.memory_space<vmem>>, vector<5x2x8xbf16>
    %c0_4 = arith.constant 0 : index
    %c0_5 = arith.constant 0 : index
    %c64 = arith.constant 64 : index
    %2 = vector.load %arg1[%c0_4, %c0_5, %c64] : memref<5x2x96xbf16, #tpu.memory_space<vmem>>, vector<5x2x8xbf16>
    "tpu.trace_start"() <{level = 10 : i32, message = "bqd,bkd->bqk"}> : () -> ()
    %cst = arith.constant dense<0.000000e+00> : vector<5x2x2xf32>
    %3 = tpu.matmul %0, %1, %cst {dimension_numbers = #tpu.dot_dimension_numbers<[2], [2], [1], [1], [0, 0, 0, 1, 1, 1], [0], [0]>} : vector<5x2x8xbf16>, vector<5x2x8xbf16>, vector<5x2x2xf32> -> vector<5x2x2xf32>
    "tpu.trace_stop"() : () -> ()
    %cst_6 = arith.constant dense<0xFF800000> : vector<5x2xf32>
    %4 = vector.multi_reduction <maximumf>, %3, %cst_6 [2] : vector<5x2x2xf32> to vector<5x2xf32>
    %5 = vector.shape_cast %4 : vector<5x2xf32> to vector<5x2x1xf32>
    %6 = vector.broadcast %5 : vector<5x2x1xf32> to vector<5x2x2xf32>
    %7 = arith.subf %3, %6 : vector<5x2x2xf32>
    %8 = math.exp %7 : vector<5x2x2xf32>
    %cst_7 = arith.constant dense<0.000000e+00> : vector<5x2xf32>
    %9 = vector.multi_reduction <add>, %8, %cst_7 [2] : vector<5x2x2xf32> to vector<5x2xf32>
    %10 = vector.shape_cast %9 : vector<5x2xf32> to vector<5x2x1xf32>
    %11 = tpu.reciprocal %10 {approx = true} : vector<5x2x1xf32> -> vector<5x2x1xf32>
    %12 = vector.broadcast %11 : vector<5x2x1xf32> to vector<5x2x2xf32>
    %13 = arith.mulf %8, %12 : vector<5x2x2xf32>
    %14 = arith.truncf %13 : vector<5x2x2xf32> to vector<5x2x2xbf16>
    "tpu.trace_start"() <{level = 10 : i32, message = "bqk,bkd->bqd"}> : () -> ()
    %cst_8 = arith.constant dense<0.000000e+00> : vector<5x2x8xf32>
    %15 = tpu.matmul %14, %2, %cst_8 {dimension_numbers = #tpu.dot_dimension_numbers<[2], [1], [1], [2], [0, 0, 0, 1, 1, 2], [0], [0]>} : vector<5x2x2xbf16>, vector<5x2x8xbf16>, vector<5x2x8xf32> -> vector<5x2x8xf32>
    "tpu.trace_stop"() : () -> ()
    %16 = arith.truncf %15 : vector<5x2x8xf32> to vector<5x2x8xbf16>
    %c0_9 = arith.constant 0 : index
    %c0_10 = arith.constant 0 : index
    %c0_11 = arith.constant 0 : index
    %17 = vector.load %arg2[%c0_9, %c0_10, %c0_11] : memref<5x2x32xbf16, #tpu.memory_space<vmem>>, vector<5x2x8xbf16>
    tpu.vector_store %arg2[%c0_9, %c0_10, %c0_11], %16 {strides = array<i32>} : memref<5x2x32xbf16, #tpu.memory_space<vmem>>, vector<5x2x8xbf16>,
    %c0_12 = arith.constant 0 : index
    %c0_13 = arith.constant 0 : index
    %c8 = arith.constant 8 : index
    %18 = vector.load %arg1[%c0_12, %c0_13, %c8] : memref<5x2x96xbf16, #tpu.memory_space<vmem>>, vector<5x2x8xbf16>
    %c0_14 = arith.constant 0 : index
    %c0_15 = arith.constant 0 : index
    %c40 = arith.constant 40 : index
    %19 = vector.load %arg1[%c0_14, %c0_15, %c40] : memref<5x2x96xbf16, #tpu.memory_space<vmem>>, vector<5x2x8xbf16>
    %c0_16 = arith.constant 0 : index
    %c0_17 = arith.constant 0 : index
    %c72 = arith.constant 72 : index
    %20 = vector.load %arg1[%c0_16, %c0_17, %c72] : memref<5x2x96xbf16, #tpu.memory_space<vmem>>, vector<5x2x8xbf16>
    "tpu.trace_start"() <{level = 10 : i32, message = "bqd,bkd->bqk"}> : () -> ()
    %cst_18 = arith.constant dense<0.000000e+00> : vector<5x2x2xf32>
    %21 = tpu.matmul %18, %19, %cst_18 {dimension_numbers = #tpu.dot_dimension_numbers<[2], [2], [1], [1], [0, 0, 0, 1, 1, 1], [0], [0]>} : vector<5x2x8xbf16>, vector<5x2x8xbf16>, vector<5x2x2xf32> -> vector<5x2x2xf32>
    "tpu.trace_stop"() : () -> ()
    %cst_19 = arith.constant dense<0xFF800000> : vector<5x2xf32>
    %22 = vector.multi_reduction <maximumf>, %21, %cst_19 [2] : vector<5x2x2xf32> to vector<5x2xf32>
    %23 = vector.shape_cast %22 : vector<5x2xf32> to vector<5x2x1xf32>
    %24 = vector.broadcast %23 : vector<5x2x1xf32> to vector<5x2x2xf32>
    %25 = arith.subf %21, %24 : vector<5x2x2xf32>
    %26 = math.exp %25 : vector<5x2x2xf32>
    %cst_20 = arith.constant dense<0.000000e+00> : vector<5x2xf32>
    %27 = vector.multi_reduction <add>, %26, %cst_20 [2] : vector<5x2x2xf32> to vector<5x2xf32>
    %28 = vector.shape_cast %27 : vector<5x2xf32> to vector<5x2x1xf32>
    %29 = tpu.reciprocal %28 {approx = true} : vector<5x2x1xf32> -> vector<5x2x1xf32>
    %30 = vector.broadcast %29 : vector<5x2x1xf32> to vector<5x2x2xf32>
    %31 = arith.mulf %26, %30 : vector<5x2x2xf32>
    %32 = arith.truncf %31 : vector<5x2x2xf32> to vector<5x2x2xbf16>
    "tpu.trace_start"() <{level = 10 : i32, message = "bqk,bkd->bqd"}> : () -> ()
    %cst_21 = arith.constant dense<0.000000e+00> : vector<5x2x8xf32>
    %33 = tpu.matmul %32, %20, %cst_21 {dimension_numbers = #tpu.dot_dimension_numbers<[2], [1], [1], [2], [0, 0, 0, 1, 1, 2], [0], [0]>} : vector<5x2x2xbf16>, vector<5x2x8xbf16>, vector<5x2x8xf32> -> vector<5x2x8xf32>
    "tpu.trace_stop"() : () -> ()
    %34 = arith.truncf %33 : vector<5x2x8xf32> to vector<5x2x8xbf16>
    %c0_22 = arith.constant 0 : index
    %c0_23 = arith.constant 0 : index
    %c8_24 = arith.constant 8 : index
    %35 = vector.load %arg2[%c0_22, %c0_23, %c8_24] : memref<5x2x32xbf16, #tpu.memory_space<vmem>>, vector<5x2x8xbf16>
    tpu.vector_store %arg2[%c0_22, %c0_23, %c8_24], %34 {strides = array<i32>} : memref<5x2x32xbf16, #tpu.memory_space<vmem>>, vector<5x2x8xbf16>,
    %c0_25 = arith.constant 0 : index
    %c0_26 = arith.constant 0 : index
    %c16 = arith.constant 16 : index
    %36 = vector.load %arg1[%c0_25, %c0_26, %c16] : memref<5x2x96xbf16, #tpu.memory_space<vmem>>, vector<5x2x8xbf16>
    %c0_27 = arith.constant 0 : index
    %c0_28 = arith.constant 0 : index
    %c48 = arith.constant 48 : index
    %37 = vector.load %arg1[%c0_27, %c0_28, %c48] : memref<5x2x96xbf16, #tpu.memory_space<vmem>>, vector<5x2x8xbf16>
    %c0_29 = arith.constant 0 : index
    %c0_30 = arith.constant 0 : index
    %c80 = arith.constant 80 : index
    %38 = vector.load %arg1[%c0_29, %c0_30, %c80] : memref<5x2x96xbf16, #tpu.memory_space<vmem>>, vector<5x2x8xbf16>
    "tpu.trace_start"() <{level = 10 : i32, message = "bqd,bkd->bqk"}> : () -> ()
    %cst_31 = arith.constant dense<0.000000e+00> : vector<5x2x2xf32>
    %39 = tpu.matmul %36, %37, %cst_31 {dimension_numbers = #tpu.dot_dimension_numbers<[2], [2], [1], [1], [0, 0, 0, 1, 1, 1], [0], [0]>} : vector<5x2x8xbf16>, vector<5x2x8xbf16>, vector<5x2x2xf32> -> vector<5x2x2xf32>
    "tpu.trace_stop"() : () -> ()
    %cst_32 = arith.constant dense<0xFF800000> : vector<5x2xf32>
    %40 = vector.multi_reduction <maximumf>, %39, %cst_32 [2] : vector<5x2x2xf32> to vector<5x2xf32>
    %41 = vector.shape_cast %40 : vector<5x2xf32> to vector<5x2x1xf32>
    %42 = vector.broadcast %41 : vector<5x2x1xf32> to vector<5x2x2xf32>
    %43 = arith.subf %39, %42 : vector<5x2x2xf32>
    %44 = math.exp %43 : vector<5x2x2xf32>
    %cst_33 = arith.constant dense<0.000000e+00> : vector<5x2xf32>
    %45 = vector.multi_reduction <add>, %44, %cst_33 [2] : vector<5x2x2xf32> to vector<5x2xf32>
    %46 = vector.shape_cast %45 : vector<5x2xf32> to vector<5x2x1xf32>
    %47 = tpu.reciprocal %46 {approx = true} : vector<5x2x1xf32> -> vector<5x2x1xf32>
    %48 = vector.broadcast %47 : vector<5x2x1xf32> to vector<5x2x2xf32>
    %49 = arith.mulf %44, %48 : vector<5x2x2xf32>
    %50 = arith.truncf %49 : vector<5x2x2xf32> to vector<5x2x2xbf16>
    "tpu.trace_start"() <{level = 10 : i32, message = "bqk,bkd->bqd"}> : () -> ()
    %cst_34 = arith.constant dense<0.000000e+00> : vector<5x2x8xf32>
    %51 = tpu.matmul %50, %38, %cst_34 {dimension_numbers = #tpu.dot_dimension_numbers<[2], [1], [1], [2], [0, 0, 0, 1, 1, 2], [0], [0]>} : vector<5x2x2xbf16>, vector<5x2x8xbf16>, vector<5x2x8xf32> -> vector<5x2x8xf32>
    "tpu.trace_stop"() : () -> ()
    %52 = arith.truncf %51 : vector<5x2x8xf32> to vector<5x2x8xbf16>
    %c0_35 = arith.constant 0 : index
    %c0_36 = arith.constant 0 : index
    %c16_37 = arith.constant 16 : index
    %53 = vector.load %arg2[%c0_35, %c0_36, %c16_37] : memref<5x2x32xbf16, #tpu.memory_space<vmem>>, vector<5x2x8xbf16>
    tpu.vector_store %arg2[%c0_35, %c0_36, %c16_37], %52 {strides = array<i32>} : memref<5x2x32xbf16, #tpu.memory_space<vmem>>, vector<5x2x8xbf16>,
    %c0_38 = arith.constant 0 : index
    %c0_39 = arith.constant 0 : index
    %c24 = arith.constant 24 : index
    %54 = vector.load %arg1[%c0_38, %c0_39, %c24] : memref<5x2x96xbf16, #tpu.memory_space<vmem>>, vector<5x2x8xbf16>
    %c0_40 = arith.constant 0 : index
    %c0_41 = arith.constant 0 : index
    %c56 = arith.constant 56 : index
    %55 = vector.load %arg1[%c0_40, %c0_41, %c56] : memref<5x2x96xbf16, #tpu.memory_space<vmem>>, vector<5x2x8xbf16>
    %c0_42 = arith.constant 0 : index
    %c0_43 = arith.constant 0 : index
    %c88 = arith.constant 88 : index
    %56 = vector.load %arg1[%c0_42, %c0_43, %c88] : memref<5x2x96xbf16, #tpu.memory_space<vmem>>, vector<5x2x8xbf16>
    "tpu.trace_start"() <{level = 10 : i32, message = "bqd,bkd->bqk"}> : () -> ()
    %cst_44 = arith.constant dense<0.000000e+00> : vector<5x2x2xf32>
    %57 = tpu.matmul %54, %55, %cst_44 {dimension_numbers = #tpu.dot_dimension_numbers<[2], [2], [1], [1], [0, 0, 0, 1, 1, 1], [0], [0]>} : vector<5x2x8xbf16>, vector<5x2x8xbf16>, vector<5x2x2xf32> -> vector<5x2x2xf32>
    "tpu.trace_stop"() : () -> ()
    %cst_45 = arith.constant dense<0xFF800000> : vector<5x2xf32>
    %58 = vector.multi_reduction <maximumf>, %57, %cst_45 [2] : vector<5x2x2xf32> to vector<5x2xf32>
    %59 = vector.shape_cast %58 : vector<5x2xf32> to vector<5x2x1xf32>
    %60 = vector.broadcast %59 : vector<5x2x1xf32> to vector<5x2x2xf32>
    %61 = arith.subf %57, %60 : vector<5x2x2xf32>
    %62 = math.exp %61 : vector<5x2x2xf32>
    %cst_46 = arith.constant dense<0.000000e+00> : vector<5x2xf32>
    %63 = vector.multi_reduction <add>, %62, %cst_46 [2] : vector<5x2x2xf32> to vector<5x2xf32>
    %64 = vector.shape_cast %63 : vector<5x2xf32> to vector<5x2x1xf32>
    %65 = tpu.reciprocal %64 {approx = true} : vector<5x2x1xf32> -> vector<5x2x1xf32>
    %66 = vector.broadcast %65 : vector<5x2x1xf32> to vector<5x2x2xf32>
    %67 = arith.mulf %62, %66 : vector<5x2x2xf32>
    %68 = arith.truncf %67 : vector<5x2x2xf32> to vector<5x2x2xbf16>
    "tpu.trace_start"() <{level = 10 : i32, message = "bqk,bkd->bqd"}> : () -> ()
    %cst_47 = arith.constant dense<0.000000e+00> : vector<5x2x8xf32>
    %69 = tpu.matmul %68, %56, %cst_47 {dimension_numbers = #tpu.dot_dimension_numbers<[2], [1], [1], [2], [0, 0, 0, 1, 1, 2], [0], [0]>} : vector<5x2x2xbf16>, vector<5x2x8xbf16>, vector<5x2x8xf32> -> vector<5x2x8xf32>
    "tpu.trace_stop"() : () -> ()
    %70 = arith.truncf %69 : vector<5x2x8xf32> to vector<5x2x8xbf16>
    %c0_48 = arith.constant 0 : index
    %c0_49 = arith.constant 0 : index
    %c24_50 = arith.constant 24 : index
    %71 = vector.load %arg2[%c0_48, %c0_49, %c24_50] : memref<5x2x32xbf16, #tpu.memory_space<vmem>>, vector<5x2x8xbf16>
    tpu.vector_store %arg2[%c0_48, %c0_49, %c24_50], %70 {strides = array<i32>} : memref<5x2x32xbf16, #tpu.memory_space<vmem>>, vector<5x2x8xbf16>,
    return
  }
  func.func @transform_0(%arg0: i32) -> (i32, i32, i32) {
    %c0_i32 = arith.constant 0 : i32
    %c0_i32_0 = arith.constant 0 : i32
    %c0_i32_1 = arith.constant 0 : i32
    return %arg0, %c0_i32, %c0_i32_0 : i32, i32, i32
  }
  func.func @transform_1(%arg0: i32) -> (i32, i32, i32) {
    %c0_i32 = arith.constant 0 : i32
    %c0_i32_0 = arith.constant 0 : i32
    %c0_i32_1 = arith.constant 0 : i32
    return %arg0, %c0_i32, %c0_i32_0 : i32, i32, i32
  }
}

module attributes {stable_mosaic.version = 11 : i64} {
  func.func @_linear_kernel(%arg0: i32, %arg1: i32, %arg2: i32, %arg3: memref<10x32xbf16, #tpu.memory_space<vmem>>, %arg4: memref<32x64xbf16, #tpu.memory_space<vmem>>, %arg5: memref<1x64xf32, #tpu.memory_space<vmem>>, %arg6: memref<10x64xbf16, #tpu.memory_space<vmem>>, %arg7: memref<10x64xf32, #tpu.memory_space<vmem>>) attributes {dimension_semantics = [#tpu.dimension_semantics<parallel>, #tpu.dimension_semantics<parallel>, #tpu.dimension_semantics<arbitrary>], iteration_bounds = array<i64: 1, 1, 1>, scalar_prefetch = 0 : i64, scratch_operands = 1 : i64, tpu.core_type = #tpu.core_type<tc>, window_params = [{transform_indices = @transform_0, window_bounds = array<i64: 10, 32>}, {transform_indices = @transform_1, window_bounds = array<i64: 32, 64>}, {transform_indices = @transform_2, window_bounds = array<i64: 1, 64>}, {transform_indices = @transform_3, window_bounds = array<i64: 10, 64>}]} {
    %c0_i32 = arith.constant 0 : i32
    %0 = arith.cmpi eq, %arg2, %c0_i32 : i32
    %1 = arith.extui %0 : i1 to i32
    %c0_i32_0 = arith.constant 0 : i32
    %2 = arith.cmpi ne, %1, %c0_i32_0 : i32
    scf.if %2 {
      %cst_10 = arith.constant 0.000000e+00 : f32
      %12 = vector.broadcast %cst_10 : f32 to vector<10x64xf32>
      %c0_11 = arith.constant 0 : index
      %c0_12 = arith.constant 0 : index
      %13 = vector.load %arg7[%c0_11, %c0_12] : memref<10x64xf32, #tpu.memory_space<vmem>>, vector<10x64xf32>
      tpu.vector_store %arg7[%c0_11, %c0_12], %12 {strides = array<i32>} : memref<10x64xf32, #tpu.memory_space<vmem>>, vector<10x64xf32>,
    } else {
    }
    %c0 = arith.constant 0 : index
    %c0_1 = arith.constant 0 : index
    %3 = vector.load %arg7[%c0, %c0_1] : memref<10x64xf32, #tpu.memory_space<vmem>>, vector<10x64xf32>
    %c0_2 = arith.constant 0 : index
    %c0_3 = arith.constant 0 : index
    %4 = vector.load %arg3[%c0_2, %c0_3] : memref<10x32xbf16, #tpu.memory_space<vmem>>, vector<10x32xbf16>
    %c0_4 = arith.constant 0 : index
    %c0_5 = arith.constant 0 : index
    %5 = vector.load %arg4[%c0_4, %c0_5] : memref<32x64xbf16, #tpu.memory_space<vmem>>, vector<32x64xbf16>
    %cst = arith.constant dense<0.000000e+00> : vector<10x64xf32>
    %6 = tpu.matmul %4, %5, %cst {dimension_numbers = #tpu.dot_dimension_numbers<[1], [0], [0], [1], [0, 0, 1, 1], [], []>} : vector<10x32xbf16>, vector<32x64xbf16>, vector<10x64xf32> -> vector<10x64xf32>
    %7 = arith.addf %3, %6 : vector<10x64xf32>
    %c0_6 = arith.constant 0 : index
    %c0_7 = arith.constant 0 : index
    %8 = vector.load %arg7[%c0_6, %c0_7] : memref<10x64xf32, #tpu.memory_space<vmem>>, vector<10x64xf32>
    tpu.vector_store %arg7[%c0_6, %c0_7], %7 {strides = array<i32>} : memref<10x64xf32, #tpu.memory_space<vmem>>, vector<10x64xf32>,
    %c0_i32_8 = arith.constant 0 : i32
    %9 = arith.cmpi eq, %arg2, %c0_i32_8 : i32
    %10 = arith.extui %9 : i1 to i32
    %c0_i32_9 = arith.constant 0 : i32
    %11 = arith.cmpi ne, %10, %c0_i32_9 : i32
    scf.if %11 {
      %c0_10 = arith.constant 0 : index
      %c0_11 = arith.constant 0 : index
      %12 = vector.load %arg7[%c0_10, %c0_11] : memref<10x64xf32, #tpu.memory_space<vmem>>, vector<10x64xf32>
      %c0_12 = arith.constant 0 : index
      %c0_13 = arith.constant 0 : index
      %13 = vector.load %arg5[%c0_12, %c0_13] : memref<1x64xf32, #tpu.memory_space<vmem>>, vector<1x64xf32>
      %14 = vector.broadcast %13 : vector<1x64xf32> to vector<10x64xf32>
      %15 = arith.addf %12, %14 : vector<10x64xf32>
      %cst_14 = arith.constant 0.000000e+00 : f32
      %16 = vector.broadcast %cst_14 : f32 to vector<10x64xf32>
      %17 = arith.maximumf %15, %16 : vector<10x64xf32>
      %18 = arith.truncf %17 : vector<10x64xf32> to vector<10x64xbf16>
      %c0_15 = arith.constant 0 : index
      %c0_16 = arith.constant 0 : index
      %19 = vector.load %arg6[%c0_15, %c0_16] : memref<10x64xbf16, #tpu.memory_space<vmem>>, vector<10x64xbf16>
      tpu.vector_store %arg6[%c0_15, %c0_16], %18 {strides = array<i32>} : memref<10x64xbf16, #tpu.memory_space<vmem>>, vector<10x64xbf16>,
    } else {
    }
    return
  }
  func.func @transform_0(%arg0: i32, %arg1: i32, %arg2: i32) -> (i32, i32) {
    %c0_i32 = arith.constant 0 : i32
    return %arg0, %arg2 : i32, i32
  }
  func.func @transform_1(%arg0: i32, %arg1: i32, %arg2: i32) -> (i32, i32) {
    %c0_i32 = arith.constant 0 : i32
    return %arg2, %arg1 : i32, i32
  }
  func.func @transform_2(%arg0: i32, %arg1: i32, %arg2: i32) -> (i32, i32) {
    %c0_i32 = arith.constant 0 : i32
    %c0_i32_0 = arith.constant 0 : i32
    return %c0_i32, %arg1 : i32, i32
  }
  func.func @transform_3(%arg0: i32, %arg1: i32, %arg2: i32) -> (i32, i32) {
    %c0_i32 = arith.constant 0 : i32
    return %arg0, %arg1 : i32, i32
  }
}

module attributes {stable_mosaic.version = 11 : i64} {
  func.func @_linear_res_ln_kernel(%arg0: i32, %arg1: i32, %arg2: memref<10x64xbf16, #tpu.memory_space<vmem>>, %arg3: memref<64x32xbf16, #tpu.memory_space<vmem>>, %arg4: memref<1x32xf32, #tpu.memory_space<vmem>>, %arg5: memref<10x32xbf16, #tpu.memory_space<vmem>>, %arg6: memref<1x32xf32, #tpu.memory_space<vmem>>, %arg7: memref<1x32xf32, #tpu.memory_space<vmem>>, %arg8: memref<10x32xbf16, #tpu.memory_space<vmem>>, %arg9: memref<10x32xf32, #tpu.memory_space<vmem>>) attributes {dimension_semantics = [#tpu.dimension_semantics<parallel>, #tpu.dimension_semantics<arbitrary>], iteration_bounds = array<i64: 1, 1>, scalar_prefetch = 0 : i64, scratch_operands = 1 : i64, tpu.core_type = #tpu.core_type<tc>, window_params = [{transform_indices = @transform_0, window_bounds = array<i64: 10, 64>}, {transform_indices = @transform_1, window_bounds = array<i64: 64, 32>}, {pipeline_mode = #tpu.pipeline_mode<synchronous>, transform_indices = @transform_2, window_bounds = array<i64: 1, 32>}, {transform_indices = @transform_3, window_bounds = array<i64: 10, 32>}, {pipeline_mode = #tpu.pipeline_mode<synchronous>, transform_indices = @transform_4, window_bounds = array<i64: 1, 32>}, {pipeline_mode = #tpu.pipeline_mode<synchronous>, transform_indices = @transform_5, window_bounds = array<i64: 1, 32>}, {transform_indices = @transform_6, window_bounds = array<i64: 10, 32>}]} {
    %c0_i32 = arith.constant 0 : i32
    %0 = arith.cmpi eq, %arg1, %c0_i32 : i32
    %1 = arith.extui %0 : i1 to i32
    %c0_i32_0 = arith.constant 0 : i32
    %2 = arith.cmpi ne, %1, %c0_i32_0 : i32
    scf.if %2 {
      %cst_10 = arith.constant 0.000000e+00 : f32
      %12 = vector.broadcast %cst_10 : f32 to vector<10x32xf32>
      %c0_11 = arith.constant 0 : index
      %c0_12 = arith.constant 0 : index
      %13 = vector.load %arg9[%c0_11, %c0_12] : memref<10x32xf32, #tpu.memory_space<vmem>>, vector<10x32xf32>
      tpu.vector_store %arg9[%c0_11, %c0_12], %12 {strides = array<i32>} : memref<10x32xf32, #tpu.memory_space<vmem>>, vector<10x32xf32>,
    } else {
    }
    %c0 = arith.constant 0 : index
    %c0_1 = arith.constant 0 : index
    %3 = vector.load %arg9[%c0, %c0_1] : memref<10x32xf32, #tpu.memory_space<vmem>>, vector<10x32xf32>
    %c0_2 = arith.constant 0 : index
    %c0_3 = arith.constant 0 : index
    %4 = vector.load %arg2[%c0_2, %c0_3] : memref<10x64xbf16, #tpu.memory_space<vmem>>, vector<10x64xbf16>
    %c0_4 = arith.constant 0 : index
    %c0_5 = arith.constant 0 : index
    %5 = vector.load %arg3[%c0_4, %c0_5] : memref<64x32xbf16, #tpu.memory_space<vmem>>, vector<64x32xbf16>
    %cst = arith.constant dense<0.000000e+00> : vector<10x32xf32>
    %6 = tpu.matmul %4, %5, %cst {dimension_numbers = #tpu.dot_dimension_numbers<[1], [0], [0], [1], [0, 0, 1, 1], [], []>} : vector<10x64xbf16>, vector<64x32xbf16>, vector<10x32xf32> -> vector<10x32xf32>
    %7 = arith.addf %3, %6 : vector<10x32xf32>
    %c0_6 = arith.constant 0 : index
    %c0_7 = arith.constant 0 : index
    %8 = vector.load %arg9[%c0_6, %c0_7] : memref<10x32xf32, #tpu.memory_space<vmem>>, vector<10x32xf32>
    tpu.vector_store %arg9[%c0_6, %c0_7], %7 {strides = array<i32>} : memref<10x32xf32, #tpu.memory_space<vmem>>, vector<10x32xf32>,
    %c0_i32_8 = arith.constant 0 : i32
    %9 = arith.cmpi eq, %arg1, %c0_i32_8 : i32
    %10 = arith.extui %9 : i1 to i32
    %c0_i32_9 = arith.constant 0 : i32
    %11 = arith.cmpi ne, %10, %c0_i32_9 : i32
    scf.if %11 {
      %c0_10 = arith.constant 0 : index
      %c0_11 = arith.constant 0 : index
      %12 = vector.load %arg9[%c0_10, %c0_11] : memref<10x32xf32, #tpu.memory_space<vmem>>, vector<10x32xf32>
      %c0_12 = arith.constant 0 : index
      %c0_13 = arith.constant 0 : index
      %13 = vector.load %arg4[%c0_12, %c0_13] : memref<1x32xf32, #tpu.memory_space<vmem>>, vector<1x32xf32>
      %14 = vector.broadcast %13 : vector<1x32xf32> to vector<10x32xf32>
      %15 = arith.addf %12, %14 : vector<10x32xf32>
      %c0_14 = arith.constant 0 : index
      %c0_15 = arith.constant 0 : index
      %16 = vector.load %arg5[%c0_14, %c0_15] : memref<10x32xbf16, #tpu.memory_space<vmem>>, vector<10x32xbf16>
      %17 = arith.extf %16 : vector<10x32xbf16> to vector<10x32xf32>
      %18 = arith.addf %15, %17 : vector<10x32xf32>
      %cst_16 = arith.constant dense<0.000000e+00> : vector<10xf32>
      %19 = vector.multi_reduction <add>, %18, %cst_16 [1] : vector<10x32xf32> to vector<10xf32>
      %20 = vector.shape_cast %19 : vector<10xf32> to vector<10x1xf32>
      %cst_17 = arith.constant 3.200000e+01 : f32
      %21 = vector.broadcast %cst_17 : f32 to vector<10x1xf32>
      %22 = arith.divf %20, %21 : vector<10x1xf32>
      %23 = vector.broadcast %22 : vector<10x1xf32> to vector<10x32xf32>
      %24 = arith.subf %18, %23 : vector<10x32xf32>
      %25 = arith.mulf %24, %24 : vector<10x32xf32>
      %cst_18 = arith.constant dense<0.000000e+00> : vector<10xf32>
      %26 = vector.multi_reduction <add>, %25, %cst_18 [1] : vector<10x32xf32> to vector<10xf32>
      %27 = vector.shape_cast %26 : vector<10xf32> to vector<10x1xf32>
      %cst_19 = arith.constant 3.200000e+01 : f32
      %28 = vector.broadcast %cst_19 : f32 to vector<10x1xf32>
      %29 = arith.divf %27, %28 : vector<10x1xf32>
      %cst_20 = arith.constant 9.99999974E-6 : f32
      %30 = vector.broadcast %cst_20 : f32 to vector<10x1xf32>
      %31 = arith.addf %29, %30 : vector<10x1xf32>
      %32 = math.rsqrt %31 : vector<10x1xf32>
      %33 = vector.broadcast %32 : vector<10x1xf32> to vector<10x32xf32>
      %34 = arith.mulf %24, %33 : vector<10x32xf32>
      %c0_21 = arith.constant 0 : index
      %c0_22 = arith.constant 0 : index
      %35 = vector.load %arg6[%c0_21, %c0_22] : memref<1x32xf32, #tpu.memory_space<vmem>>, vector<1x32xf32>
      %36 = vector.broadcast %35 : vector<1x32xf32> to vector<10x32xf32>
      %37 = arith.mulf %34, %36 : vector<10x32xf32>
      %c0_23 = arith.constant 0 : index
      %c0_24 = arith.constant 0 : index
      %38 = vector.load %arg7[%c0_23, %c0_24] : memref<1x32xf32, #tpu.memory_space<vmem>>, vector<1x32xf32>
      %39 = vector.broadcast %38 : vector<1x32xf32> to vector<10x32xf32>
      %40 = arith.addf %37, %39 : vector<10x32xf32>
      %41 = arith.truncf %40 : vector<10x32xf32> to vector<10x32xbf16>
      %c0_25 = arith.constant 0 : index
      %c0_26 = arith.constant 0 : index
      %42 = vector.load %arg8[%c0_25, %c0_26] : memref<10x32xbf16, #tpu.memory_space<vmem>>, vector<10x32xbf16>
      tpu.vector_store %arg8[%c0_25, %c0_26], %41 {strides = array<i32>} : memref<10x32xbf16, #tpu.memory_space<vmem>>, vector<10x32xbf16>,
    } else {
    }
    return
  }
  func.func @transform_0(%arg0: i32, %arg1: i32) -> (i32, i32) {
    %c0_i32 = arith.constant 0 : i32
    return %arg0, %arg1 : i32, i32
  }
  func.func @transform_1(%arg0: i32, %arg1: i32) -> (i32, i32) {
    %c0_i32 = arith.constant 0 : i32
    %c0_i32_0 = arith.constant 0 : i32
    return %arg1, %c0_i32 : i32, i32
  }
  func.func @transform_2(%arg0: i32, %arg1: i32) -> (i32, i32) {
    %c0_i32 = arith.constant 0 : i32
    %c0_i32_0 = arith.constant 0 : i32
    %c0_i32_1 = arith.constant 0 : i32
    return %c0_i32, %c0_i32_0 : i32, i32
  }
  func.func @transform_3(%arg0: i32, %arg1: i32) -> (i32, i32) {
    %c0_i32 = arith.constant 0 : i32
    %c0_i32_0 = arith.constant 0 : i32
    return %arg0, %c0_i32 : i32, i32
  }
  func.func @transform_4(%arg0: i32, %arg1: i32) -> (i32, i32) {
    %c0_i32 = arith.constant 0 : i32
    %c0_i32_0 = arith.constant 0 : i32
    %c0_i32_1 = arith.constant 0 : i32
    return %c0_i32, %c0_i32_0 : i32, i32
  }
  func.func @transform_5(%arg0: i32, %arg1: i32) -> (i32, i32) {
    %c0_i32 = arith.constant 0 : i32
    %c0_i32_0 = arith.constant 0 : i32
    %c0_i32_1 = arith.constant 0 : i32
    return %c0_i32, %c0_i32_0 : i32, i32
  }
  func.func @transform_6(%arg0: i32, %arg1: i32) -> (i32, i32) {
    %c0_i32 = arith.constant 0 : i32
    %c0_i32_0 = arith.constant 0 : i32
    return %arg0, %c0_i32 : i32, i32
  }
}

module attributes {stable_mosaic.version = 11 : i64} {
  func.func @_linear_kernel(%arg0: i32, %arg1: i32, %arg2: i32, %arg3: memref<2x32xbf16, #tpu.memory_space<vmem>>, %arg4: memref<32x128xbf16, #tpu.memory_space<vmem>>, %arg5: memref<1x128xf32, #tpu.memory_space<vmem>>, %arg6: memref<2x128xf32, #tpu.memory_space<vmem>>, %arg7: memref<2x128xf32, #tpu.memory_space<vmem>>) attributes {dimension_semantics = [#tpu.dimension_semantics<parallel>, #tpu.dimension_semantics<parallel>, #tpu.dimension_semantics<arbitrary>], iteration_bounds = array<i64: 1, 1, 1>, scalar_prefetch = 0 : i64, scratch_operands = 1 : i64, tpu.core_type = #tpu.core_type<tc>, window_params = [{transform_indices = @transform_0, window_bounds = array<i64: 2, 32>}, {transform_indices = @transform_1, window_bounds = array<i64: 32, 128>}, {transform_indices = @transform_2, window_bounds = array<i64: 1, 128>}, {transform_indices = @transform_3, window_bounds = array<i64: 2, 128>}]} {
    %c0_i32 = arith.constant 0 : i32
    %0 = arith.cmpi eq, %arg2, %c0_i32 : i32
    %1 = arith.extui %0 : i1 to i32
    %c0_i32_0 = arith.constant 0 : i32
    %2 = arith.cmpi ne, %1, %c0_i32_0 : i32
    scf.if %2 {
      %cst_10 = arith.constant 0.000000e+00 : f32
      %12 = vector.broadcast %cst_10 : f32 to vector<2x128xf32>
      %c0_11 = arith.constant 0 : index
      %c0_12 = arith.constant 0 : index
      %13 = vector.load %arg7[%c0_11, %c0_12] : memref<2x128xf32, #tpu.memory_space<vmem>>, vector<2x128xf32>
      tpu.vector_store %arg7[%c0_11, %c0_12], %12 {strides = array<i32>} : memref<2x128xf32, #tpu.memory_space<vmem>>, vector<2x128xf32>,
    } else {
    }
    %c0 = arith.constant 0 : index
    %c0_1 = arith.constant 0 : index
    %3 = vector.load %arg7[%c0, %c0_1] : memref<2x128xf32, #tpu.memory_space<vmem>>, vector<2x128xf32>
    %c0_2 = arith.constant 0 : index
    %c0_3 = arith.constant 0 : index
    %4 = vector.load %arg3[%c0_2, %c0_3] : memref<2x32xbf16, #tpu.memory_space<vmem>>, vector<2x32xbf16>
    %c0_4 = arith.constant 0 : index
    %c0_5 = arith.constant 0 : index
    %5 = vector.load %arg4[%c0_4, %c0_5] : memref<32x128xbf16, #tpu.memory_space<vmem>>, vector<32x128xbf16>
    %cst = arith.constant dense<0.000000e+00> : vector<2x128xf32>
    %6 = tpu.matmul %4, %5, %cst {dimension_numbers = #tpu.dot_dimension_numbers<[1], [0], [0], [1], [0, 0, 1, 1], [], []>} : vector<2x32xbf16>, vector<32x128xbf16>, vector<2x128xf32> -> vector<2x128xf32>
    %7 = arith.addf %3, %6 : vector<2x128xf32>
    %c0_6 = arith.constant 0 : index
    %c0_7 = arith.constant 0 : index
    %8 = vector.load %arg7[%c0_6, %c0_7] : memref<2x128xf32, #tpu.memory_space<vmem>>, vector<2x128xf32>
    tpu.vector_store %arg7[%c0_6, %c0_7], %7 {strides = array<i32>} : memref<2x128xf32, #tpu.memory_space<vmem>>, vector<2x128xf32>,
    %c0_i32_8 = arith.constant 0 : i32
    %9 = arith.cmpi eq, %arg2, %c0_i32_8 : i32
    %10 = arith.extui %9 : i1 to i32
    %c0_i32_9 = arith.constant 0 : i32
    %11 = arith.cmpi ne, %10, %c0_i32_9 : i32
    scf.if %11 {
      %c0_10 = arith.constant 0 : index
      %c0_11 = arith.constant 0 : index
      %12 = vector.load %arg7[%c0_10, %c0_11] : memref<2x128xf32, #tpu.memory_space<vmem>>, vector<2x128xf32>
      %c0_12 = arith.constant 0 : index
      %c0_13 = arith.constant 0 : index
      %13 = vector.load %arg5[%c0_12, %c0_13] : memref<1x128xf32, #tpu.memory_space<vmem>>, vector<1x128xf32>
      %14 = vector.broadcast %13 : vector<1x128xf32> to vector<2x128xf32>
      %15 = arith.addf %12, %14 : vector<2x128xf32>
      %c0_14 = arith.constant 0 : index
      %c0_15 = arith.constant 0 : index
      %16 = vector.load %arg6[%c0_14, %c0_15] : memref<2x128xf32, #tpu.memory_space<vmem>>, vector<2x128xf32>
      tpu.vector_store %arg6[%c0_14, %c0_15], %15 {strides = array<i32>} : memref<2x128xf32, #tpu.memory_space<vmem>>, vector<2x128xf32>,
    } else {
    }
    return
  }
  func.func @transform_0(%arg0: i32, %arg1: i32, %arg2: i32) -> (i32, i32) {
    %c0_i32 = arith.constant 0 : i32
    return %arg0, %arg2 : i32, i32
  }
  func.func @transform_1(%arg0: i32, %arg1: i32, %arg2: i32) -> (i32, i32) {
    %c0_i32 = arith.constant 0 : i32
    return %arg2, %arg1 : i32, i32
  }
  func.func @transform_2(%arg0: i32, %arg1: i32, %arg2: i32) -> (i32, i32) {
    %c0_i32 = arith.constant 0 : i32
    %c0_i32_0 = arith.constant 0 : i32
    return %c0_i32, %arg1 : i32, i32
  }
  func.func @transform_3(%arg0: i32, %arg1: i32, %arg2: i32) -> (i32, i32) {
    %c0_i32 = arith.constant 0 : i32
    return %arg0, %arg1 : i32, i32
  }
}

</mosaic_0001>

<llo_original>
// kernel: vit_forward.12
$region0: #{vit_forward.12}
  #allocation0 [shape = 'u32[]', space=smem, size = 0x4, offset = 0x4, fixed_abs, tag = 'smem constant byte address 0x4 - core index']
  #allocation1 [shape = 'u32[144,128]{1,0:T(1,128)}', space=vmem, size = 0x12000, scoped, tag = 'internal scratch']
  #allocation2 [shape = 'f32[8,32]{1,0:T(8,128)}', space=vmem, size = 0x1000, scoped, tag = 'scratch operand']
  %s0 = inlined_call_operand.vmem [shape: f32[8,192], index: 0, kind: input, shape index: {}]
  %s1 = inlined_call_operand.vmem [shape: bf16[192,32], index: 1, kind: input, shape index: {}]
  %s2 = inlined_call_operand.vmem [shape: f32[1,32], index: 2, kind: input, shape index: {}]
  %s3 = inlined_call_operand.vmem [shape: bf16[8,32], index: 3, kind: output, shape index: {}]
  %s4 = sld [smem:[#allocation0]]
  $region30: #{vit_forward.12} parent=0
    _
  %s6 = ssub.s32 1, %s4
  %s7 = scalar_select 0, %s6, %s4
  // Predicated region
  $region2: #{vit_forward.12} parent=0 // pred_check
    _
  $region3: #{vit_forward.12} parent=0 // pred_check_branch
    %9 = sbr.rel (0) target = $region5
  $region4: #{vit_forward.12} parent=0 // pred_region
    _
  $region5: #{vit_forward.12} parent=0 // pred_fallthru
    _
  // Predicated region
  $region6: #{vit_forward.12} parent=0 // pred_check
    _
  $region7: #{vit_forward.12} parent=0 // pred_check_branch
    %11 = sbr.rel (0) target = $region9
  $region8: #{vit_forward.12} parent=0 // pred_region
    _
  $region9: #{vit_forward.12} parent=0 // pred_fallthru
    _
  // Predicated region
  $region10: #{vit_forward.12} parent=0 // pred_check
    _
  $region11: #{vit_forward.12} parent=0 // pred_check_branch
    %13 = sbr.rel (0) target = $region13
  $region12: #{vit_forward.12} parent=0 // pred_region
    _
  $region13: #{vit_forward.12} parent=0 // pred_fallthru
    _
  %p15 = scmp.eq.s32.totalorder 0, 0
  // Predicated region
  $region14: #{vit_forward.12} parent=0 // pred_check
    %p16 = pneg %p15
  $region15: #{vit_forward.12} parent=0 // pred_check_branch
    %18 = sbr.rel (%p16) target = $region17
  $region16: #{vit_forward.12} parent=0 // pred_region
    %vm19 = vcmask 261120
    %20 = vst.msk [vmem:[#allocation2] sm:$0xff] %vm19, 0.0
  $region17: #{vit_forward.12} parent=0 // pred_fallthru
    _
  %v21 = vld [vmem:[#allocation2] sm:$0xff]
  %v22 = vld [vmem:[%s0] sm:$0xff]
  %v23 = vld [vmem:[%s0 + $0x8] sm:$0xff]
  %v24 = vpack.c.bf16 %v22, %v22
  %v25 = vpack.c.bf16 %v23, %v23
  %v26 = vld [vmem:[%s1] sm:$0xf]
  %v27 = vld [vmem:[%s1 + $0x4] sm:$0xf]
  %v28 = vld [vmem:[%s1 + $0x8] sm:$0xf]
  %v29 = vld [vmem:[%s1 + $0xc] sm:$0xf]
  %v30 = vld [vmem:[%s1 + $0x10] sm:$0xf]
  %v31 = vld [vmem:[%s1 + $0x14] sm:$0xf]
  %v32 = vld [vmem:[%s1 + $0x18] sm:$0xf]
  %v33 = vld [vmem:[%s1 + $0x1c] sm:$0xf]
  %v34 = vld [vmem:[%s1 + $0x20] sm:$0xf]
  %v35 = vld [vmem:[%s1 + $0x24] sm:$0xf]
  %v36 = vld [vmem:[%s1 + $0x28] sm:$0xf]
  %v37 = vld [vmem:[%s1 + $0x2c] sm:$0xf]
  %v38 = vld [vmem:[%s1 + $0x30] sm:$0xf]
  %v39 = vld [vmem:[%s1 + $0x34] sm:$0xf]
  %v40 = vld [vmem:[%s1 + $0x38] sm:$0xf]
  %v41 = vld [vmem:[%s1 + $0x3c] sm:$0xf]
  %v42 = vld [vmem:[%s1 + $0x40] sm:$0xf]
  %v43 = vld [vmem:[%s1 + $0x44] sm:$0xf]
  %v44 = vld [vmem:[%s1 + $0x48] sm:$0xf]
  %v45 = vld [vmem:[%s1 + $0x4c] sm:$0xf]
  %v46 = vld [vmem:[%s1 + $0x50] sm:$0xf]
  %v47 = vld [vmem:[%s1 + $0x54] sm:$0xf]
  %v48 = vld [vmem:[%s1 + $0x58] sm:$0xf]
  %v49 = vld [vmem:[%s1 + $0x5c] sm:$0xf]
  %v74 = vunpack.c.l.b16 %v26
  %v75 = vunpack.c.l.b16 %v27
  %v76 = vunpack.c.l.b16 %v28
  %v77 = vunpack.c.l.b16 %v29
  %v78 = vunpack.c.l.b16 %v30
  %v79 = vunpack.c.l.b16 %v31
  %v80 = vunpack.c.l.b16 %v32
  %v81 = vunpack.c.l.b16 %v33
  %v82 = vunpack.c.l.b16 %v34
  %v83 = vunpack.c.l.b16 %v35
  %v84 = vunpack.c.l.b16 %v36
  %v85 = vunpack.c.l.b16 %v37
  %v86 = vunpack.c.l.b16 %v38
  %v87 = vunpack.c.l.b16 %v39
  %v88 = vunpack.c.l.b16 %v40
  %v89 = vunpack.c.l.b16 %v41
  %v90 = vunpack.c.l.b16 %v42
  %v91 = vunpack.c.l.b16 %v43
  %v92 = vunpack.c.l.b16 %v44
  %v93 = vunpack.c.l.b16 %v45
  %v94 = vunpack.c.l.b16 %v46
  %v95 = vunpack.c.l.b16 %v47
  %v96 = vunpack.c.l.b16 %v48
  %v97 = vunpack.c.l.b16 %v49
  %v98 = vpack.c.b16 %v75, %v74
  %v99 = vpack.c.b16 %v77, %v76
  %v100 = vpack.c.b16 %v79, %v78
  %v101 = vpack.c.b16 %v81, %v80
  %v102 = vpack.c.b16 %v83, %v82
  %v103 = vpack.c.b16 %v85, %v84
  %v104 = vpack.c.b16 %v87, %v86
  %v105 = vpack.c.b16 %v89, %v88
  %v106 = vpack.c.b16 %v91, %v90
  %v107 = vpack.c.b16 %v93, %v92
  %v108 = vpack.c.b16 %v95, %v94
  %v109 = vpack.c.b16 %v97, %v96
  %vm122 = vcmask 523264
  %v124 = vsel %vm122, %v25, 0
  %126 = vmatprep.subr.bf16.mxu0 0
  %127 = vmatpush1.bf16.msra.mxu0 %v98
  %128 = vmatprep.subr.bf16.mxu0 0
  %129 = vmatpush1.bf16.msra.mxu0 %v99
  %130 = vmatprep.subr.bf16.mxu0 0
  %131 = vmatpush1.bf16.msra.mxu0 %v100
  %132 = vmatprep.subr.bf16.mxu0 0
  %133 = vmatpush1.bf16.msra.mxu0 %v101
  %134 = vmatprep.subr.bf16.mxu0 0
  %135 = vmatpush1.bf16.msra.mxu0 %v102
  %136 = vmatprep.subr.bf16.mxu0 0
  %137 = vmatpush1.bf16.msra.mxu0 %v103
  %138 = vmatprep.subr.bf16.mxu0 0
  %139 = vmatpush1.bf16.msra.mxu0 %v104
  %140 = vmatprep.subr.bf16.mxu0 0
  %141 = vmatpush1.bf16.msra.mxu0 %v105
  %142 = vmatprep.subr.bf16.mxu0 0
  %143 = vmatpush1.bf16.msra.mxu0 %v106
  %144 = vmatprep.subr.bf16.mxu0 0
  %145 = vmatpush1.bf16.msra.mxu0 %v107
  %146 = vmatprep.subr.bf16.mxu0 0
  %147 = vmatpush1.bf16.msra.mxu0 %v108
  %148 = vmatprep.subr.bf16.mxu0 0
  %149 = vmatpush1.bf16.msra.mxu0 %v109
  %150 = vmatprep.subr.bf16.mxu0 0
  %151 = vmatpush1.bf16.msra.mxu0 0
  %152 = vmatprep.subr.bf16.mxu0 0
  %153 = vmatpush1.bf16.msra.mxu0 0
  %154 = vmatprep.subr.bf16.mxu0 0
  %155 = vmatpush1.bf16.msra.mxu0 0
  %156 = vmatprep.subr.bf16.mxu0 0
  %157 = vmatpush1.bf16.msra.mxu0 0
  %158 = vmatprep.mubr.bf16.mxu0 %v124
  %159 = vmatmul.mubr.bf16.gmra.mrb[0].mxu0 %v24
  %v160 = vpop.f32.mrb[0].mxu0
  %v161 = vadd.f32 0.0, %v160
  %v162 = vpop.f32.mrb[0].mxu0
  %v163 = vpop.f32.mrb[0].mxu0
  %v164 = vpop.f32.mrb[0].mxu0
  %165 = vdwg.mxu0
  %v166 = vadd.f32 %v21, %v161
  %vm167 = vcmask 261120
  %168 = vst.msk [vmem:[#allocation2] sm:$0xff] %vm167, %v166
  // Predicated region
  $region18: #{vit_forward.12} parent=0 // pred_check
    %p169 = pneg %p15
  $region19: #{vit_forward.12} parent=0 // pred_check_branch
    %171 = sbr.rel (%p169) target = $region21
  $region20: #{vit_forward.12} parent=0 // pred_region
    %v172 = vld [vmem:[#allocation2] sm:$0xff]
    %v173 = vld [vmem:[%s2] sm:$0x1]
    %v175 = vlaneseq
    %v176 = vshrl.u32 %v175, 7
    %v177 = vsub.s32 0, %v176
    %v178 = vrot.slane %v173, %v177
    %v180 = vadd.f32 %v172, %v178
    %v181 = vpack.c.bf16 %v180, %v180
    %vm182 = vcmask 257024
    %183 = vst.msk [vmem:[%s3] sm:$0xf] %vm182, %v181
  $region21: #{vit_forward.12} parent=0 // pred_fallthru
    _
  // Predicated region
  $region22: #{vit_forward.12} parent=0 // pred_check
    _
  $region23: #{vit_forward.12} parent=0 // pred_check_branch
    %185 = sbr.rel (0) target = $region25
  $region24: #{vit_forward.12} parent=0 // pred_region
    _
  $region25: #{vit_forward.12} parent=0 // pred_fallthru
    _
  // Predicated region
  $region26: #{vit_forward.12} parent=0 // pred_check
    _
  $region27: #{vit_forward.12} parent=0 // pred_check_branch
    %187 = sbr.rel (0) target = $region29
  $region28: #{vit_forward.12} parent=0 // pred_region
    _
  $region29: #{vit_forward.12} parent=0 // pred_fallthru
    _

// kernel: vit_forward.13
$region0: #{vit_forward.13}
  #allocation0 [shape = 'u32[]', space=smem, size = 0x4, offset = 0x4, fixed_abs, tag = 'smem constant byte address 0x4 - core index']
  #allocation1 [shape = 'u32[144,128]{1,0:T(1,128)}', space=vmem, size = 0x12000, scoped, tag = 'internal scratch']
  #allocation2 [shape = 'f32[10,96]{1,0:T(8,128)}', space=vmem, size = 0x2000, scoped, tag = 'scratch operand']
  %s0 = inlined_call_operand.vmem [shape: bf16[10,32], index: 0, kind: input, shape index: {}]
  %s1 = inlined_call_operand.vmem [shape: bf16[32,96], index: 1, kind: input, shape index: {}]
  %s2 = inlined_call_operand.vmem [shape: f32[1,96], index: 2, kind: input, shape index: {}]
  %s3 = inlined_call_operand.vmem [shape: bf16[10,96], index: 3, kind: output, shape index: {}]
  %s4 = sld [smem:[#allocation0]]
  $region30: #{vit_forward.13} parent=0
    _
  %s6 = ssub.s32 1, %s4
  %s7 = scalar_select 0, %s6, %s4
  // Predicated region
  $region2: #{vit_forward.13} parent=0 // pred_check
    _
  $region3: #{vit_forward.13} parent=0 // pred_check_branch
    %9 = sbr.rel (0) target = $region5
  $region4: #{vit_forward.13} parent=0 // pred_region
    _
  $region5: #{vit_forward.13} parent=0 // pred_fallthru
    _
  // Predicated region
  $region6: #{vit_forward.13} parent=0 // pred_check
    _
  $region7: #{vit_forward.13} parent=0 // pred_check_branch
    %11 = sbr.rel (0) target = $region9
  $region8: #{vit_forward.13} parent=0 // pred_region
    _
  $region9: #{vit_forward.13} parent=0 // pred_fallthru
    _
  // Predicated region
  $region10: #{vit_forward.13} parent=0 // pred_check
    _
  $region11: #{vit_forward.13} parent=0 // pred_check_branch
    %13 = sbr.rel (0) target = $region13
  $region12: #{vit_forward.13} parent=0 // pred_region
    _
  $region13: #{vit_forward.13} parent=0 // pred_fallthru
    _
  %p15 = scmp.eq.s32.totalorder 0, 0
  // Predicated region
  $region14: #{vit_forward.13} parent=0 // pred_check
    %p16 = pneg %p15
  $region15: #{vit_forward.13} parent=0 // pred_check_branch
    %18 = sbr.rel (%p16) target = $region17
  $region16: #{vit_forward.13} parent=0 // pred_region
    %vm19 = vcmask 785408
    %20 = vst.msk [vmem:[#allocation2] sm:$0xff] %vm19, 0.0
    %vm21 = vcmask 779264
    %22 = vst.msk [vmem:[#allocation2 + $0x8] sm:$0x3] %vm21, 0.0
  $region17: #{vit_forward.13} parent=0 // pred_fallthru
    _
  %v23 = vld [vmem:[#allocation2] sm:$0xff]
  %v24 = vld [vmem:[#allocation2 + $0x8] sm:$0x3]
  %v25 = vld [vmem:[%s0] sm:$0xf]
  %v26 = vld [vmem:[%s0 + $0x4] sm:$0x1]
  %v27 = vld [vmem:[%s1] sm:$0xf]
  %v28 = vld [vmem:[%s1 + $0x4] sm:$0xf]
  %v29 = vld [vmem:[%s1 + $0x8] sm:$0xf]
  %v30 = vld [vmem:[%s1 + $0xc] sm:$0xf]
  %v33 = vunpack.c.l.b16 %v25
  %v34 = vunpack.c.l.b16 %v26
  %v35 = vpack.c.b16 %v34, %v33
  %v40 = vunpack.c.l.b16 %v27
  %v41 = vunpack.c.l.b16 %v28
  %v42 = vunpack.c.l.b16 %v29
  %v43 = vunpack.c.l.b16 %v30
  %v44 = vpack.c.b16 %v41, %v40
  %v45 = vpack.c.b16 %v43, %v42
  %vm48 = vcmask 261120
  %v50 = vsel %vm48, %v35, 0
  %52 = vmatprep.subr.bf16.mxu0 0
  %53 = vmatpush1.bf16.msra.mxu0 %v44
  %54 = vmatprep.subr.bf16.mxu0 0
  %55 = vmatpush1.bf16.msra.mxu0 %v45
  %56 = vmatprep.subr.bf16.mxu0 0
  %57 = vmatpush1.bf16.msra.mxu0 0
  %58 = vmatprep.subr.bf16.mxu0 0
  %59 = vmatpush1.bf16.msra.mxu0 0
  %60 = vmatprep.subr.bf16.mxu0 0
  %61 = vmatpush1.bf16.msra.mxu0 0
  %62 = vmatprep.subr.bf16.mxu0 0
  %63 = vmatpush1.bf16.msra.mxu0 0
  %64 = vmatprep.subr.bf16.mxu0 0
  %65 = vmatpush1.bf16.msra.mxu0 0
  %66 = vmatprep.subr.bf16.mxu0 0
  %67 = vmatpush1.bf16.msra.mxu0 0
  %68 = vmatprep.subr.bf16.mxu0 0
  %69 = vmatpush1.bf16.msra.mxu0 0
  %70 = vmatprep.subr.bf16.mxu0 0
  %71 = vmatpush1.bf16.msra.mxu0 0
  %72 = vmatprep.subr.bf16.mxu0 0
  %73 = vmatpush1.bf16.msra.mxu0 0
  %74 = vmatprep.subr.bf16.mxu0 0
  %75 = vmatpush1.bf16.msra.mxu0 0
  %76 = vmatprep.subr.bf16.mxu0 0
  %77 = vmatpush1.bf16.msra.mxu0 0
  %78 = vmatprep.subr.bf16.mxu0 0
  %79 = vmatpush1.bf16.msra.mxu0 0
  %80 = vmatprep.subr.bf16.mxu0 0
  %81 = vmatpush1.bf16.msra.mxu0 0
  %82 = vmatprep.subr.bf16.mxu0 0
  %83 = vmatpush1.bf16.msra.mxu0 0
  %84 = vmatprep.mubr.bf16.mxu0 0
  %85 = vmatmul.mubr.bf16.gmra.mrb[0].mxu0 %v50
  %v86 = vpop.f32.mrb[0].mxu0
  %v87 = vadd.f32 0.0, %v86
  %v88 = vpop.f32.mrb[0].mxu0
  %v89 = vpop.f32.mrb[0].mxu0
  %v90 = vadd.f32 0.0, %v89
  %v91 = vpop.f32.mrb[0].mxu0
  %92 = vdwg.mxu0
  %v93 = vadd.f32 %v23, %v87
  %v94 = vadd.f32 %v24, %v90
  %vm95 = vcmask 785408
  %96 = vst.msk [vmem:[#allocation2] sm:$0xff] %vm95, %v93
  %vm97 = vcmask 779264
  %98 = vst.msk [vmem:[#allocation2 + $0x8] sm:$0x3] %vm97, %v94
  // Predicated region
  $region18: #{vit_forward.13} parent=0 // pred_check
    %p99 = pneg %p15
  $region19: #{vit_forward.13} parent=0 // pred_check_branch
    %101 = sbr.rel (%p99) target = $region21
  $region20: #{vit_forward.13} parent=0 // pred_region
    %v102 = vld [vmem:[#allocation2] sm:$0xff]
    %v103 = vld [vmem:[#allocation2 + $0x8] sm:$0x3]
    %v104 = vld [vmem:[%s2] sm:$0x1]
    %v106 = vlaneseq
    %v107 = vshrl.u32 %v106, 7
    %v108 = vsub.s32 0, %v107
    %v109 = vrot.slane %v104, %v108
    %v111 = vadd.f32 %v102, %v109
    %v112 = vadd.f32 %v103, %v109
    %v113 = vpack.c.bf16 %v112, %v111
    %v115 = vunpack.c.l.b16 %v113
    %v116 = vunpack.c.h.b16 %v113
    %v117 = vpack.c.b16 %v115, %v115
    %v118 = vpack.c.b16 %v116, %v116
    %vm121 = vcmask 781312
    %122 = vst.msk [vmem:[%s3] sm:$0xf] %vm121, %v117
    %vm123 = vcmask 778240
    %124 = vst.msk [vmem:[%s3 + $0x4] sm:$0x1] %vm123, %v118
  $region21: #{vit_forward.13} parent=0 // pred_fallthru
    _
  // Predicated region
  $region22: #{vit_forward.13} parent=0 // pred_check
    _
  $region23: #{vit_forward.13} parent=0 // pred_check_branch
    %126 = sbr.rel (0) target = $region25
  $region24: #{vit_forward.13} parent=0 // pred_region
    _
  $region25: #{vit_forward.13} parent=0 // pred_fallthru
    _
  // Predicated region
  $region26: #{vit_forward.13} parent=0 // pred_check
    _
  $region27: #{vit_forward.13} parent=0 // pred_check_branch
    %128 = sbr.rel (0) target = $region29
  $region28: #{vit_forward.13} parent=0 // pred_region
    _
  $region29: #{vit_forward.13} parent=0 // pred_fallthru
    _

// kernel: vit_forward.15
$region0: #{vit_forward.15}
  #allocation0 [shape = 'u32[]', space=smem, size = 0x4, offset = 0x4, fixed_abs, tag = 'smem constant byte address 0x4 - core index']
  #allocation1 [shape = 'u32[144,128]{1,0:T(1,128)}', space=vmem, size = 0x12000, scoped, tag = 'internal scratch']
  #allocation2 [shape = 'f32[10,32]{1,0:T(8,128)}', space=vmem, size = 0x2000, scoped, tag = 'scratch operand']
  %s0 = inlined_call_operand.vmem [shape: bf16[10,32], index: 0, kind: input, shape index: {}]
  %s1 = inlined_call_operand.vmem [shape: bf16[32,32], index: 1, kind: input, shape index: {}]
  %s2 = inlined_call_operand.vmem [shape: f32[1,32], index: 2, kind: input, shape index: {}]
  %s3 = inlined_call_operand.vmem [shape: bf16[10,32], index: 3, kind: input, shape index: {}]
  %s4 = inlined_call_operand.vmem [shape: f32[1,32], index: 4, kind: input, shape index: {}]
  %s5 = inlined_call_operand.vmem [shape: f32[1,32], index: 5, kind: input, shape index: {}]
  %s6 = inlined_call_operand.vmem [shape: bf16[10,32], index: 6, kind: output, shape index: {}]
  %s7 = sld [smem:[#allocation0]]
  $region42: #{vit_forward.15} parent=0
    _
  %s9 = ssub.s32 1, %s7
  %s10 = scalar_select 0, %s9, %s7
  // Predicated region
  $region2: #{vit_forward.15} parent=0 // pred_check
    _
  $region3: #{vit_forward.15} parent=0 // pred_check_branch
    %12 = sbr.rel (0) target = $region5
  $region4: #{vit_forward.15} parent=0 // pred_region
    _
  $region5: #{vit_forward.15} parent=0 // pred_fallthru
    _
  // Predicated region
  $region6: #{vit_forward.15} parent=0 // pred_check
    _
  $region7: #{vit_forward.15} parent=0 // pred_check_branch
    %14 = sbr.rel (0) target = $region9
  $region8: #{vit_forward.15} parent=0 // pred_region
    _
  $region9: #{vit_forward.15} parent=0 // pred_fallthru
    _
  // Predicated region
  $region10: #{vit_forward.15} parent=0 // pred_check
    _
  $region11: #{vit_forward.15} parent=0 // pred_check_branch
    %16 = sbr.rel (0) target = $region13
  $region12: #{vit_forward.15} parent=0 // pred_region
    _
  $region13: #{vit_forward.15} parent=0 // pred_fallthru
    _
  // Predicated region
  $region14: #{vit_forward.15} parent=0 // pred_check
    _
  $region15: #{vit_forward.15} parent=0 // pred_check_branch
    %18 = sbr.rel (0) target = $region17
  $region16: #{vit_forward.15} parent=0 // pred_region
    _
  $region17: #{vit_forward.15} parent=0 // pred_fallthru
    _
  // Predicated region
  $region18: #{vit_forward.15} parent=0 // pred_check
    _
  $region19: #{vit_forward.15} parent=0 // pred_check_branch
    %20 = sbr.rel (0) target = $region21
  $region20: #{vit_forward.15} parent=0 // pred_region
    _
  $region21: #{vit_forward.15} parent=0 // pred_fallthru
    _
  // Predicated region
  $region22: #{vit_forward.15} parent=0 // pred_check
    _
  $region23: #{vit_forward.15} parent=0 // pred_check_branch
    %22 = sbr.rel (0) target = $region25
  $region24: #{vit_forward.15} parent=0 // pred_region
    _
  $region25: #{vit_forward.15} parent=0 // pred_fallthru
    _
  %p24 = scmp.eq.s32.totalorder 0, 0
  // Predicated region
  $region26: #{vit_forward.15} parent=0 // pred_check
    %p25 = pneg %p24
  $region27: #{vit_forward.15} parent=0 // pred_check_branch
    %27 = sbr.rel (%p25) target = $region29
  $region28: #{vit_forward.15} parent=0 // pred_region
    %vm28 = vcmask 261120
    %29 = vst.msk [vmem:[#allocation2] sm:$0xff] %vm28, 0.0
    %vm30 = vcmask 254976
    %31 = vst.msk [vmem:[#allocation2 + $0x8] sm:$0x3] %vm30, 0.0
  $region29: #{vit_forward.15} parent=0 // pred_fallthru
    _
  %v32 = vld [vmem:[#allocation2] sm:$0xff]
  %v33 = vld [vmem:[#allocation2 + $0x8] sm:$0x3]
  %v34 = vld [vmem:[%s0] sm:$0xf]
  %v35 = vld [vmem:[%s0 + $0x4] sm:$0x1]
  %v36 = vld [vmem:[%s1] sm:$0xf]
  %v37 = vld [vmem:[%s1 + $0x4] sm:$0xf]
  %v38 = vld [vmem:[%s1 + $0x8] sm:$0xf]
  %v39 = vld [vmem:[%s1 + $0xc] sm:$0xf]
  %v42 = vunpack.c.l.b16 %v34
  %v43 = vunpack.c.l.b16 %v35
  %v44 = vpack.c.b16 %v43, %v42
  %v49 = vunpack.c.l.b16 %v36
  %v50 = vunpack.c.l.b16 %v37
  %v51 = vunpack.c.l.b16 %v38
  %v52 = vunpack.c.l.b16 %v39
  %v53 = vpack.c.b16 %v50, %v49
  %v54 = vpack.c.b16 %v52, %v51
  %vm57 = vcmask 261120
  %v59 = vsel %vm57, %v44, 0
  %61 = vmatprep.subr.bf16.mxu0 0
  %62 = vmatpush1.bf16.msra.mxu0 %v53
  %63 = vmatprep.subr.bf16.mxu0 0
  %64 = vmatpush1.bf16.msra.mxu0 %v54
  %65 = vmatprep.subr.bf16.mxu0 0
  %66 = vmatpush1.bf16.msra.mxu0 0
  %67 = vmatprep.subr.bf16.mxu0 0
  %68 = vmatpush1.bf16.msra.mxu0 0
  %69 = vmatprep.subr.bf16.mxu0 0
  %70 = vmatpush1.bf16.msra.mxu0 0
  %71 = vmatprep.subr.bf16.mxu0 0
  %72 = vmatpush1.bf16.msra.mxu0 0
  %73 = vmatprep.subr.bf16.mxu0 0
  %74 = vmatpush1.bf16.msra.mxu0 0
  %75 = vmatprep.subr.bf16.mxu0 0
  %76 = vmatpush1.bf16.msra.mxu0 0
  %77 = vmatprep.subr.bf16.mxu0 0
  %78 = vmatpush1.bf16.msra.mxu0 0
  %79 = vmatprep.subr.bf16.mxu0 0
  %80 = vmatpush1.bf16.msra.mxu0 0
  %81 = vmatprep.subr.bf16.mxu0 0
  %82 = vmatpush1.bf16.msra.mxu0 0
  %83 = vmatprep.subr.bf16.mxu0 0
  %84 = vmatpush1.bf16.msra.mxu0 0
  %85 = vmatprep.subr.bf16.mxu0 0
  %86 = vmatpush1.bf16.msra.mxu0 0
  %87 = vmatprep.subr.bf16.mxu0 0
  %88 = vmatpush1.bf16.msra.mxu0 0
  %89 = vmatprep.subr.bf16.mxu0 0
  %90 = vmatpush1.bf16.msra.mxu0 0
  %91 = vmatprep.subr.bf16.mxu0 0
  %92 = vmatpush1.bf16.msra.mxu0 0
  %93 = vmatprep.mubr.bf16.mxu0 0
  %94 = vmatmul.mubr.bf16.gmra.mrb[0].mxu0 %v59
  %v95 = vpop.f32.mrb[0].mxu0
  %v96 = vadd.f32 0.0, %v95
  %v97 = vpop.f32.mrb[0].mxu0
  %v98 = vpop.f32.mrb[0].mxu0
  %v99 = vadd.f32 0.0, %v98
  %v100 = vpop.f32.mrb[0].mxu0
  %101 = vdwg.mxu0
  %v102 = vadd.f32 %v32, %v96
  %v103 = vadd.f32 %v33, %v99
  %104 = vst.msk [vmem:[#allocation2] sm:$0xff] %vm57, %v102
  %vm105 = vcmask 254976
  %106 = vst.msk [vmem:[#allocation2 + $0x8] sm:$0x3] %vm105, %v103
  // Predicated region
  $region30: #{vit_forward.15} parent=0 // pred_check
    %p107 = pneg %p24
  $region31: #{vit_forward.15} parent=0 // pred_check_branch
    %109 = sbr.rel (%p107) target = $region33
  $region32: #{vit_forward.15} parent=0 // pred_region
    %v110 = vld [vmem:[#allocation2] sm:$0xff]
    %v111 = vld [vmem:[#allocation2 + $0x8] sm:$0x3]
    %v112 = vld [vmem:[%s2] sm:$0x1]
    %v114 = vlaneseq
    %v115 = vshrl.u32 %v114, 7
    %v116 = vsub.s32 0, %v115
    %v117 = vrot.slane %v112, %v116
    %v119 = vadd.f32 %v110, %v117
    %v120 = vadd.f32 %v111, %v117
    %v121 = vld [vmem:[%s3] sm:$0xf]
    %v122 = vld [vmem:[%s3 + $0x4] sm:$0x1]
    %v123 = vunpack.c.l.bf16 %v121
    %v124 = vunpack.c.l.bf16 %v122
    %v125 = vadd.f32 %v119, %v123
    %v126 = vadd.f32 %v120, %v124
    %v127 = vsel %vm57, %v125, 0.0
    %128 = vadd.xlane.f32.xlu0 %v127
    %v129 = vpop.xlane.xlu0 %128
    %v130 = vsel %vm105, %v126, 0.0
    %131 = vadd.xlane.f32.xlu0 %v130
    %v132 = vpop.xlane.xlu0 %131
    %v133 = vrcp.pop 32.0
    %v134 = vmul.f32 %v129, %v133
    %v135 = vmul.f32 %v132, %v133
    %v136 = vsub.f32 %v125, %v134
    %v137 = vsub.f32 %v126, %v135
    %v138 = vmul.f32 %v136, %v136
    %v139 = vmul.f32 %v137, %v137
    %v140 = vsel %vm57, %v138, 0.0
    %141 = vadd.xlane.f32.xlu0 %v140
    %v142 = vpop.xlane.xlu0 %141
    %v143 = vsel %vm105, %v139, 0.0
    %144 = vadd.xlane.f32.xlu0 %v143
    %v145 = vpop.xlane.xlu0 %144
    %v146 = vmul.f32 %v142, %v133
    %v147 = vmul.f32 %v145, %v133
    %v148 = vadd.f32 %v146, 1e-05
    %v149 = vadd.f32 %v147, 1e-05
    %v150 = vrsqrt.pop %v148
    %v151 = vrsqrt.pop %v149
    %v152 = vmul.f32 %v136, %v150
    %v153 = vmul.f32 %v137, %v151
    %v154 = vld [vmem:[%s4] sm:$0x1]
    %v156 = vlaneseq
    %v157 = vshrl.u32 %v156, 7
    %v158 = vsub.s32 0, %v157
    %v159 = vrot.slane %v154, %v158
    %v161 = vmul.f32 %v152, %v159
    %v162 = vmul.f32 %v153, %v159
    %v163 = vld [vmem:[%s5] sm:$0x1]
    %v165 = vlaneseq
    %v166 = vshrl.u32 %v165, 7
    %v167 = vsub.s32 0, %v166
    %v168 = vrot.slane %v163, %v167
    %v170 = vadd.f32 %v161, %v168
    %v171 = vadd.f32 %v162, %v168
    %v172 = vpack.c.bf16 %v171, %v170
    %v174 = vunpack.c.l.b16 %v172
    %v175 = vunpack.c.h.b16 %v172
    %v176 = vpack.c.b16 %v174, %v174
    %v177 = vpack.c.b16 %v175, %v175
    %vm180 = vcmask 257024
    %181 = vst.msk [vmem:[%s6] sm:$0xf] %vm180, %v176
    %vm182 = vcmask 253952
    %183 = vst.msk [vmem:[%s6 + $0x4] sm:$0x1] %vm182, %v177
  $region33: #{vit_forward.15} parent=0 // pred_fallthru
    _
  // Predicated region
  $region34: #{vit_forward.15} parent=0 // pred_check
    _
  $region35: #{vit_forward.15} parent=0 // pred_check_branch
    %185 = sbr.rel (0) target = $region37
  $region36: #{vit_forward.15} parent=0 // pred_region
    _
  $region37: #{vit_forward.15} parent=0 // pred_fallthru
    _
  // Predicated region
  $region38: #{vit_forward.15} parent=0 // pred_check
    _
  $region39: #{vit_forward.15} parent=0 // pred_check_branch
    %187 = sbr.rel (0) target = $region41
  $region40: #{vit_forward.15} parent=0 // pred_region
    _
  $region41: #{vit_forward.15} parent=0 // pred_fallthru
    _

// kernel: vit_forward.16
$region0: #{vit_forward.16}
  #allocation0 [shape = 'u32[]', space=smem, size = 0x4, offset = 0x4, fixed_abs, tag = 'smem constant byte address 0x4 - core index']
  #allocation1 [shape = 'u32[144,128]{1,0:T(1,128)}', space=vmem, size = 0x12000, scoped, tag = 'internal scratch']
  #allocation2 [shape = 'f32[10,64]{1,0:T(8,128)}', space=vmem, size = 0x2000, scoped, tag = 'scratch operand']
  %s0 = inlined_call_operand.vmem [shape: bf16[10,32], index: 0, kind: input, shape index: {}]
  %s1 = inlined_call_operand.vmem [shape: bf16[32,64], index: 1, kind: input, shape index: {}]
  %s2 = inlined_call_operand.vmem [shape: f32[1,64], index: 2, kind: input, shape index: {}]
  %s3 = inlined_call_operand.vmem [shape: bf16[10,64], index: 3, kind: output, shape index: {}]
  %s4 = sld [smem:[#allocation0]]
  $region30: #{vit_forward.16} parent=0
    _
  %s6 = ssub.s32 1, %s4
  %s7 = scalar_select 0, %s6, %s4
  // Predicated region
  $region2: #{vit_forward.16} parent=0 // pred_check
    _
  $region3: #{vit_forward.16} parent=0 // pred_check_branch
    %9 = sbr.rel (0) target = $region5
  $region4: #{vit_forward.16} parent=0 // pred_region
    _
  $region5: #{vit_forward.16} parent=0 // pred_fallthru
    _
  // Predicated region
  $region6: #{vit_forward.16} parent=0 // pred_check
    _
  $region7: #{vit_forward.16} parent=0 // pred_check_branch
    %11 = sbr.rel (0) target = $region9
  $region8: #{vit_forward.16} parent=0 // pred_region
    _
  $region9: #{vit_forward.16} parent=0 // pred_fallthru
    _
  // Predicated region
  $region10: #{vit_forward.16} parent=0 // pred_check
    _
  $region11: #{vit_forward.16} parent=0 // pred_check_branch
    %13 = sbr.rel (0) target = $region13
  $region12: #{vit_forward.16} parent=0 // pred_region
    _
  $region13: #{vit_forward.16} parent=0 // pred_fallthru
    _
  %p15 = scmp.eq.s32.totalorder 0, 0
  // Predicated region
  $region14: #{vit_forward.16} parent=0 // pred_check
    %p16 = pneg %p15
  $region15: #{vit_forward.16} parent=0 // pred_check_branch
    %18 = sbr.rel (%p16) target = $region17
  $region16: #{vit_forward.16} parent=0 // pred_region
    %vm19 = vcmask 523264
    %20 = vst.msk [vmem:[#allocation2] sm:$0xff] %vm19, 0.0
    %vm21 = vcmask 517120
    %22 = vst.msk [vmem:[#allocation2 + $0x8] sm:$0x3] %vm21, 0.0
  $region17: #{vit_forward.16} parent=0 // pred_fallthru
    _
  %v23 = vld [vmem:[#allocation2] sm:$0xff]
  %v24 = vld [vmem:[#allocation2 + $0x8] sm:$0x3]
  %v25 = vld [vmem:[%s0] sm:$0xf]
  %v26 = vld [vmem:[%s0 + $0x4] sm:$0x1]
  %v27 = vld [vmem:[%s1] sm:$0xf]
  %v28 = vld [vmem:[%s1 + $0x4] sm:$0xf]
  %v29 = vld [vmem:[%s1 + $0x8] sm:$0xf]
  %v30 = vld [vmem:[%s1 + $0xc] sm:$0xf]
  %v33 = vunpack.c.l.b16 %v25
  %v34 = vunpack.c.l.b16 %v26
  %v35 = vpack.c.b16 %v34, %v33
  %v40 = vunpack.c.l.b16 %v27
  %v41 = vunpack.c.l.b16 %v28
  %v42 = vunpack.c.l.b16 %v29
  %v43 = vunpack.c.l.b16 %v30
  %v44 = vpack.c.b16 %v41, %v40
  %v45 = vpack.c.b16 %v43, %v42
  %vm48 = vcmask 261120
  %v50 = vsel %vm48, %v35, 0
  %52 = vmatprep.subr.bf16.mxu0 0
  %53 = vmatpush1.bf16.msra.mxu0 %v44
  %54 = vmatprep.subr.bf16.mxu0 0
  %55 = vmatpush1.bf16.msra.mxu0 %v45
  %56 = vmatprep.subr.bf16.mxu0 0
  %57 = vmatpush1.bf16.msra.mxu0 0
  %58 = vmatprep.subr.bf16.mxu0 0
  %59 = vmatpush1.bf16.msra.mxu0 0
  %60 = vmatprep.subr.bf16.mxu0 0
  %61 = vmatpush1.bf16.msra.mxu0 0
  %62 = vmatprep.subr.bf16.mxu0 0
  %63 = vmatpush1.bf16.msra.mxu0 0
  %64 = vmatprep.subr.bf16.mxu0 0
  %65 = vmatpush1.bf16.msra.mxu0 0
  %66 = vmatprep.subr.bf16.mxu0 0
  %67 = vmatpush1.bf16.msra.mxu0 0
  %68 = vmatprep.subr.bf16.mxu0 0
  %69 = vmatpush1.bf16.msra.mxu0 0
  %70 = vmatprep.subr.bf16.mxu0 0
  %71 = vmatpush1.bf16.msra.mxu0 0
  %72 = vmatprep.subr.bf16.mxu0 0
  %73 = vmatpush1.bf16.msra.mxu0 0
  %74 = vmatprep.subr.bf16.mxu0 0
  %75 = vmatpush1.bf16.msra.mxu0 0
  %76 = vmatprep.subr.bf16.mxu0 0
  %77 = vmatpush1.bf16.msra.mxu0 0
  %78 = vmatprep.subr.bf16.mxu0 0
  %79 = vmatpush1.bf16.msra.mxu0 0
  %80 = vmatprep.subr.bf16.mxu0 0
  %81 = vmatpush1.bf16.msra.mxu0 0
  %82 = vmatprep.subr.bf16.mxu0 0
  %83 = vmatpush1.bf16.msra.mxu0 0
  %84 = vmatprep.mubr.bf16.mxu0 0
  %85 = vmatmul.mubr.bf16.gmra.mrb[0].mxu0 %v50
  %v86 = vpop.f32.mrb[0].mxu0
  %v87 = vadd.f32 0.0, %v86
  %v88 = vpop.f32.mrb[0].mxu0
  %v89 = vpop.f32.mrb[0].mxu0
  %v90 = vadd.f32 0.0, %v89
  %v91 = vpop.f32.mrb[0].mxu0
  %92 = vdwg.mxu0
  %v93 = vadd.f32 %v23, %v87
  %v94 = vadd.f32 %v24, %v90
  %vm95 = vcmask 523264
  %96 = vst.msk [vmem:[#allocation2] sm:$0xff] %vm95, %v93
  %vm97 = vcmask 517120
  %98 = vst.msk [vmem:[#allocation2 + $0x8] sm:$0x3] %vm97, %v94
  // Predicated region
  $region18: #{vit_forward.16} parent=0 // pred_check
    %p99 = pneg %p15
  $region19: #{vit_forward.16} parent=0 // pred_check_branch
    %101 = sbr.rel (%p99) target = $region21
  $region20: #{vit_forward.16} parent=0 // pred_region
    %v102 = vld [vmem:[#allocation2] sm:$0xff]
    %v103 = vld [vmem:[#allocation2 + $0x8] sm:$0x3]
    %v104 = vld [vmem:[%s2] sm:$0x1]
    %v106 = vlaneseq
    %v107 = vshrl.u32 %v106, 7
    %v108 = vsub.s32 0, %v107
    %v109 = vrot.slane %v104, %v108
    %v111 = vadd.f32 %v102, %v109
    %v112 = vadd.f32 %v103, %v109
    %v113 = vmax.f32 %v111, 0.0
    %v114 = vmax.f32 %v112, 0.0
    %v115 = vpack.c.bf16 %v114, %v113
    %v117 = vunpack.c.l.b16 %v115
    %v118 = vunpack.c.h.b16 %v115
    %v119 = vpack.c.b16 %v117, %v117
    %v120 = vpack.c.b16 %v118, %v118
    %vm123 = vcmask 519168
    %124 = vst.msk [vmem:[%s3] sm:$0xf] %vm123, %v119
    %vm125 = vcmask 516096
    %126 = vst.msk [vmem:[%s3 + $0x4] sm:$0x1] %vm125, %v120
  $region21: #{vit_forward.16} parent=0 // pred_fallthru
    _
  // Predicated region
  $region22: #{vit_forward.16} parent=0 // pred_check
    _
  $region23: #{vit_forward.16} parent=0 // pred_check_branch
    %128 = sbr.rel (0) target = $region25
  $region24: #{vit_forward.16} parent=0 // pred_region
    _
  $region25: #{vit_forward.16} parent=0 // pred_fallthru
    _
  // Predicated region
  $region26: #{vit_forward.16} parent=0 // pred_check
    _
  $region27: #{vit_forward.16} parent=0 // pred_check_branch
    %130 = sbr.rel (0) target = $region29
  $region28: #{vit_forward.16} parent=0 // pred_region
    _
  $region29: #{vit_forward.16} parent=0 // pred_fallthru
    _

// kernel: vit_forward.23
$region0: #{vit_forward.23}
  #allocation0 [shape = 'u32[]', space=smem, size = 0x4, offset = 0x4, fixed_abs, tag = 'smem constant byte address 0x4 - core index']
  #allocation1 [shape = 'u32[144,128]{1,0:T(1,128)}', space=vmem, size = 0x12000, scoped, tag = 'internal scratch']
  #allocation2 [shape = 'f32[2,128]{1,0:T(2,128)}', space=vmem, size = 0x400, scoped, tag = 'scratch operand']
  %s0 = inlined_call_operand.vmem [shape: bf16[2,32], index: 0, kind: input, shape index: {}]
  %s1 = inlined_call_operand.vmem [shape: bf16[32,128], index: 1, kind: input, shape index: {}]
  %s2 = inlined_call_operand.vmem [shape: f32[1,128], index: 2, kind: input, shape index: {}]
  %s3 = inlined_call_operand.hbm [shape: f32[2,128], index: 3, kind: output, shape index: {}]
  %s4 = sld [smem:[#allocation0]]
  $region30: #{vit_forward.23} parent=0
    _
  %s6 = ssub.s32 1, %s4
  %s7 = scalar_select 0, %s6, %s4
  $region1: #{vit_forward.23} parent=0
    #allocation3 [shape = 'u8[1024]{0}', space=vmem, size = 0x400, scoped, tag = 'output window, operand 0, single buffered']
    #allocation4 [shape = 's32[1]{0}', space=sflag, size = 0x4, scoped, tag = 'scoped memory for vit_forward.23']
    %8 = vsyncpa [#allocation4], 0
    // Predicated region
    $region2: #{vit_forward.23} parent=1 // pred_check
      _
    $region3: #{vit_forward.23} parent=1 // pred_check_branch
      %10 = sbr.rel (0) target = $region5
    $region4: #{vit_forward.23} parent=1 // pred_region
      _
    $region5: #{vit_forward.23} parent=1 // pred_fallthru
      _
    // Predicated region
    $region6: #{vit_forward.23} parent=1 // pred_check
      _
    $region7: #{vit_forward.23} parent=1 // pred_check_branch
      %12 = sbr.rel (0) target = $region9
    $region8: #{vit_forward.23} parent=1 // pred_region
      _
    $region9: #{vit_forward.23} parent=1 // pred_fallthru
      _
    // Predicated region
    $region10: #{vit_forward.23} parent=1 // pred_check
      _
    $region11: #{vit_forward.23} parent=1 // pred_check_branch
      %14 = sbr.rel (0) target = $region13
    $region12: #{vit_forward.23} parent=1 // pred_region
      _
    $region13: #{vit_forward.23} parent=1 // pred_fallthru
      _
    %p16 = scmp.eq.s32.totalorder 0, 0
    // Predicated region
    $region14: #{vit_forward.23} parent=1 // pred_check
      %p17 = pneg %p16
    $region15: #{vit_forward.23} parent=1 // pred_check_branch
      %19 = sbr.rel (%p17) target = $region17
    $region16: #{vit_forward.23} parent=1 // pred_region
      %20 = vst [vmem:[#allocation2] sm:$0x3] 0.0
    $region17: #{vit_forward.23} parent=1 // pred_fallthru
      _
    %v21 = vld [vmem:[#allocation2] sm:$0x3]
    %v22 = vld [vmem:[%s0] sm:$0x1]
    %v23 = vld [vmem:[%s1] sm:$0xf]
    %v24 = vld [vmem:[%s1 + $0x4] sm:$0xf]
    %v25 = vld [vmem:[%s1 + $0x8] sm:$0xf]
    %v26 = vld [vmem:[%s1 + $0xc] sm:$0xf]
    %v31 = vunpack.c.l.b16 %v23
    %v32 = vunpack.c.l.b16 %v24
    %v33 = vunpack.c.l.b16 %v25
    %v34 = vunpack.c.l.b16 %v26
    %v35 = vpack.c.b16 %v32, %v31
    %v36 = vpack.c.b16 %v34, %v33
    %vm39 = vcmask 261120
    %v41 = vsel %vm39, %v22, 0
    %43 = vmatprep.subr.bf16.mxu0 0
    %44 = vmatpush1.bf16.msra.mxu0 %v35
    %45 = vmatprep.subr.bf16.mxu0 0
    %46 = vmatpush1.bf16.msra.mxu0 %v36
    %47 = vmatprep.subr.bf16.mxu0 0
    %48 = vmatpush1.bf16.msra.mxu0 0
    %49 = vmatprep.subr.bf16.mxu0 0
    %50 = vmatpush1.bf16.msra.mxu0 0
    %51 = vmatprep.subr.bf16.mxu0 0
    %52 = vmatpush1.bf16.msra.mxu0 0
    %53 = vmatprep.subr.bf16.mxu0 0
    %54 = vmatpush1.bf16.msra.mxu0 0
    %55 = vmatprep.subr.bf16.mxu0 0
    %56 = vmatpush1.bf16.msra.mxu0 0
    %57 = vmatprep.subr.bf16.mxu0 0
    %58 = vmatpush1.bf16.msra.mxu0 0
    %59 = vmatprep.subr.bf16.mxu0 0
    %60 = vmatpush1.bf16.msra.mxu0 0
    %61 = vmatprep.subr.bf16.mxu0 0
    %62 = vmatpush1.bf16.msra.mxu0 0
    %63 = vmatprep.subr.bf16.mxu0 0
    %64 = vmatpush1.bf16.msra.mxu0 0
    %65 = vmatprep.subr.bf16.mxu0 0
    %66 = vmatpush1.bf16.msra.mxu0 0
    %67 = vmatprep.subr.bf16.mxu0 0
    %68 = vmatpush1.bf16.msra.mxu0 0
    %69 = vmatprep.subr.bf16.mxu0 0
    %70 = vmatpush1.bf16.msra.mxu0 0
    %71 = vmatprep.subr.bf16.mxu0 0
    %72 = vmatpush1.bf16.msra.mxu0 0
    %73 = vmatprep.subr.bf16.mxu0 0
    %74 = vmatpush1.bf16.msra.mxu0 0
    %75 = vmatprep.mubr.bf16.mxu0 0
    %76 = vmatmul.mubr.bf16.gmra.mrb[0].mxu0 %v41
    %v77 = vpop.f32.mrb[0].mxu0
    %v78 = vadd.f32 0.0, %v77
    %v79 = vpop.f32.mrb[0].mxu0
    %v80 = vpop.f32.mrb[0].mxu0
    %v81 = vpop.f32.mrb[0].mxu0
    %82 = vdwg.mxu0
    %v83 = vadd.f32 %v21, %v78
    %84 = vst [vmem:[#allocation2] sm:$0x3] %v83
    // Predicated region
    $region18: #{vit_forward.23} parent=1 // pred_check
      %p85 = pneg %p16
    $region19: #{vit_forward.23} parent=1 // pred_check_branch
      %87 = sbr.rel (%p85) target = $region21
    $region20: #{vit_forward.23} parent=1 // pred_region
      %v88 = vld [vmem:[#allocation2] sm:$0x3]
      %v89 = vld [vmem:[%s2] sm:$0x1]
      %v91 = vlaneseq
      %v92 = vshrl.u32 %v91, 7
      %v93 = vsub.s32 0, %v92
      %v94 = vrot.slane %v89, %v93
      %v96 = vadd.f32 %v88, %v94
      %97 = vst [vmem:[#allocation3] sm:$0x3] %v96
    $region21: #{vit_forward.23} parent=1 // pred_fallthru
      _
    // Predicated region
    $region22: #{vit_forward.23} parent=1 // pred_check
      _
    $region23: #{vit_forward.23} parent=1 // pred_check_branch
      %99 = sbr.rel (0) target = $region25
    $region24: #{vit_forward.23} parent=1 // pred_region
      %s101 = ssub.s32 32, 32
      %102 = vsyncadd [#allocation4], %s101
      %s104 = sshll.u32 [#allocation3], 4
      %s105 = int_to_ptr.vmem [resolvable:$true] %s104
      %107 = dma.vmem_to_hbm [thread:$0]  %s105, 32, %s3, [#allocation4]
    $region25: #{vit_forward.23} parent=1 // pred_fallthru
      _
    // Predicated region
    $region26: #{vit_forward.23} parent=1 // pred_check
      _
    $region27: #{vit_forward.23} parent=1 // pred_check_branch
      %109 = sbr.rel (0) target = $region29
    $region28: #{vit_forward.23} parent=1 // pred_region
      %110 = dma.done [#allocation4], 32
    $region29: #{vit_forward.23} parent=1 // pred_fallthru
      _
    %111 = vsyncpa [#allocation4], 1

// kernel: vit_forward.17
$region0: #{vit_forward.17}
  #allocation0 [shape = 'u32[]', space=smem, size = 0x4, offset = 0x4, fixed_abs, tag = 'smem constant byte address 0x4 - core index']
  #allocation1 [shape = 'u32[144,128]{1,0:T(1,128)}', space=vmem, size = 0x12000, scoped, tag = 'internal scratch']
  #allocation2 [shape = 'f32[10,32]{1,0:T(8,128)}', space=vmem, size = 0x2000, scoped, tag = 'scratch operand']
  %s0 = inlined_call_operand.vmem [shape: bf16[10,64], index: 0, kind: input, shape index: {}]
  %s1 = inlined_call_operand.vmem [shape: bf16[64,32], index: 1, kind: input, shape index: {}]
  %s2 = inlined_call_operand.vmem [shape: f32[1,32], index: 2, kind: input, shape index: {}]
  %s3 = inlined_call_operand.vmem [shape: bf16[10,32], index: 3, kind: input, shape index: {}]
  %s4 = inlined_call_operand.vmem [shape: f32[1,32], index: 4, kind: input, shape index: {}]
  %s5 = inlined_call_operand.vmem [shape: f32[1,32], index: 5, kind: input, shape index: {}]
  %s6 = inlined_call_operand.vmem [shape: bf16[10,32], index: 6, kind: output, shape index: {}]
  %s7 = sld [smem:[#allocation0]]
  $region42: #{vit_forward.17} parent=0
    _
  %s9 = ssub.s32 1, %s7
  %s10 = scalar_select 0, %s9, %s7
  // Predicated region
  $region2: #{vit_forward.17} parent=0 // pred_check
    _
  $region3: #{vit_forward.17} parent=0 // pred_check_branch
    %12 = sbr.rel (0) target = $region5
  $region4: #{vit_forward.17} parent=0 // pred_region
    _
  $region5: #{vit_forward.17} parent=0 // pred_fallthru
    _
  // Predicated region
  $region6: #{vit_forward.17} parent=0 // pred_check
    _
  $region7: #{vit_forward.17} parent=0 // pred_check_branch
    %14 = sbr.rel (0) target = $region9
  $region8: #{vit_forward.17} parent=0 // pred_region
    _
  $region9: #{vit_forward.17} parent=0 // pred_fallthru
    _
  // Predicated region
  $region10: #{vit_forward.17} parent=0 // pred_check
    _
  $region11: #{vit_forward.17} parent=0 // pred_check_branch
    %16 = sbr.rel (0) target = $region13
  $region12: #{vit_forward.17} parent=0 // pred_region
    _
  $region13: #{vit_forward.17} parent=0 // pred_fallthru
    _
  // Predicated region
  $region14: #{vit_forward.17} parent=0 // pred_check
    _
  $region15: #{vit_forward.17} parent=0 // pred_check_branch
    %18 = sbr.rel (0) target = $region17
  $region16: #{vit_forward.17} parent=0 // pred_region
    _
  $region17: #{vit_forward.17} parent=0 // pred_fallthru
    _
  // Predicated region
  $region18: #{vit_forward.17} parent=0 // pred_check
    _
  $region19: #{vit_forward.17} parent=0 // pred_check_branch
    %20 = sbr.rel (0) target = $region21
  $region20: #{vit_forward.17} parent=0 // pred_region
    _
  $region21: #{vit_forward.17} parent=0 // pred_fallthru
    _
  // Predicated region
  $region22: #{vit_forward.17} parent=0 // pred_check
    _
  $region23: #{vit_forward.17} parent=0 // pred_check_branch
    %22 = sbr.rel (0) target = $region25
  $region24: #{vit_forward.17} parent=0 // pred_region
    _
  $region25: #{vit_forward.17} parent=0 // pred_fallthru
    _
  %p24 = scmp.eq.s32.totalorder 0, 0
  // Predicated region
  $region26: #{vit_forward.17} parent=0 // pred_check
    %p25 = pneg %p24
  $region27: #{vit_forward.17} parent=0 // pred_check_branch
    %27 = sbr.rel (%p25) target = $region29
  $region28: #{vit_forward.17} parent=0 // pred_region
    %vm28 = vcmask 261120
    %29 = vst.msk [vmem:[#allocation2] sm:$0xff] %vm28, 0.0
    %vm30 = vcmask 254976
    %31 = vst.msk [vmem:[#allocation2 + $0x8] sm:$0x3] %vm30, 0.0
  $region29: #{vit_forward.17} parent=0 // pred_fallthru
    _
  %v32 = vld [vmem:[#allocation2] sm:$0xff]
  %v33 = vld [vmem:[#allocation2 + $0x8] sm:$0x3]
  %v34 = vld [vmem:[%s0] sm:$0xf]
  %v35 = vld [vmem:[%s0 + $0x4] sm:$0x1]
  %v36 = vld [vmem:[%s1] sm:$0xf]
  %v37 = vld [vmem:[%s1 + $0x4] sm:$0xf]
  %v38 = vld [vmem:[%s1 + $0x8] sm:$0xf]
  %v39 = vld [vmem:[%s1 + $0xc] sm:$0xf]
  %v40 = vld [vmem:[%s1 + $0x10] sm:$0xf]
  %v41 = vld [vmem:[%s1 + $0x14] sm:$0xf]
  %v42 = vld [vmem:[%s1 + $0x18] sm:$0xf]
  %v43 = vld [vmem:[%s1 + $0x1c] sm:$0xf]
  %v46 = vunpack.c.l.b16 %v34
  %v47 = vunpack.c.l.b16 %v35
  %v48 = vpack.c.b16 %v47, %v46
  %v57 = vunpack.c.l.b16 %v36
  %v58 = vunpack.c.l.b16 %v37
  %v59 = vunpack.c.l.b16 %v38
  %v60 = vunpack.c.l.b16 %v39
  %v61 = vunpack.c.l.b16 %v40
  %v62 = vunpack.c.l.b16 %v41
  %v63 = vunpack.c.l.b16 %v42
  %v64 = vunpack.c.l.b16 %v43
  %v65 = vpack.c.b16 %v58, %v57
  %v66 = vpack.c.b16 %v60, %v59
  %v67 = vpack.c.b16 %v62, %v61
  %v68 = vpack.c.b16 %v64, %v63
  %vm73 = vcmask 523264
  %v75 = vsel %vm73, %v48, 0
  %77 = vmatprep.subr.bf16.mxu0 0
  %78 = vmatpush1.bf16.msra.mxu0 %v65
  %79 = vmatprep.subr.bf16.mxu0 0
  %80 = vmatpush1.bf16.msra.mxu0 %v66
  %81 = vmatprep.subr.bf16.mxu0 0
  %82 = vmatpush1.bf16.msra.mxu0 %v67
  %83 = vmatprep.subr.bf16.mxu0 0
  %84 = vmatpush1.bf16.msra.mxu0 %v68
  %85 = vmatprep.subr.bf16.mxu0 0
  %86 = vmatpush1.bf16.msra.mxu0 0
  %87 = vmatprep.subr.bf16.mxu0 0
  %88 = vmatpush1.bf16.msra.mxu0 0
  %89 = vmatprep.subr.bf16.mxu0 0
  %90 = vmatpush1.bf16.msra.mxu0 0
  %91 = vmatprep.subr.bf16.mxu0 0
  %92 = vmatpush1.bf16.msra.mxu0 0
  %93 = vmatprep.subr.bf16.mxu0 0
  %94 = vmatpush1.bf16.msra.mxu0 0
  %95 = vmatprep.subr.bf16.mxu0 0
  %96 = vmatpush1.bf16.msra.mxu0 0
  %97 = vmatprep.subr.bf16.mxu0 0
  %98 = vmatpush1.bf16.msra.mxu0 0
  %99 = vmatprep.subr.bf16.mxu0 0
  %100 = vmatpush1.bf16.msra.mxu0 0
  %101 = vmatprep.subr.bf16.mxu0 0
  %102 = vmatpush1.bf16.msra.mxu0 0
  %103 = vmatprep.subr.bf16.mxu0 0
  %104 = vmatpush1.bf16.msra.mxu0 0
  %105 = vmatprep.subr.bf16.mxu0 0
  %106 = vmatpush1.bf16.msra.mxu0 0
  %107 = vmatprep.subr.bf16.mxu0 0
  %108 = vmatpush1.bf16.msra.mxu0 0
  %109 = vmatprep.mubr.bf16.mxu0 0
  %110 = vmatmul.mubr.bf16.gmra.mrb[0].mxu0 %v75
  %v111 = vpop.f32.mrb[0].mxu0
  %v112 = vadd.f32 0.0, %v111
  %v113 = vpop.f32.mrb[0].mxu0
  %v114 = vpop.f32.mrb[0].mxu0
  %v115 = vadd.f32 0.0, %v114
  %v116 = vpop.f32.mrb[0].mxu0
  %117 = vdwg.mxu0
  %v118 = vadd.f32 %v32, %v112
  %v119 = vadd.f32 %v33, %v115
  %vm120 = vcmask 261120
  %121 = vst.msk [vmem:[#allocation2] sm:$0xff] %vm120, %v118
  %vm122 = vcmask 254976
  %123 = vst.msk [vmem:[#allocation2 + $0x8] sm:$0x3] %vm122, %v119
  // Predicated region
  $region30: #{vit_forward.17} parent=0 // pred_check
    %p124 = pneg %p24
  $region31: #{vit_forward.17} parent=0 // pred_check_branch
    %126 = sbr.rel (%p124) target = $region33
  $region32: #{vit_forward.17} parent=0 // pred_region
    %v127 = vld [vmem:[#allocation2] sm:$0xff]
    %v128 = vld [vmem:[#allocation2 + $0x8] sm:$0x3]
    %v129 = vld [vmem:[%s2] sm:$0x1]
    %v131 = vlaneseq
    %v132 = vshrl.u32 %v131, 7
    %v133 = vsub.s32 0, %v132
    %v134 = vrot.slane %v129, %v133
    %v136 = vadd.f32 %v127, %v134
    %v137 = vadd.f32 %v128, %v134
    %v138 = vld [vmem:[%s3] sm:$0xf]
    %v139 = vld [vmem:[%s3 + $0x4] sm:$0x1]
    %v140 = vunpack.c.l.bf16 %v138
    %v141 = vunpack.c.l.bf16 %v139
    %v142 = vadd.f32 %v136, %v140
    %v143 = vadd.f32 %v137, %v141
    %v144 = vsel %vm120, %v142, 0.0
    %145 = vadd.xlane.f32.xlu0 %v144
    %v146 = vpop.xlane.xlu0 %145
    %v147 = vsel %vm122, %v143, 0.0
    %148 = vadd.xlane.f32.xlu0 %v147
    %v149 = vpop.xlane.xlu0 %148
    %v150 = vrcp.pop 32.0
    %v151 = vmul.f32 %v146, %v150
    %v152 = vmul.f32 %v149, %v150
    %v153 = vsub.f32 %v142, %v151
    %v154 = vsub.f32 %v143, %v152
    %v155 = vmul.f32 %v153, %v153
    %v156 = vmul.f32 %v154, %v154
    %v157 = vsel %vm120, %v155, 0.0
    %158 = vadd.xlane.f32.xlu0 %v157
    %v159 = vpop.xlane.xlu0 %158
    %v160 = vsel %vm122, %v156, 0.0
    %161 = vadd.xlane.f32.xlu0 %v160
    %v162 = vpop.xlane.xlu0 %161
    %v163 = vmul.f32 %v159, %v150
    %v164 = vmul.f32 %v162, %v150
    %v165 = vadd.f32 %v163, 1e-05
    %v166 = vadd.f32 %v164, 1e-05
    %v167 = vrsqrt.pop %v165
    %v168 = vrsqrt.pop %v166
    %v169 = vmul.f32 %v153, %v167
    %v170 = vmul.f32 %v154, %v168
    %v171 = vld [vmem:[%s4] sm:$0x1]
    %v173 = vlaneseq
    %v174 = vshrl.u32 %v173, 7
    %v175 = vsub.s32 0, %v174
    %v176 = vrot.slane %v171, %v175
    %v178 = vmul.f32 %v169, %v176
    %v179 = vmul.f32 %v170, %v176
    %v180 = vld [vmem:[%s5] sm:$0x1]
    %v182 = vlaneseq
    %v183 = vshrl.u32 %v182, 7
    %v184 = vsub.s32 0, %v183
    %v185 = vrot.slane %v180, %v184
    %v187 = vadd.f32 %v178, %v185
    %v188 = vadd.f32 %v179, %v185
    %v189 = vpack.c.bf16 %v188, %v187
    %v191 = vunpack.c.l.b16 %v189
    %v192 = vunpack.c.h.b16 %v189
    %v193 = vpack.c.b16 %v191, %v191
    %v194 = vpack.c.b16 %v192, %v192
    %vm197 = vcmask 257024
    %198 = vst.msk [vmem:[%s6] sm:$0xf] %vm197, %v193
    %vm199 = vcmask 253952
    %200 = vst.msk [vmem:[%s6 + $0x4] sm:$0x1] %vm199, %v194
  $region33: #{vit_forward.17} parent=0 // pred_fallthru
    _
  // Predicated region
  $region34: #{vit_forward.17} parent=0 // pred_check
    _
  $region35: #{vit_forward.17} parent=0 // pred_check_branch
    %202 = sbr.rel (0) target = $region37
  $region36: #{vit_forward.17} parent=0 // pred_region
    _
  $region37: #{vit_forward.17} parent=0 // pred_fallthru
    _
  // Predicated region
  $region38: #{vit_forward.17} parent=0 // pred_check
    _
  $region39: #{vit_forward.17} parent=0 // pred_check_branch
    %204 = sbr.rel (0) target = $region41
  $region40: #{vit_forward.17} parent=0 // pred_region
    _
  $region41: #{vit_forward.17} parent=0 // pred_fallthru
    _

// kernel: vit_forward.14
$region0: #{vit_forward.14}
  #allocation0 [shape = 'u32[]', space=smem, size = 0x4, offset = 0x4, fixed_abs, tag = 'smem constant byte address 0x4 - core index']
  #allocation1 [shape = 'u32[144,128]{1,0:T(1,128)}', space=vmem, size = 0x12000, scoped, tag = 'internal scratch']
  %s0 = inlined_call_operand.vmem [shape: bf16[5,2,96], index: 0, kind: input, shape index: {}]
  %s1 = inlined_call_operand.vmem [shape: bf16[5,2,32], index: 1, kind: output, shape index: {}]
  %s2 = sld [smem:[#allocation0]]
  $region14: #{vit_forward.14} parent=0
    _
  %s4 = ssub.s32 1, %s2
  %s5 = scalar_select 0, %s4, %s2
  // Predicated region
  $region2: #{vit_forward.14} parent=0 // pred_check
    _
  $region3: #{vit_forward.14} parent=0 // pred_check_branch
    %7 = sbr.rel (0) target = $region5
  $region4: #{vit_forward.14} parent=0 // pred_region
    _
  $region5: #{vit_forward.14} parent=0 // pred_fallthru
    _
  %v9 = vld [vmem:[%s0] sm:$0x1]
  %v10 = vld [vmem:[%s0 + $0x1] sm:$0x1]
  %v11 = vld [vmem:[%s0 + $0x2] sm:$0x1]
  %v12 = vld [vmem:[%s0 + $0x3] sm:$0x1]
  %v13 = vld [vmem:[%s0 + $0x4] sm:$0x1]
  %v16 = vunpack.c.l.s4 1966171168
  %v17 = vunpack.c.0.s8 %v16
  %v18 = vlaneseq
  %v19 = vshrl.u32 %v18, 7
  %v20 = vsub.s32 %v17, %v19
  %v21 = vrot.slane %v9, %v20
  %v23 = vunpack.c.l.s4 1966171168
  %v24 = vunpack.c.0.s8 %v23
  %v25 = vlaneseq
  %v26 = vshrl.u32 %v25, 7
  %v27 = vsub.s32 %v24, %v26
  %v28 = vrot.slane %v21, %v27
  %29 = vrot.lane.b32.xlu0 %v28, 96
  %v30 = vpop.permute.xlu0 %29
  %vm31 = vcmask 64512
  %v33 = vsel %vm31, %v9, 0
  %v36 = vsel %vm31, %v30, 0
  %38 = vmatprep.subr.bf16.mxu0 0
  %39 = vmatpush1.bf16.xpose.msra.mxu0 %v36
  %40 = vmatprep.subr.bf16.mxu0 0
  %41 = vmatpush1.bf16.xpose.msra.mxu0 0
  %42 = vmatprep.subr.bf16.mxu0 0
  %43 = vmatpush1.bf16.xpose.msra.mxu0 0
  %44 = vmatprep.subr.bf16.mxu0 0
  %45 = vmatpush1.bf16.xpose.msra.mxu0 0
  %46 = vmatprep.subr.bf16.mxu0 0
  %47 = vmatpush1.bf16.xpose.msra.mxu0 0
  %48 = vmatprep.subr.bf16.mxu0 0
  %49 = vmatpush1.bf16.xpose.msra.mxu0 0
  %50 = vmatprep.subr.bf16.mxu0 0
  %51 = vmatpush1.bf16.xpose.msra.mxu0 0
  %52 = vmatprep.subr.bf16.mxu0 0
  %53 = vmatpush1.bf16.xpose.msra.mxu0 0
  %54 = vmatprep.subr.bf16.mxu0 0
  %55 = vmatpush1.bf16.xpose.msra.mxu0 0
  %56 = vmatprep.subr.bf16.mxu0 0
  %57 = vmatpush1.bf16.xpose.msra.mxu0 0
  %58 = vmatprep.subr.bf16.mxu0 0
  %59 = vmatpush1.bf16.xpose.msra.mxu0 0
  %60 = vmatprep.subr.bf16.mxu0 0
  %61 = vmatpush1.bf16.xpose.msra.mxu0 0
  %62 = vmatprep.subr.bf16.mxu0 0
  %63 = vmatpush1.bf16.xpose.msra.mxu0 0
  %64 = vmatprep.subr.bf16.mxu0 0
  %65 = vmatpush1.bf16.xpose.msra.mxu0 0
  %66 = vmatprep.subr.bf16.mxu0 0
  %67 = vmatpush1.bf16.xpose.msra.mxu0 0
  %68 = vmatprep.subr.bf16.mxu0 0
  %69 = vmatpush1.bf16.xpose.msra.mxu0 0
  %70 = vmatprep.mubr.bf16.mxu0 0
  %71 = vmatmul.mubr.bf16.gmra.mrb[0].mxu0 %v33
  %v72 = vpop.f32.mrb[0].mxu0
  %v73 = vadd.f32 0.0, %v72
  %v74 = vpop.f32.mrb[0].mxu0
  %v75 = vpop.f32.mrb[0].mxu0
  %v76 = vpop.f32.mrb[0].mxu0
  %77 = vdwg.mxu0
  %v80 = vunpack.c.l.s4 1966171168
  %v81 = vunpack.c.0.s8 %v80
  %v82 = vlaneseq
  %v83 = vshrl.u32 %v82, 7
  %v84 = vsub.s32 %v81, %v83
  %v85 = vrot.slane %v10, %v84
  %v87 = vunpack.c.l.s4 1966171168
  %v88 = vunpack.c.0.s8 %v87
  %v89 = vlaneseq
  %v90 = vshrl.u32 %v89, 7
  %v91 = vsub.s32 %v88, %v90
  %v92 = vrot.slane %v85, %v91
  %93 = vrot.lane.b32.xlu0 %v92, 96
  %v94 = vpop.permute.xlu0 %93
  %v96 = vsel %vm31, %v10, 0
  %v99 = vsel %vm31, %v94, 0
  %101 = vmatprep.subr.bf16.mxu0 0
  %102 = vmatpush1.bf16.xpose.msra.mxu0 %v99
  %103 = vmatprep.subr.bf16.mxu0 0
  %104 = vmatpush1.bf16.xpose.msra.mxu0 0
  %105 = vmatprep.subr.bf16.mxu0 0
  %106 = vmatpush1.bf16.xpose.msra.mxu0 0
  %107 = vmatprep.subr.bf16.mxu0 0
  %108 = vmatpush1.bf16.xpose.msra.mxu0 0
  %109 = vmatprep.subr.bf16.mxu0 0
  %110 = vmatpush1.bf16.xpose.msra.mxu0 0
  %111 = vmatprep.subr.bf16.mxu0 0
  %112 = vmatpush1.bf16.xpose.msra.mxu0 0
  %113 = vmatprep.subr.bf16.mxu0 0
  %114 = vmatpush1.bf16.xpose.msra.mxu0 0
  %115 = vmatprep.subr.bf16.mxu0 0
  %116 = vmatpush1.bf16.xpose.msra.mxu0 0
  %117 = vmatprep.subr.bf16.mxu0 0
  %118 = vmatpush1.bf16.xpose.msra.mxu0 0
  %119 = vmatprep.subr.bf16.mxu0 0
  %120 = vmatpush1.bf16.xpose.msra.mxu0 0
  %121 = vmatprep.subr.bf16.mxu0 0
  %122 = vmatpush1.bf16.xpose.msra.mxu0 0
  %123 = vmatprep.subr.bf16.mxu0 0
  %124 = vmatpush1.bf16.xpose.msra.mxu0 0
  %125 = vmatprep.subr.bf16.mxu0 0
  %126 = vmatpush1.bf16.xpose.msra.mxu0 0
  %127 = vmatprep.subr.bf16.mxu0 0
  %128 = vmatpush1.bf16.xpose.msra.mxu0 0
  %129 = vmatprep.subr.bf16.mxu0 0
  %130 = vmatpush1.bf16.xpose.msra.mxu0 0
  %131 = vmatprep.subr.bf16.mxu0 0
  %132 = vmatpush1.bf16.xpose.msra.mxu0 0
  %133 = vmatprep.mubr.bf16.mxu0 0
  %134 = vmatmul.mubr.bf16.gmra.mrb[0].mxu0 %v96
  %v135 = vpop.f32.mrb[0].mxu0
  %v136 = vadd.f32 0.0, %v135
  %v137 = vpop.f32.mrb[0].mxu0
  %v138 = vpop.f32.mrb[0].mxu0
  %v139 = vpop.f32.mrb[0].mxu0
  %140 = vdwg.mxu0
  %v143 = vunpack.c.l.s4 1966171168
  %v144 = vunpack.c.0.s8 %v143
  %v145 = vlaneseq
  %v146 = vshrl.u32 %v145, 7
  %v147 = vsub.s32 %v144, %v146
  %v148 = vrot.slane %v11, %v147
  %v150 = vunpack.c.l.s4 1966171168
  %v151 = vunpack.c.0.s8 %v150
  %v152 = vlaneseq
  %v153 = vshrl.u32 %v152, 7
  %v154 = vsub.s32 %v151, %v153
  %v155 = vrot.slane %v148, %v154
  %156 = vrot.lane.b32.xlu0 %v155, 96
  %v157 = vpop.permute.xlu0 %156
  %v159 = vsel %vm31, %v11, 0
  %v162 = vsel %vm31, %v157, 0
  %164 = vmatprep.subr.bf16.mxu0 0
  %165 = vmatpush1.bf16.xpose.msra.mxu0 %v162
  %166 = vmatprep.subr.bf16.mxu0 0
  %167 = vmatpush1.bf16.xpose.msra.mxu0 0
  %168 = vmatprep.subr.bf16.mxu0 0
  %169 = vmatpush1.bf16.xpose.msra.mxu0 0
  %170 = vmatprep.subr.bf16.mxu0 0
  %171 = vmatpush1.bf16.xpose.msra.mxu0 0
  %172 = vmatprep.subr.bf16.mxu0 0
  %173 = vmatpush1.bf16.xpose.msra.mxu0 0
  %174 = vmatprep.subr.bf16.mxu0 0
  %175 = vmatpush1.bf16.xpose.msra.mxu0 0
  %176 = vmatprep.subr.bf16.mxu0 0
  %177 = vmatpush1.bf16.xpose.msra.mxu0 0
  %178 = vmatprep.subr.bf16.mxu0 0
  %179 = vmatpush1.bf16.xpose.msra.mxu0 0
  %180 = vmatprep.subr.bf16.mxu0 0
  %181 = vmatpush1.bf16.xpose.msra.mxu0 0
  %182 = vmatprep.subr.bf16.mxu0 0
  %183 = vmatpush1.bf16.xpose.msra.mxu0 0
  %184 = vmatprep.subr.bf16.mxu0 0
  %185 = vmatpush1.bf16.xpose.msra.mxu0 0
  %186 = vmatprep.subr.bf16.mxu0 0
  %187 = vmatpush1.bf16.xpose.msra.mxu0 0
  %188 = vmatprep.subr.bf16.mxu0 0
  %189 = vmatpush1.bf16.xpose.msra.mxu0 0
  %190 = vmatprep.subr.bf16.mxu0 0
  %191 = vmatpush1.bf16.xpose.msra.mxu0 0
  %192 = vmatprep.subr.bf16.mxu0 0
  %193 = vmatpush1.bf16.xpose.msra.mxu0 0
  %194 = vmatprep.subr.bf16.mxu0 0
  %195 = vmatpush1.bf16.xpose.msra.mxu0 0
  %196 = vmatprep.mubr.bf16.mxu0 0
  %197 = vmatmul.mubr.bf16.gmra.mrb[0].mxu0 %v159
  %v198 = vpop.f32.mrb[0].mxu0
  %v199 = vadd.f32 0.0, %v198
  %v200 = vpop.f32.mrb[0].mxu0
  %v201 = vpop.f32.mrb[0].mxu0
  %v202 = vpop.f32.mrb[0].mxu0
  %203 = vdwg.mxu0
  %v206 = vunpack.c.l.s4 1966171168
  %v207 = vunpack.c.0.s8 %v206
  %v208 = vlaneseq
  %v209 = vshrl.u32 %v208, 7
  %v210 = vsub.s32 %v207, %v209
  %v211 = vrot.slane %v12, %v210
  %v213 = vunpack.c.l.s4 1966171168
  %v214 = vunpack.c.0.s8 %v213
  %v215 = vlaneseq
  %v216 = vshrl.u32 %v215, 7
  %v217 = vsub.s32 %v214, %v216
  %v218 = vrot.slane %v211, %v217
  %219 = vrot.lane.b32.xlu0 %v218, 96
  %v220 = vpop.permute.xlu0 %219
  %v222 = vsel %vm31, %v12, 0
  %v225 = vsel %vm31, %v220, 0
  %227 = vmatprep.subr.bf16.mxu0 0
  %228 = vmatpush1.bf16.xpose.msra.mxu0 %v225
  %229 = vmatprep.subr.bf16.mxu0 0
  %230 = vmatpush1.bf16.xpose.msra.mxu0 0
  %231 = vmatprep.subr.bf16.mxu0 0
  %232 = vmatpush1.bf16.xpose.msra.mxu0 0
  %233 = vmatprep.subr.bf16.mxu0 0
  %234 = vmatpush1.bf16.xpose.msra.mxu0 0
  %235 = vmatprep.subr.bf16.mxu0 0
  %236 = vmatpush1.bf16.xpose.msra.mxu0 0
  %237 = vmatprep.subr.bf16.mxu0 0
  %238 = vmatpush1.bf16.xpose.msra.mxu0 0
  %239 = vmatprep.subr.bf16.mxu0 0
  %240 = vmatpush1.bf16.xpose.msra.mxu0 0
  %241 = vmatprep.subr.bf16.mxu0 0
  %242 = vmatpush1.bf16.xpose.msra.mxu0 0
  %243 = vmatprep.subr.bf16.mxu0 0
  %244 = vmatpush1.bf16.xpose.msra.mxu0 0
  %245 = vmatprep.subr.bf16.mxu0 0
  %246 = vmatpush1.bf16.xpose.msra.mxu0 0
  %247 = vmatprep.subr.bf16.mxu0 0
  %248 = vmatpush1.bf16.xpose.msra.mxu0 0
  %249 = vmatprep.subr.bf16.mxu0 0
  %250 = vmatpush1.bf16.xpose.msra.mxu0 0
  %251 = vmatprep.subr.bf16.mxu0 0
  %252 = vmatpush1.bf16.xpose.msra.mxu0 0
  %253 = vmatprep.subr.bf16.mxu0 0
  %254 = vmatpush1.bf16.xpose.msra.mxu0 0
  %255 = vmatprep.subr.bf16.mxu0 0
  %256 = vmatpush1.bf16.xpose.msra.mxu0 0
  %257 = vmatprep.subr.bf16.mxu0 0
  %258 = vmatpush1.bf16.xpose.msra.mxu0 0
  %259 = vmatprep.mubr.bf16.mxu0 0
  %260 = vmatmul.mubr.bf16.gmra.mrb[0].mxu0 %v222
  %v261 = vpop.f32.mrb[0].mxu0
  %v262 = vadd.f32 0.0, %v261
  %v263 = vpop.f32.mrb[0].mxu0
  %v264 = vpop.f32.mrb[0].mxu0
  %v265 = vpop.f32.mrb[0].mxu0
  %266 = vdwg.mxu0
  %v269 = vunpack.c.l.s4 1966171168
  %v270 = vunpack.c.0.s8 %v269
  %v271 = vlaneseq
  %v272 = vshrl.u32 %v271, 7
  %v273 = vsub.s32 %v270, %v272
  %v274 = vrot.slane %v13, %v273
  %v276 = vunpack.c.l.s4 1966171168
  %v277 = vunpack.c.0.s8 %v276
  %v278 = vlaneseq
  %v279 = vshrl.u32 %v278, 7
  %v280 = vsub.s32 %v277, %v279
  %v281 = vrot.slane %v274, %v280
  %282 = vrot.lane.b32.xlu0 %v281, 96
  %v283 = vpop.permute.xlu0 %282
  %v285 = vsel %vm31, %v13, 0
  %v288 = vsel %vm31, %v283, 0
  %290 = vmatprep.subr.bf16.mxu0 0
  %291 = vmatpush1.bf16.xpose.msra.mxu0 %v288
  %292 = vmatprep.subr.bf16.mxu0 0
  %293 = vmatpush1.bf16.xpose.msra.mxu0 0
  %294 = vmatprep.subr.bf16.mxu0 0
  %295 = vmatpush1.bf16.xpose.msra.mxu0 0
  %296 = vmatprep.subr.bf16.mxu0 0
  %297 = vmatpush1.bf16.xpose.msra.mxu0 0
  %298 = vmatprep.subr.bf16.mxu0 0
  %299 = vmatpush1.bf16.xpose.msra.mxu0 0
  %300 = vmatprep.subr.bf16.mxu0 0
  %301 = vmatpush1.bf16.xpose.msra.mxu0 0
  %302 = vmatprep.subr.bf16.mxu0 0
  %303 = vmatpush1.bf16.xpose.msra.mxu0 0
  %304 = vmatprep.subr.bf16.mxu0 0
  %305 = vmatpush1.bf16.xpose.msra.mxu0 0
  %306 = vmatprep.subr.bf16.mxu0 0
  %307 = vmatpush1.bf16.xpose.msra.mxu0 0
  %308 = vmatprep.subr.bf16.mxu0 0
  %309 = vmatpush1.bf16.xpose.msra.mxu0 0
  %310 = vmatprep.subr.bf16.mxu0 0
  %311 = vmatpush1.bf16.xpose.msra.mxu0 0
  %312 = vmatprep.subr.bf16.mxu0 0
  %313 = vmatpush1.bf16.xpose.msra.mxu0 0
  %314 = vmatprep.subr.bf16.mxu0 0
  %315 = vmatpush1.bf16.xpose.msra.mxu0 0
  %316 = vmatprep.subr.bf16.mxu0 0
  %317 = vmatpush1.bf16.xpose.msra.mxu0 0
  %318 = vmatprep.subr.bf16.mxu0 0
  %319 = vmatpush1.bf16.xpose.msra.mxu0 0
  %320 = vmatprep.subr.bf16.mxu0 0
  %321 = vmatpush1.bf16.xpose.msra.mxu0 0
  %322 = vmatprep.mubr.bf16.mxu0 0
  %323 = vmatmul.mubr.bf16.gmra.mrb[0].mxu0 %v285
  %v324 = vpop.f32.mrb[0].mxu0
  %v325 = vadd.f32 0.0, %v324
  %v326 = vpop.f32.mrb[0].mxu0
  %v327 = vpop.f32.mrb[0].mxu0
  %v328 = vpop.f32.mrb[0].mxu0
  %329 = vdwg.mxu0
  %vm330 = vcmask 9216
  %v331 = vsel %vm330, %v73, -inf
  %332 = vmax.xlane.f32.xlu0 %v331
  %v333 = vpop.xlane.xlu0 %332
  %v334 = vsel %vm330, %v136, -inf
  %335 = vmax.xlane.f32.xlu0 %v334
  %v336 = vpop.xlane.xlu0 %335
  %v337 = vsel %vm330, %v199, -inf
  %338 = vmax.xlane.f32.xlu0 %v337
  %v339 = vpop.xlane.xlu0 %338
  %v340 = vsel %vm330, %v262, -inf
  %341 = vmax.xlane.f32.xlu0 %v340
  %v342 = vpop.xlane.xlu0 %341
  %v343 = vsel %vm330, %v325, -inf
  %344 = vmax.xlane.f32.xlu0 %v343
  %v345 = vpop.xlane.xlu0 %344
  %v346 = vsub.f32 %v73, %v333
  %v347 = vsub.f32 %v136, %v336
  %v348 = vsub.f32 %v199, %v339
  %v349 = vsub.f32 %v262, %v342
  %v350 = vsub.f32 %v325, %v345
  %v351 = vmul.f32 %v346, 1.442695
  %v352 = vpow.pop %v351
  %v353 = vmul.f32 %v347, 1.442695
  %v354 = vpow.pop %v353
  %v355 = vmul.f32 %v348, 1.442695
  %v356 = vpow.pop %v355
  %v357 = vmul.f32 %v349, 1.442695
  %v358 = vpow.pop %v357
  %v359 = vmul.f32 %v350, 1.442695
  %v360 = vpow.pop %v359
  %v361 = vsel %vm330, %v352, 0.0
  %362 = vadd.xlane.f32.xlu0 %v361
  %v363 = vpop.xlane.xlu0 %362
  %v364 = vsel %vm330, %v354, 0.0
  %365 = vadd.xlane.f32.xlu0 %v364
  %v366 = vpop.xlane.xlu0 %365
  %v367 = vsel %vm330, %v356, 0.0
  %368 = vadd.xlane.f32.xlu0 %v367
  %v369 = vpop.xlane.xlu0 %368
  %v370 = vsel %vm330, %v358, 0.0
  %371 = vadd.xlane.f32.xlu0 %v370
  %v372 = vpop.xlane.xlu0 %371
  %v373 = vsel %vm330, %v360, 0.0
  %374 = vadd.xlane.f32.xlu0 %v373
  %v375 = vpop.xlane.xlu0 %374
  %v376 = vrcp.pop %v363
  %v377 = vrcp.pop %v366
  %v378 = vrcp.pop %v369
  %v379 = vrcp.pop %v372
  %v380 = vrcp.pop %v375
  %v381 = vmul.f32 %v352, %v376
  %v382 = vmul.f32 %v354, %v377
  %v383 = vmul.f32 %v356, %v378
  %v384 = vmul.f32 %v358, %v379
  %v385 = vmul.f32 %v360, %v380
  %v386 = vpack.c.bf16 %v381, %v381
  %v387 = vpack.c.bf16 %v382, %v382
  %v388 = vpack.c.bf16 %v383, %v383
  %v389 = vpack.c.bf16 %v384, %v384
  %v390 = vpack.c.bf16 %v385, %v385
  %391 = vrot.lane.b32.xlu0 %v28, 64
  %v392 = vpop.permute.xlu0 %391
  %vm393 = vcmask 15360
  %v395 = vsel %vm393, %v386, 0
  %vm397 = vcmask 1040384
  %v399 = vsel %vm397, %v392, 0
  %401 = vmatprep.subr.bf16.mxu0 0
  %402 = vmatpush1.bf16.msra.mxu0 %v399
  %403 = vmatprep.subr.bf16.mxu0 0
  %404 = vmatpush1.bf16.msra.mxu0 0
  %405 = vmatprep.subr.bf16.mxu0 0
  %406 = vmatpush1.bf16.msra.mxu0 0
  %407 = vmatprep.subr.bf16.mxu0 0
  %408 = vmatpush1.bf16.msra.mxu0 0
  %409 = vmatprep.subr.bf16.mxu0 0
  %410 = vmatpush1.bf16.msra.mxu0 0
  %411 = vmatprep.subr.bf16.mxu0 0
  %412 = vmatpush1.bf16.msra.mxu0 0
  %413 = vmatprep.subr.bf16.mxu0 0
  %414 = vmatpush1.bf16.msra.mxu0 0
  %415 = vmatprep.subr.bf16.mxu0 0
  %416 = vmatpush1.bf16.msra.mxu0 0
  %417 = vmatprep.subr.bf16.mxu0 0
  %418 = vmatpush1.bf16.msra.mxu0 0
  %419 = vmatprep.subr.bf16.mxu0 0
  %420 = vmatpush1.bf16.msra.mxu0 0
  %421 = vmatprep.subr.bf16.mxu0 0
  %422 = vmatpush1.bf16.msra.mxu0 0
  %423 = vmatprep.subr.bf16.mxu0 0
  %424 = vmatpush1.bf16.msra.mxu0 0
  %425 = vmatprep.subr.bf16.mxu0 0
  %426 = vmatpush1.bf16.msra.mxu0 0
  %427 = vmatprep.subr.bf16.mxu0 0
  %428 = vmatpush1.bf16.msra.mxu0 0
  %429 = vmatprep.subr.bf16.mxu0 0
  %430 = vmatpush1.bf16.msra.mxu0 0
  %431 = vmatprep.subr.bf16.mxu0 0
  %432 = vmatpush1.bf16.msra.mxu0 0
  %433 = vmatprep.mubr.bf16.mxu0 0
  %434 = vmatmul.mubr.bf16.gmra.mrb[0].mxu0 %v395
  %v435 = vpop.f32.mrb[0].mxu0
  %v436 = vadd.f32 0.0, %v435
  %v437 = vpop.f32.mrb[0].mxu0
  %v438 = vpop.f32.mrb[0].mxu0
  %v439 = vpop.f32.mrb[0].mxu0
  %440 = vdwg.mxu0
  %441 = vrot.lane.b32.xlu0 %v92, 64
  %v442 = vpop.permute.xlu0 %441
  %v444 = vsel %vm393, %v387, 0
  %v447 = vsel %vm397, %v442, 0
  %449 = vmatprep.subr.bf16.mxu0 0
  %450 = vmatpush1.bf16.msra.mxu0 %v447
  %451 = vmatprep.subr.bf16.mxu0 0
  %452 = vmatpush1.bf16.msra.mxu0 0
  %453 = vmatprep.subr.bf16.mxu0 0
  %454 = vmatpush1.bf16.msra.mxu0 0
  %455 = vmatprep.subr.bf16.mxu0 0
  %456 = vmatpush1.bf16.msra.mxu0 0
  %457 = vmatprep.subr.bf16.mxu0 0
  %458 = vmatpush1.bf16.msra.mxu0 0
  %459 = vmatprep.subr.bf16.mxu0 0
  %460 = vmatpush1.bf16.msra.mxu0 0
  %461 = vmatprep.subr.bf16.mxu0 0
  %462 = vmatpush1.bf16.msra.mxu0 0
  %463 = vmatprep.subr.bf16.mxu0 0
  %464 = vmatpush1.bf16.msra.mxu0 0
  %465 = vmatprep.subr.bf16.mxu0 0
  %466 = vmatpush1.bf16.msra.mxu0 0
  %467 = vmatprep.subr.bf16.mxu0 0
  %468 = vmatpush1.bf16.msra.mxu0 0
  %469 = vmatprep.subr.bf16.mxu0 0
  %470 = vmatpush1.bf16.msra.mxu0 0
  %471 = vmatprep.subr.bf16.mxu0 0
  %472 = vmatpush1.bf16.msra.mxu0 0
  %473 = vmatprep.subr.bf16.mxu0 0
  %474 = vmatpush1.bf16.msra.mxu0 0
  %475 = vmatprep.subr.bf16.mxu0 0
  %476 = vmatpush1.bf16.msra.mxu0 0
  %477 = vmatprep.subr.bf16.mxu0 0
  %478 = vmatpush1.bf16.msra.mxu0 0
  %479 = vmatprep.subr.bf16.mxu0 0
  %480 = vmatpush1.bf16.msra.mxu0 0
  %481 = vmatprep.mubr.bf16.mxu0 0
  %482 = vmatmul.mubr.bf16.gmra.mrb[0].mxu0 %v444
  %v483 = vpop.f32.mrb[0].mxu0
  %v484 = vadd.f32 0.0, %v483
  %v485 = vpop.f32.mrb[0].mxu0
  %v486 = vpop.f32.mrb[0].mxu0
  %v487 = vpop.f32.mrb[0].mxu0
  %488 = vdwg.mxu0
  %489 = vrot.lane.b32.xlu0 %v155, 64
  %v490 = vpop.permute.xlu0 %489
  %v492 = vsel %vm393, %v388, 0
  %v495 = vsel %vm397, %v490, 0
  %497 = vmatprep.subr.bf16.mxu0 0
  %498 = vmatpush1.bf16.msra.mxu0 %v495
  %499 = vmatprep.subr.bf16.mxu0 0
  %500 = vmatpush1.bf16.msra.mxu0 0
  %501 = vmatprep.subr.bf16.mxu0 0
  %502 = vmatpush1.bf16.msra.mxu0 0
  %503 = vmatprep.subr.bf16.mxu0 0
  %504 = vmatpush1.bf16.msra.mxu0 0
  %505 = vmatprep.subr.bf16.mxu0 0
  %506 = vmatpush1.bf16.msra.mxu0 0
  %507 = vmatprep.subr.bf16.mxu0 0
  %508 = vmatpush1.bf16.msra.mxu0 0
  %509 = vmatprep.subr.bf16.mxu0 0
  %510 = vmatpush1.bf16.msra.mxu0 0
  %511 = vmatprep.subr.bf16.mxu0 0
  %512 = vmatpush1.bf16.msra.mxu0 0
  %513 = vmatprep.subr.bf16.mxu0 0
  %514 = vmatpush1.bf16.msra.mxu0 0
  %515 = vmatprep.subr.bf16.mxu0 0
  %516 = vmatpush1.bf16.msra.mxu0 0
  %517 = vmatprep.subr.bf16.mxu0 0
  %518 = vmatpush1.bf16.msra.mxu0 0
  %519 = vmatprep.subr.bf16.mxu0 0
  %520 = vmatpush1.bf16.msra.mxu0 0
  %521 = vmatprep.subr.bf16.mxu0 0
  %522 = vmatpush1.bf16.msra.mxu0 0
  %523 = vmatprep.subr.bf16.mxu0 0
  %524 = vmatpush1.bf16.msra.mxu0 0
  %525 = vmatprep.subr.bf16.mxu0 0
  %526 = vmatpush1.bf16.msra.mxu0 0
  %527 = vmatprep.subr.bf16.mxu0 0
  %528 = vmatpush1.bf16.msra.mxu0 0
  %529 = vmatprep.mubr.bf16.mxu0 0
  %530 = vmatmul.mubr.bf16.gmra.mrb[0].mxu0 %v492
  %v531 = vpop.f32.mrb[0].mxu0
  %v532 = vadd.f32 0.0, %v531
  %v533 = vpop.f32.mrb[0].mxu0
  %v534 = vpop.f32.mrb[0].mxu0
  %v535 = vpop.f32.mrb[0].mxu0
  %536 = vdwg.mxu0
  %537 = vrot.lane.b32.xlu0 %v218, 64
  %v538 = vpop.permute.xlu0 %537
  %v540 = vsel %vm393, %v389, 0
  %v543 = vsel %vm397, %v538, 0
  %545 = vmatprep.subr.bf16.mxu0 0
  %546 = vmatpush1.bf16.msra.mxu0 %v543
  %547 = vmatprep.subr.bf16.mxu0 0
  %548 = vmatpush1.bf16.msra.mxu0 0
  %549 = vmatprep.subr.bf16.mxu0 0
  %550 = vmatpush1.bf16.msra.mxu0 0
  %551 = vmatprep.subr.bf16.mxu0 0
  %552 = vmatpush1.bf16.msra.mxu0 0
  %553 = vmatprep.subr.bf16.mxu0 0
  %554 = vmatpush1.bf16.msra.mxu0 0
  %555 = vmatprep.subr.bf16.mxu0 0
  %556 = vmatpush1.bf16.msra.mxu0 0
  %557 = vmatprep.subr.bf16.mxu0 0
  %558 = vmatpush1.bf16.msra.mxu0 0
  %559 = vmatprep.subr.bf16.mxu0 0
  %560 = vmatpush1.bf16.msra.mxu0 0
  %561 = vmatprep.subr.bf16.mxu0 0
  %562 = vmatpush1.bf16.msra.mxu0 0
  %563 = vmatprep.subr.bf16.mxu0 0
  %564 = vmatpush1.bf16.msra.mxu0 0
  %565 = vmatprep.subr.bf16.mxu0 0
  %566 = vmatpush1.bf16.msra.mxu0 0
  %567 = vmatprep.subr.bf16.mxu0 0
  %568 = vmatpush1.bf16.msra.mxu0 0
  %569 = vmatprep.subr.bf16.mxu0 0
  %570 = vmatpush1.bf16.msra.mxu0 0
  %571 = vmatprep.subr.bf16.mxu0 0
  %572 = vmatpush1.bf16.msra.mxu0 0
  %573 = vmatprep.subr.bf16.mxu0 0
  %574 = vmatpush1.bf16.msra.mxu0 0
  %575 = vmatprep.subr.bf16.mxu0 0
  %576 = vmatpush1.bf16.msra.mxu0 0
  %577 = vmatprep.mubr.bf16.mxu0 0
  %578 = vmatmul.mubr.bf16.gmra.mrb[0].mxu0 %v540
  %v579 = vpop.f32.mrb[0].mxu0
  %v580 = vadd.f32 0.0, %v579
  %v581 = vpop.f32.mrb[0].mxu0
  %v582 = vpop.f32.mrb[0].mxu0
  %v583 = vpop.f32.mrb[0].mxu0
  %584 = vdwg.mxu0
  %585 = vrot.lane.b32.xlu0 %v281, 64
  %v586 = vpop.permute.xlu0 %585
  %v588 = vsel %vm393, %v390, 0
  %v591 = vsel %vm397, %v586, 0
  %593 = vmatprep.subr.bf16.mxu0 0
  %594 = vmatpush1.bf16.msra.mxu0 %v591
  %595 = vmatprep.subr.bf16.mxu0 0
  %596 = vmatpush1.bf16.msra.mxu0 0
  %597 = vmatprep.subr.bf16.mxu0 0
  %598 = vmatpush1.bf16.msra.mxu0 0
  %599 = vmatprep.subr.bf16.mxu0 0
  %600 = vmatpush1.bf16.msra.mxu0 0
  %601 = vmatprep.subr.bf16.mxu0 0
  %602 = vmatpush1.bf16.msra.mxu0 0
  %603 = vmatprep.subr.bf16.mxu0 0
  %604 = vmatpush1.bf16.msra.mxu0 0
  %605 = vmatprep.subr.bf16.mxu0 0
  %606 = vmatpush1.bf16.msra.mxu0 0
  %607 = vmatprep.subr.bf16.mxu0 0
  %608 = vmatpush1.bf16.msra.mxu0 0
  %609 = vmatprep.subr.bf16.mxu0 0
  %610 = vmatpush1.bf16.msra.mxu0 0
  %611 = vmatprep.subr.bf16.mxu0 0
  %612 = vmatpush1.bf16.msra.mxu0 0
  %613 = vmatprep.subr.bf16.mxu0 0
  %614 = vmatpush1.bf16.msra.mxu0 0
  %615 = vmatprep.subr.bf16.mxu0 0
  %616 = vmatpush1.bf16.msra.mxu0 0
  %617 = vmatprep.subr.bf16.mxu0 0
  %618 = vmatpush1.bf16.msra.mxu0 0
  %619 = vmatprep.subr.bf16.mxu0 0
  %620 = vmatpush1.bf16.msra.mxu0 0
  %621 = vmatprep.subr.bf16.mxu0 0
  %622 = vmatpush1.bf16.msra.mxu0 0
  %623 = vmatprep.subr.bf16.mxu0 0
  %624 = vmatpush1.bf16.msra.mxu0 0
  %625 = vmatprep.mubr.bf16.mxu0 0
  %626 = vmatmul.mubr.bf16.gmra.mrb[0].mxu0 %v588
  %v627 = vpop.f32.mrb[0].mxu0
  %v628 = vadd.f32 0.0, %v627
  %v629 = vpop.f32.mrb[0].mxu0
  %v630 = vpop.f32.mrb[0].mxu0
  %v631 = vpop.f32.mrb[0].mxu0
  %632 = vdwg.mxu0
  %v633 = vpack.c.bf16 %v436, %v436
  %v634 = vpack.c.bf16 %v484, %v484
  %v635 = vpack.c.bf16 %v532, %v532
  %v636 = vpack.c.bf16 %v580, %v580
  %v637 = vpack.c.bf16 %v628, %v628
  %vm638 = vcmask 57344
  %639 = vst.msk [vmem:[%s1] sm:$0x1] %vm638, %v633
  %640 = vst.msk [vmem:[%s1 + $0x1] sm:$0x1] %vm638, %v634
  %641 = vst.msk [vmem:[%s1 + $0x2] sm:$0x1] %vm638, %v635
  %642 = vst.msk [vmem:[%s1 + $0x3] sm:$0x1] %vm638, %v636
  %643 = vst.msk [vmem:[%s1 + $0x4] sm:$0x1] %vm638, %v637
  %v644 = vld [vmem:[%s0] sm:$0x1]
  %v645 = vld [vmem:[%s0 + $0x1] sm:$0x1]
  %v646 = vld [vmem:[%s0 + $0x2] sm:$0x1]
  %v647 = vld [vmem:[%s0 + $0x3] sm:$0x1]
  %v648 = vld [vmem:[%s0 + $0x4] sm:$0x1]
  %v651 = vunpack.c.l.s4 1966171168
  %v652 = vunpack.c.0.s8 %v651
  %v653 = vlaneseq
  %v654 = vshrl.u32 %v653, 7
  %v655 = vsub.s32 %v652, %v654
  %v656 = vrot.slane %v644, %v655
  %v658 = vunpack.c.l.s4 1966171168
  %v659 = vunpack.c.0.s8 %v658
  %v660 = vlaneseq
  %v661 = vshrl.u32 %v660, 7
  %v662 = vsub.s32 %v659, %v661
  %v663 = vrot.slane %v656, %v662
  %664 = vrot.lane.b32.xlu0 %v663, 120
  %v665 = vpop.permute.xlu0 %664
  %666 = vrot.lane.b32.xlu0 %v663, 88
  %v667 = vpop.permute.xlu0 %666
  %v669 = vsel %vm31, %v665, 0
  %v672 = vsel %vm31, %v667, 0
  %674 = vmatprep.subr.bf16.mxu0 0
  %675 = vmatpush1.bf16.xpose.msra.mxu0 %v672
  %676 = vmatprep.subr.bf16.mxu0 0
  %677 = vmatpush1.bf16.xpose.msra.mxu0 0
  %678 = vmatprep.subr.bf16.mxu0 0
  %679 = vmatpush1.bf16.xpose.msra.mxu0 0
  %680 = vmatprep.subr.bf16.mxu0 0
  %681 = vmatpush1.bf16.xpose.msra.mxu0 0
  %682 = vmatprep.subr.bf16.mxu0 0
  %683 = vmatpush1.bf16.xpose.msra.mxu0 0
  %684 = vmatprep.subr.bf16.mxu0 0
  %685 = vmatpush1.bf16.xpose.msra.mxu0 0
  %686 = vmatprep.subr.bf16.mxu0 0
  %687 = vmatpush1.bf16.xpose.msra.mxu0 0
  %688 = vmatprep.subr.bf16.mxu0 0
  %689 = vmatpush1.bf16.xpose.msra.mxu0 0
  %690 = vmatprep.subr.bf16.mxu0 0
  %691 = vmatpush1.bf16.xpose.msra.mxu0 0
  %692 = vmatprep.subr.bf16.mxu0 0
  %693 = vmatpush1.bf16.xpose.msra.mxu0 0
  %694 = vmatprep.subr.bf16.mxu0 0
  %695 = vmatpush1.bf16.xpose.msra.mxu0 0
  %696 = vmatprep.subr.bf16.mxu0 0
  %697 = vmatpush1.bf16.xpose.msra.mxu0 0
  %698 = vmatprep.subr.bf16.mxu0 0
  %699 = vmatpush1.bf16.xpose.msra.mxu0 0
  %700 = vmatprep.subr.bf16.mxu0 0
  %701 = vmatpush1.bf16.xpose.msra.mxu0 0
  %702 = vmatprep.subr.bf16.mxu0 0
  %703 = vmatpush1.bf16.xpose.msra.mxu0 0
  %704 = vmatprep.subr.bf16.mxu0 0
  %705 = vmatpush1.bf16.xpose.msra.mxu0 0
  %706 = vmatprep.mubr.bf16.mxu0 0
  %707 = vmatmul.mubr.bf16.gmra.mrb[0].mxu0 %v669
  %v708 = vpop.f32.mrb[0].mxu0
  %v709 = vadd.f32 0.0, %v708
  %v710 = vpop.f32.mrb[0].mxu0
  %v711 = vpop.f32.mrb[0].mxu0
  %v712 = vpop.f32.mrb[0].mxu0
  %713 = vdwg.mxu0
  %v716 = vunpack.c.l.s4 1966171168
  %v717 = vunpack.c.0.s8 %v716
  %v718 = vlaneseq
  %v719 = vshrl.u32 %v718, 7
  %v720 = vsub.s32 %v717, %v719
  %v721 = vrot.slane %v645, %v720
  %v723 = vunpack.c.l.s4 1966171168
  %v724 = vunpack.c.0.s8 %v723
  %v725 = vlaneseq
  %v726 = vshrl.u32 %v725, 7
  %v727 = vsub.s32 %v724, %v726
  %v728 = vrot.slane %v721, %v727
  %729 = vrot.lane.b32.xlu0 %v728, 120
  %v730 = vpop.permute.xlu0 %729
  %731 = vrot.lane.b32.xlu0 %v728, 88
  %v732 = vpop.permute.xlu0 %731
  %v734 = vsel %vm31, %v730, 0
  %v737 = vsel %vm31, %v732, 0
  %739 = vmatprep.subr.bf16.mxu0 0
  %740 = vmatpush1.bf16.xpose.msra.mxu0 %v737
  %741 = vmatprep.subr.bf16.mxu0 0
  %742 = vmatpush1.bf16.xpose.msra.mxu0 0
  %743 = vmatprep.subr.bf16.mxu0 0
  %744 = vmatpush1.bf16.xpose.msra.mxu0 0
  %745 = vmatprep.subr.bf16.mxu0 0
  %746 = vmatpush1.bf16.xpose.msra.mxu0 0
  %747 = vmatprep.subr.bf16.mxu0 0
  %748 = vmatpush1.bf16.xpose.msra.mxu0 0
  %749 = vmatprep.subr.bf16.mxu0 0
  %750 = vmatpush1.bf16.xpose.msra.mxu0 0
  %751 = vmatprep.subr.bf16.mxu0 0
  %752 = vmatpush1.bf16.xpose.msra.mxu0 0
  %753 = vmatprep.subr.bf16.mxu0 0
  %754 = vmatpush1.bf16.xpose.msra.mxu0 0
  %755 = vmatprep.subr.bf16.mxu0 0
  %756 = vmatpush1.bf16.xpose.msra.mxu0 0
  %757 = vmatprep.subr.bf16.mxu0 0
  %758 = vmatpush1.bf16.xpose.msra.mxu0 0
  %759 = vmatprep.subr.bf16.mxu0 0
  %760 = vmatpush1.bf16.xpose.msra.mxu0 0
  %761 = vmatprep.subr.bf16.mxu0 0
  %762 = vmatpush1.bf16.xpose.msra.mxu0 0
  %763 = vmatprep.subr.bf16.mxu0 0
  %764 = vmatpush1.bf16.xpose.msra.mxu0 0
  %765 = vmatprep.subr.bf16.mxu0 0
  %766 = vmatpush1.bf16.xpose.msra.mxu0 0
  %767 = vmatprep.subr.bf16.mxu0 0
  %768 = vmatpush1.bf16.xpose.msra.mxu0 0
  %769 = vmatprep.subr.bf16.mxu0 0
  %770 = vmatpush1.bf16.xpose.msra.mxu0 0
  %771 = vmatprep.mubr.bf16.mxu0 0
  %772 = vmatmul.mubr.bf16.gmra.mrb[0].mxu0 %v734
  %v773 = vpop.f32.mrb[0].mxu0
  %v774 = vadd.f32 0.0, %v773
  %v775 = vpop.f32.mrb[0].mxu0
  %v776 = vpop.f32.mrb[0].mxu0
  %v777 = vpop.f32.mrb[0].mxu0
  %778 = vdwg.mxu0
  %v781 = vunpack.c.l.s4 1966171168
  %v782 = vunpack.c.0.s8 %v781
  %v783 = vlaneseq
  %v784 = vshrl.u32 %v783, 7
  %v785 = vsub.s32 %v782, %v784
  %v786 = vrot.slane %v646, %v785
  %v788 = vunpack.c.l.s4 1966171168
  %v789 = vunpack.c.0.s8 %v788
  %v790 = vlaneseq
  %v791 = vshrl.u32 %v790, 7
  %v792 = vsub.s32 %v789, %v791
  %v793 = vrot.slane %v786, %v792
  %794 = vrot.lane.b32.xlu0 %v793, 120
  %v795 = vpop.permute.xlu0 %794
  %796 = vrot.lane.b32.xlu0 %v793, 88
  %v797 = vpop.permute.xlu0 %796
  %v799 = vsel %vm31, %v795, 0
  %v802 = vsel %vm31, %v797, 0
  %804 = vmatprep.subr.bf16.mxu0 0
  %805 = vmatpush1.bf16.xpose.msra.mxu0 %v802
  %806 = vmatprep.subr.bf16.mxu0 0
  %807 = vmatpush1.bf16.xpose.msra.mxu0 0
  %808 = vmatprep.subr.bf16.mxu0 0
  %809 = vmatpush1.bf16.xpose.msra.mxu0 0
  %810 = vmatprep.subr.bf16.mxu0 0
  %811 = vmatpush1.bf16.xpose.msra.mxu0 0
  %812 = vmatprep.subr.bf16.mxu0 0
  %813 = vmatpush1.bf16.xpose.msra.mxu0 0
  %814 = vmatprep.subr.bf16.mxu0 0
  %815 = vmatpush1.bf16.xpose.msra.mxu0 0
  %816 = vmatprep.subr.bf16.mxu0 0
  %817 = vmatpush1.bf16.xpose.msra.mxu0 0
  %818 = vmatprep.subr.bf16.mxu0 0
  %819 = vmatpush1.bf16.xpose.msra.mxu0 0
  %820 = vmatprep.subr.bf16.mxu0 0
  %821 = vmatpush1.bf16.xpose.msra.mxu0 0
  %822 = vmatprep.subr.bf16.mxu0 0
  %823 = vmatpush1.bf16.xpose.msra.mxu0 0
  %824 = vmatprep.subr.bf16.mxu0 0
  %825 = vmatpush1.bf16.xpose.msra.mxu0 0
  %826 = vmatprep.subr.bf16.mxu0 0
  %827 = vmatpush1.bf16.xpose.msra.mxu0 0
  %828 = vmatprep.subr.bf16.mxu0 0
  %829 = vmatpush1.bf16.xpose.msra.mxu0 0
  %830 = vmatprep.subr.bf16.mxu0 0
  %831 = vmatpush1.bf16.xpose.msra.mxu0 0
  %832 = vmatprep.subr.bf16.mxu0 0
  %833 = vmatpush1.bf16.xpose.msra.mxu0 0
  %834 = vmatprep.subr.bf16.mxu0 0
  %835 = vmatpush1.bf16.xpose.msra.mxu0 0
  %836 = vmatprep.mubr.bf16.mxu0 0
  %837 = vmatmul.mubr.bf16.gmra.mrb[0].mxu0 %v799
  %v838 = vpop.f32.mrb[0].mxu0
  %v839 = vadd.f32 0.0, %v838
  %v840 = vpop.f32.mrb[0].mxu0
  %v841 = vpop.f32.mrb[0].mxu0
  %v842 = vpop.f32.mrb[0].mxu0
  %843 = vdwg.mxu0
  %v846 = vunpack.c.l.s4 1966171168
  %v847 = vunpack.c.0.s8 %v846
  %v848 = vlaneseq
  %v849 = vshrl.u32 %v848, 7
  %v850 = vsub.s32 %v847, %v849
  %v851 = vrot.slane %v647, %v850
  %v853 = vunpack.c.l.s4 1966171168
  %v854 = vunpack.c.0.s8 %v853
  %v855 = vlaneseq
  %v856 = vshrl.u32 %v855, 7
  %v857 = vsub.s32 %v854, %v856
  %v858 = vrot.slane %v851, %v857
  %859 = vrot.lane.b32.xlu0 %v858, 120
  %v860 = vpop.permute.xlu0 %859
  %861 = vrot.lane.b32.xlu0 %v858, 88
  %v862 = vpop.permute.xlu0 %861
  %v864 = vsel %vm31, %v860, 0
  %v867 = vsel %vm31, %v862, 0
  %869 = vmatprep.subr.bf16.mxu0 0
  %870 = vmatpush1.bf16.xpose.msra.mxu0 %v867
  %871 = vmatprep.subr.bf16.mxu0 0
  %872 = vmatpush1.bf16.xpose.msra.mxu0 0
  %873 = vmatprep.subr.bf16.mxu0 0
  %874 = vmatpush1.bf16.xpose.msra.mxu0 0
  %875 = vmatprep.subr.bf16.mxu0 0
  %876 = vmatpush1.bf16.xpose.msra.mxu0 0
  %877 = vmatprep.subr.bf16.mxu0 0
  %878 = vmatpush1.bf16.xpose.msra.mxu0 0
  %879 = vmatprep.subr.bf16.mxu0 0
  %880 = vmatpush1.bf16.xpose.msra.mxu0 0
  %881 = vmatprep.subr.bf16.mxu0 0
  %882 = vmatpush1.bf16.xpose.msra.mxu0 0
  %883 = vmatprep.subr.bf16.mxu0 0
  %884 = vmatpush1.bf16.xpose.msra.mxu0 0
  %885 = vmatprep.subr.bf16.mxu0 0
  %886 = vmatpush1.bf16.xpose.msra.mxu0 0
  %887 = vmatprep.subr.bf16.mxu0 0
  %888 = vmatpush1.bf16.xpose.msra.mxu0 0
  %889 = vmatprep.subr.bf16.mxu0 0
  %890 = vmatpush1.bf16.xpose.msra.mxu0 0
  %891 = vmatprep.subr.bf16.mxu0 0
  %892 = vmatpush1.bf16.xpose.msra.mxu0 0
  %893 = vmatprep.subr.bf16.mxu0 0
  %894 = vmatpush1.bf16.xpose.msra.mxu0 0
  %895 = vmatprep.subr.bf16.mxu0 0
  %896 = vmatpush1.bf16.xpose.msra.mxu0 0
  %897 = vmatprep.subr.bf16.mxu0 0
  %898 = vmatpush1.bf16.xpose.msra.mxu0 0
  %899 = vmatprep.subr.bf16.mxu0 0
  %900 = vmatpush1.bf16.xpose.msra.mxu0 0
  %901 = vmatprep.mubr.bf16.mxu0 0
  %902 = vmatmul.mubr.bf16.gmra.mrb[0].mxu0 %v864
  %v903 = vpop.f32.mrb[0].mxu0
  %v904 = vadd.f32 0.0, %v903
  %v905 = vpop.f32.mrb[0].mxu0
  %v906 = vpop.f32.mrb[0].mxu0
  %v907 = vpop.f32.mrb[0].mxu0
  %908 = vdwg.mxu0
  %v911 = vunpack.c.l.s4 1966171168
  %v912 = vunpack.c.0.s8 %v911
  %v913 = vlaneseq
  %v914 = vshrl.u32 %v913, 7
  %v915 = vsub.s32 %v912, %v914
  %v916 = vrot.slane %v648, %v915
  %v918 = vunpack.c.l.s4 1966171168
  %v919 = vunpack.c.0.s8 %v918
  %v920 = vlaneseq
  %v921 = vshrl.u32 %v920, 7
  %v922 = vsub.s32 %v919, %v921
  %v923 = vrot.slane %v916, %v922
  %924 = vrot.lane.b32.xlu0 %v923, 120
  %v925 = vpop.permute.xlu0 %924
  %926 = vrot.lane.b32.xlu0 %v923, 88
  %v927 = vpop.permute.xlu0 %926
  %v929 = vsel %vm31, %v925, 0
  %v932 = vsel %vm31, %v927, 0
  %934 = vmatprep.subr.bf16.mxu0 0
  %935 = vmatpush1.bf16.xpose.msra.mxu0 %v932
  %936 = vmatprep.subr.bf16.mxu0 0
  %937 = vmatpush1.bf16.xpose.msra.mxu0 0
  %938 = vmatprep.subr.bf16.mxu0 0
  %939 = vmatpush1.bf16.xpose.msra.mxu0 0
  %940 = vmatprep.subr.bf16.mxu0 0
  %941 = vmatpush1.bf16.xpose.msra.mxu0 0
  %942 = vmatprep.subr.bf16.mxu0 0
  %943 = vmatpush1.bf16.xpose.msra.mxu0 0
  %944 = vmatprep.subr.bf16.mxu0 0
  %945 = vmatpush1.bf16.xpose.msra.mxu0 0
  %946 = vmatprep.subr.bf16.mxu0 0
  %947 = vmatpush1.bf16.xpose.msra.mxu0 0
  %948 = vmatprep.subr.bf16.mxu0 0
  %949 = vmatpush1.bf16.xpose.msra.mxu0 0
  %950 = vmatprep.subr.bf16.mxu0 0
  %951 = vmatpush1.bf16.xpose.msra.mxu0 0
  %952 = vmatprep.subr.bf16.mxu0 0
  %953 = vmatpush1.bf16.xpose.msra.mxu0 0
  %954 = vmatprep.subr.bf16.mxu0 0
  %955 = vmatpush1.bf16.xpose.msra.mxu0 0
  %956 = vmatprep.subr.bf16.mxu0 0
  %957 = vmatpush1.bf16.xpose.msra.mxu0 0
  %958 = vmatprep.subr.bf16.mxu0 0
  %959 = vmatpush1.bf16.xpose.msra.mxu0 0
  %960 = vmatprep.subr.bf16.mxu0 0
  %961 = vmatpush1.bf16.xpose.msra.mxu0 0
  %962 = vmatprep.subr.bf16.mxu0 0
  %963 = vmatpush1.bf16.xpose.msra.mxu0 0
  %964 = vmatprep.subr.bf16.mxu0 0
  %965 = vmatpush1.bf16.xpose.msra.mxu0 0
  %966 = vmatprep.mubr.bf16.mxu0 0
  %967 = vmatmul.mubr.bf16.gmra.mrb[0].mxu0 %v929
  %v968 = vpop.f32.mrb[0].mxu0
  %v969 = vadd.f32 0.0, %v968
  %v970 = vpop.f32.mrb[0].mxu0
  %v971 = vpop.f32.mrb[0].mxu0
  %v972 = vpop.f32.mrb[0].mxu0
  %973 = vdwg.mxu0
  %v974 = vsel %vm330, %v709, -inf
  %975 = vmax.xlane.f32.xlu0 %v974
  %v976 = vpop.xlane.xlu0 %975
  %v977 = vsel %vm330, %v774, -inf
  %978 = vmax.xlane.f32.xlu0 %v977
  %v979 = vpop.xlane.xlu0 %978
  %v980 = vsel %vm330, %v839, -inf
  %981 = vmax.xlane.f32.xlu0 %v980
  %v982 = vpop.xlane.xlu0 %981
  %v983 = vsel %vm330, %v904, -inf
  %984 = vmax.xlane.f32.xlu0 %v983
  %v985 = vpop.xlane.xlu0 %984
  %v986 = vsel %vm330, %v969, -inf
  %987 = vmax.xlane.f32.xlu0 %v986
  %v988 = vpop.xlane.xlu0 %987
  %v989 = vsub.f32 %v709, %v976
  %v990 = vsub.f32 %v774, %v979
  %v991 = vsub.f32 %v839, %v982
  %v992 = vsub.f32 %v904, %v985
  %v993 = vsub.f32 %v969, %v988
  %v994 = vmul.f32 %v989, 1.442695
  %v995 = vpow.pop %v994
  %v996 = vmul.f32 %v990, 1.442695
  %v997 = vpow.pop %v996
  %v998 = vmul.f32 %v991, 1.442695
  %v999 = vpow.pop %v998
  %v1000 = vmul.f32 %v992, 1.442695
  %v1001 = vpow.pop %v1000
  %v1002 = vmul.f32 %v993, 1.442695
  %v1003 = vpow.pop %v1002
  %v1004 = vsel %vm330, %v995, 0.0
  %1005 = vadd.xlane.f32.xlu0 %v1004
  %v1006 = vpop.xlane.xlu0 %1005
  %v1007 = vsel %vm330, %v997, 0.0
  %1008 = vadd.xlane.f32.xlu0 %v1007
  %v1009 = vpop.xlane.xlu0 %1008
  %v1010 = vsel %vm330, %v999, 0.0
  %1011 = vadd.xlane.f32.xlu0 %v1010
  %v1012 = vpop.xlane.xlu0 %1011
  %v1013 = vsel %vm330, %v1001, 0.0
  %1014 = vadd.xlane.f32.xlu0 %v1013
  %v1015 = vpop.xlane.xlu0 %1014
  %v1016 = vsel %vm330, %v1003, 0.0
  %1017 = vadd.xlane.f32.xlu0 %v1016
  %v1018 = vpop.xlane.xlu0 %1017
  %v1019 = vrcp.pop %v1006
  %v1020 = vrcp.pop %v1009
  %v1021 = vrcp.pop %v1012
  %v1022 = vrcp.pop %v1015
  %v1023 = vrcp.pop %v1018
  %v1024 = vmul.f32 %v995, %v1019
  %v1025 = vmul.f32 %v997, %v1020
  %v1026 = vmul.f32 %v999, %v1021
  %v1027 = vmul.f32 %v1001, %v1022
  %v1028 = vmul.f32 %v1003, %v1023
  %v1029 = vpack.c.bf16 %v1024, %v1024
  %v1030 = vpack.c.bf16 %v1025, %v1025
  %v1031 = vpack.c.bf16 %v1026, %v1026
  %v1032 = vpack.c.bf16 %v1027, %v1027
  %v1033 = vpack.c.bf16 %v1028, %v1028
  %1034 = vrot.lane.b32.xlu0 %v663, 56
  %v1035 = vpop.permute.xlu0 %1034
  %v1037 = vsel %vm393, %v1029, 0
  %v1040 = vsel %vm397, %v1035, 0
  %1042 = vmatprep.subr.bf16.mxu0 0
  %1043 = vmatpush1.bf16.msra.mxu0 %v1040
  %1044 = vmatprep.subr.bf16.mxu0 0
  %1045 = vmatpush1.bf16.msra.mxu0 0
  %1046 = vmatprep.subr.bf16.mxu0 0
  %1047 = vmatpush1.bf16.msra.mxu0 0
  %1048 = vmatprep.subr.bf16.mxu0 0
  %1049 = vmatpush1.bf16.msra.mxu0 0
  %1050 = vmatprep.subr.bf16.mxu0 0
  %1051 = vmatpush1.bf16.msra.mxu0 0
  %1052 = vmatprep.subr.bf16.mxu0 0
  %1053 = vmatpush1.bf16.msra.mxu0 0
  %1054 = vmatprep.subr.bf16.mxu0 0
  %1055 = vmatpush1.bf16.msra.mxu0 0
  %1056 = vmatprep.subr.bf16.mxu0 0
  %1057 = vmatpush1.bf16.msra.mxu0 0
  %1058 = vmatprep.subr.bf16.mxu0 0
  %1059 = vmatpush1.bf16.msra.mxu0 0
  %1060 = vmatprep.subr.bf16.mxu0 0
  %1061 = vmatpush1.bf16.msra.mxu0 0
  %1062 = vmatprep.subr.bf16.mxu0 0
  %1063 = vmatpush1.bf16.msra.mxu0 0
  %1064 = vmatprep.subr.bf16.mxu0 0
  %1065 = vmatpush1.bf16.msra.mxu0 0
  %1066 = vmatprep.subr.bf16.mxu0 0
  %1067 = vmatpush1.bf16.msra.mxu0 0
  %1068 = vmatprep.subr.bf16.mxu0 0
  %1069 = vmatpush1.bf16.msra.mxu0 0
  %1070 = vmatprep.subr.bf16.mxu0 0
  %1071 = vmatpush1.bf16.msra.mxu0 0
  %1072 = vmatprep.subr.bf16.mxu0 0
  %1073 = vmatpush1.bf16.msra.mxu0 0
  %1074 = vmatprep.mubr.bf16.mxu0 0
  %1075 = vmatmul.mubr.bf16.gmra.mrb[0].mxu0 %v1037
  %v1076 = vpop.f32.mrb[0].mxu0
  %v1077 = vadd.f32 0.0, %v1076
  %v1078 = vpop.f32.mrb[0].mxu0
  %v1079 = vpop.f32.mrb[0].mxu0
  %v1080 = vpop.f32.mrb[0].mxu0
  %1081 = vdwg.mxu0
  %1082 = vrot.lane.b32.xlu0 %v728, 56
  %v1083 = vpop.permute.xlu0 %1082
  %v1085 = vsel %vm393, %v1030, 0
  %v1088 = vsel %vm397, %v1083, 0
  %1090 = vmatprep.subr.bf16.mxu0 0
  %1091 = vmatpush1.bf16.msra.mxu0 %v1088
  %1092 = vmatprep.subr.bf16.mxu0 0
  %1093 = vmatpush1.bf16.msra.mxu0 0
  %1094 = vmatprep.subr.bf16.mxu0 0
  %1095 = vmatpush1.bf16.msra.mxu0 0
  %1096 = vmatprep.subr.bf16.mxu0 0
  %1097 = vmatpush1.bf16.msra.mxu0 0
  %1098 = vmatprep.subr.bf16.mxu0 0
  %1099 = vmatpush1.bf16.msra.mxu0 0
  %1100 = vmatprep.subr.bf16.mxu0 0
  %1101 = vmatpush1.bf16.msra.mxu0 0
  %1102 = vmatprep.subr.bf16.mxu0 0
  %1103 = vmatpush1.bf16.msra.mxu0 0
  %1104 = vmatprep.subr.bf16.mxu0 0
  %1105 = vmatpush1.bf16.msra.mxu0 0
  %1106 = vmatprep.subr.bf16.mxu0 0
  %1107 = vmatpush1.bf16.msra.mxu0 0
  %1108 = vmatprep.subr.bf16.mxu0 0
  %1109 = vmatpush1.bf16.msra.mxu0 0
  %1110 = vmatprep.subr.bf16.mxu0 0
  %1111 = vmatpush1.bf16.msra.mxu0 0
  %1112 = vmatprep.subr.bf16.mxu0 0
  %1113 = vmatpush1.bf16.msra.mxu0 0
  %1114 = vmatprep.subr.bf16.mxu0 0
  %1115 = vmatpush1.bf16.msra.mxu0 0
  %1116 = vmatprep.subr.bf16.mxu0 0
  %1117 = vmatpush1.bf16.msra.mxu0 0
  %1118 = vmatprep.subr.bf16.mxu0 0
  %1119 = vmatpush1.bf16.msra.mxu0 0
  %1120 = vmatprep.subr.bf16.mxu0 0
  %1121 = vmatpush1.bf16.msra.mxu0 0
  %1122 = vmatprep.mubr.bf16.mxu0 0
  %1123 = vmatmul.mubr.bf16.gmra.mrb[0].mxu0 %v1085
  %v1124 = vpop.f32.mrb[0].mxu0
  %v1125 = vadd.f32 0.0, %v1124
  %v1126 = vpop.f32.mrb[0].mxu0
  %v1127 = vpop.f32.mrb[0].mxu0
  %v1128 = vpop.f32.mrb[0].mxu0
  %1129 = vdwg.mxu0
  %1130 = vrot.lane.b32.xlu0 %v793, 56
  %v1131 = vpop.permute.xlu0 %1130
  %v1133 = vsel %vm393, %v1031, 0
  %v1136 = vsel %vm397, %v1131, 0
  %1138 = vmatprep.subr.bf16.mxu0 0
  %1139 = vmatpush1.bf16.msra.mxu0 %v1136
  %1140 = vmatprep.subr.bf16.mxu0 0
  %1141 = vmatpush1.bf16.msra.mxu0 0
  %1142 = vmatprep.subr.bf16.mxu0 0
  %1143 = vmatpush1.bf16.msra.mxu0 0
  %1144 = vmatprep.subr.bf16.mxu0 0
  %1145 = vmatpush1.bf16.msra.mxu0 0
  %1146 = vmatprep.subr.bf16.mxu0 0
  %1147 = vmatpush1.bf16.msra.mxu0 0
  %1148 = vmatprep.subr.bf16.mxu0 0
  %1149 = vmatpush1.bf16.msra.mxu0 0
  %1150 = vmatprep.subr.bf16.mxu0 0
  %1151 = vmatpush1.bf16.msra.mxu0 0
  %1152 = vmatprep.subr.bf16.mxu0 0
  %1153 = vmatpush1.bf16.msra.mxu0 0
  %1154 = vmatprep.subr.bf16.mxu0 0
  %1155 = vmatpush1.bf16.msra.mxu0 0
  %1156 = vmatprep.subr.bf16.mxu0 0
  %1157 = vmatpush1.bf16.msra.mxu0 0
  %1158 = vmatprep.subr.bf16.mxu0 0
  %1159 = vmatpush1.bf16.msra.mxu0 0
  %1160 = vmatprep.subr.bf16.mxu0 0
  %1161 = vmatpush1.bf16.msra.mxu0 0
  %1162 = vmatprep.subr.bf16.mxu0 0
  %1163 = vmatpush1.bf16.msra.mxu0 0
  %1164 = vmatprep.subr.bf16.mxu0 0
  %1165 = vmatpush1.bf16.msra.mxu0 0
  %1166 = vmatprep.subr.bf16.mxu0 0
  %1167 = vmatpush1.bf16.msra.mxu0 0
  %1168 = vmatprep.subr.bf16.mxu0 0
  %1169 = vmatpush1.bf16.msra.mxu0 0
  %1170 = vmatprep.mubr.bf16.mxu0 0
  %1171 = vmatmul.mubr.bf16.gmra.mrb[0].mxu0 %v1133
  %v1172 = vpop.f32.mrb[0].mxu0
  %v1173 = vadd.f32 0.0, %v1172
  %v1174 = vpop.f32.mrb[0].mxu0
  %v1175 = vpop.f32.mrb[0].mxu0
  %v1176 = vpop.f32.mrb[0].mxu0
  %1177 = vdwg.mxu0
  %1178 = vrot.lane.b32.xlu0 %v858, 56
  %v1179 = vpop.permute.xlu0 %1178
  %v1181 = vsel %vm393, %v1032, 0
  %v1184 = vsel %vm397, %v1179, 0
  %1186 = vmatprep.subr.bf16.mxu0 0
  %1187 = vmatpush1.bf16.msra.mxu0 %v1184
  %1188 = vmatprep.subr.bf16.mxu0 0
  %1189 = vmatpush1.bf16.msra.mxu0 0
  %1190 = vmatprep.subr.bf16.mxu0 0
  %1191 = vmatpush1.bf16.msra.mxu0 0
  %1192 = vmatprep.subr.bf16.mxu0 0
  %1193 = vmatpush1.bf16.msra.mxu0 0
  %1194 = vmatprep.subr.bf16.mxu0 0
  %1195 = vmatpush1.bf16.msra.mxu0 0
  %1196 = vmatprep.subr.bf16.mxu0 0
  %1197 = vmatpush1.bf16.msra.mxu0 0
  %1198 = vmatprep.subr.bf16.mxu0 0
  %1199 = vmatpush1.bf16.msra.mxu0 0
  %1200 = vmatprep.subr.bf16.mxu0 0
  %1201 = vmatpush1.bf16.msra.mxu0 0
  %1202 = vmatprep.subr.bf16.mxu0 0
  %1203 = vmatpush1.bf16.msra.mxu0 0
  %1204 = vmatprep.subr.bf16.mxu0 0
  %1205 = vmatpush1.bf16.msra.mxu0 0
  %1206 = vmatprep.subr.bf16.mxu0 0
  %1207 = vmatpush1.bf16.msra.mxu0 0
  %1208 = vmatprep.subr.bf16.mxu0 0
  %1209 = vmatpush1.bf16.msra.mxu0 0
  %1210 = vmatprep.subr.bf16.mxu0 0
  %1211 = vmatpush1.bf16.msra.mxu0 0
  %1212 = vmatprep.subr.bf16.mxu0 0
  %1213 = vmatpush1.bf16.msra.mxu0 0
  %1214 = vmatprep.subr.bf16.mxu0 0
  %1215 = vmatpush1.bf16.msra.mxu0 0
  %1216 = vmatprep.subr.bf16.mxu0 0
  %1217 = vmatpush1.bf16.msra.mxu0 0
  %1218 = vmatprep.mubr.bf16.mxu0 0
  %1219 = vmatmul.mubr.bf16.gmra.mrb[0].mxu0 %v1181
  %v1220 = vpop.f32.mrb[0].mxu0
  %v1221 = vadd.f32 0.0, %v1220
  %v1222 = vpop.f32.mrb[0].mxu0
  %v1223 = vpop.f32.mrb[0].mxu0
  %v1224 = vpop.f32.mrb[0].mxu0
  %1225 = vdwg.mxu0
  %1226 = vrot.lane.b32.xlu0 %v923, 56
  %v1227 = vpop.permute.xlu0 %1226
  %v1229 = vsel %vm393, %v1033, 0
  %v1232 = vsel %vm397, %v1227, 0
  %1234 = vmatprep.subr.bf16.mxu0 0
  %1235 = vmatpush1.bf16.msra.mxu0 %v1232
  %1236 = vmatprep.subr.bf16.mxu0 0
  %1237 = vmatpush1.bf16.msra.mxu0 0
  %1238 = vmatprep.subr.bf16.mxu0 0
  %1239 = vmatpush1.bf16.msra.mxu0 0
  %1240 = vmatprep.subr.bf16.mxu0 0
  %1241 = vmatpush1.bf16.msra.mxu0 0
  %1242 = vmatprep.subr.bf16.mxu0 0
  %1243 = vmatpush1.bf16.msra.mxu0 0
  %1244 = vmatprep.subr.bf16.mxu0 0
  %1245 = vmatpush1.bf16.msra.mxu0 0
  %1246 = vmatprep.subr.bf16.mxu0 0
  %1247 = vmatpush1.bf16.msra.mxu0 0
  %1248 = vmatprep.subr.bf16.mxu0 0
  %1249 = vmatpush1.bf16.msra.mxu0 0
  %1250 = vmatprep.subr.bf16.mxu0 0
  %1251 = vmatpush1.bf16.msra.mxu0 0
  %1252 = vmatprep.subr.bf16.mxu0 0
  %1253 = vmatpush1.bf16.msra.mxu0 0
  %1254 = vmatprep.subr.bf16.mxu0 0
  %1255 = vmatpush1.bf16.msra.mxu0 0
  %1256 = vmatprep.subr.bf16.mxu0 0
  %1257 = vmatpush1.bf16.msra.mxu0 0
  %1258 = vmatprep.subr.bf16.mxu0 0
  %1259 = vmatpush1.bf16.msra.mxu0 0
  %1260 = vmatprep.subr.bf16.mxu0 0
  %1261 = vmatpush1.bf16.msra.mxu0 0
  %1262 = vmatprep.subr.bf16.mxu0 0
  %1263 = vmatpush1.bf16.msra.mxu0 0
  %1264 = vmatprep.subr.bf16.mxu0 0
  %1265 = vmatpush1.bf16.msra.mxu0 0
  %1266 = vmatprep.mubr.bf16.mxu0 0
  %1267 = vmatmul.mubr.bf16.gmra.mrb[0].mxu0 %v1229
  %v1268 = vpop.f32.mrb[0].mxu0
  %v1269 = vadd.f32 0.0, %v1268
  %v1270 = vpop.f32.mrb[0].mxu0
  %v1271 = vpop.f32.mrb[0].mxu0
  %v1272 = vpop.f32.mrb[0].mxu0
  %1273 = vdwg.mxu0
  %v1274 = vpack.c.bf16 %v1077, %v1077
  %v1275 = vpack.c.bf16 %v1125, %v1125
  %v1276 = vpack.c.bf16 %v1173, %v1173
  %v1277 = vpack.c.bf16 %v1221, %v1221
  %v1278 = vpack.c.bf16 %v1269, %v1269
  %v1285 = vunpack.c.l.s4 1966171168
  %v1286 = vunpack.c.0.s8 %v1285
  %v1287 = vlaneseq
  %v1288 = vshrl.u32 %v1287, 7
  %v1289 = vsub.s32 %v1286, %v1288
  %v1290 = vrot.slane %v1274, %v1289
  %v1292 = vunpack.c.l.s4 1966171168
  %v1293 = vunpack.c.0.s8 %v1292
  %v1294 = vlaneseq
  %v1295 = vshrl.u32 %v1294, 7
  %v1296 = vsub.s32 %v1293, %v1295
  %v1297 = vrot.slane %v1290, %v1296
  %v1299 = vunpack.c.l.s4 1966171168
  %v1300 = vunpack.c.0.s8 %v1299
  %v1301 = vlaneseq
  %v1302 = vshrl.u32 %v1301, 7
  %v1303 = vsub.s32 %v1300, %v1302
  %v1304 = vrot.slane %v1275, %v1303
  %v1306 = vunpack.c.l.s4 1966171168
  %v1307 = vunpack.c.0.s8 %v1306
  %v1308 = vlaneseq
  %v1309 = vshrl.u32 %v1308, 7
  %v1310 = vsub.s32 %v1307, %v1309
  %v1311 = vrot.slane %v1304, %v1310
  %v1313 = vunpack.c.l.s4 1966171168
  %v1314 = vunpack.c.0.s8 %v1313
  %v1315 = vlaneseq
  %v1316 = vshrl.u32 %v1315, 7
  %v1317 = vsub.s32 %v1314, %v1316
  %v1318 = vrot.slane %v1276, %v1317
  %v1320 = vunpack.c.l.s4 1966171168
  %v1321 = vunpack.c.0.s8 %v1320
  %v1322 = vlaneseq
  %v1323 = vshrl.u32 %v1322, 7
  %v1324 = vsub.s32 %v1321, %v1323
  %v1325 = vrot.slane %v1318, %v1324
  %v1327 = vunpack.c.l.s4 1966171168
  %v1328 = vunpack.c.0.s8 %v1327
  %v1329 = vlaneseq
  %v1330 = vshrl.u32 %v1329, 7
  %v1331 = vsub.s32 %v1328, %v1330
  %v1332 = vrot.slane %v1277, %v1331
  %v1334 = vunpack.c.l.s4 1966171168
  %v1335 = vunpack.c.0.s8 %v1334
  %v1336 = vlaneseq
  %v1337 = vshrl.u32 %v1336, 7
  %v1338 = vsub.s32 %v1335, %v1337
  %v1339 = vrot.slane %v1332, %v1338
  %v1341 = vunpack.c.l.s4 1966171168
  %v1342 = vunpack.c.0.s8 %v1341
  %v1343 = vlaneseq
  %v1344 = vshrl.u32 %v1343, 7
  %v1345 = vsub.s32 %v1342, %v1344
  %v1346 = vrot.slane %v1278, %v1345
  %v1348 = vunpack.c.l.s4 1966171168
  %v1349 = vunpack.c.0.s8 %v1348
  %v1350 = vlaneseq
  %v1351 = vshrl.u32 %v1350, 7
  %v1352 = vsub.s32 %v1349, %v1351
  %v1353 = vrot.slane %v1346, %v1352
  %1354 = vrot.lane.b32.xlu0 %v1297, 8
  %v1355 = vpop.permute.xlu0 %1354
  %1356 = vrot.lane.b32.xlu0 %v1311, 8
  %v1357 = vpop.permute.xlu0 %1356
  %1358 = vrot.lane.b32.xlu0 %v1325, 8
  %v1359 = vpop.permute.xlu0 %1358
  %1360 = vrot.lane.b32.xlu0 %v1339, 8
  %v1361 = vpop.permute.xlu0 %1360
  %1362 = vrot.lane.b32.xlu0 %v1353, 8
  %v1363 = vpop.permute.xlu0 %1362
  %vm1369 = vcmask 122944
  %1370 = vst.msk [vmem:[%s1] sm:$0x1] %vm1369, %v1355
  %1371 = vst.msk [vmem:[%s1 + $0x1] sm:$0x1] %vm1369, %v1357
  %1372 = vst.msk [vmem:[%s1 + $0x2] sm:$0x1] %vm1369, %v1359
  %1373 = vst.msk [vmem:[%s1 + $0x3] sm:$0x1] %vm1369, %v1361
  %1374 = vst.msk [vmem:[%s1 + $0x4] sm:$0x1] %vm1369, %v1363
  %v1375 = vld [vmem:[%s0] sm:$0x1]
  %v1376 = vld [vmem:[%s0 + $0x1] sm:$0x1]
  %v1377 = vld [vmem:[%s0 + $0x2] sm:$0x1]
  %v1378 = vld [vmem:[%s0 + $0x3] sm:$0x1]
  %v1379 = vld [vmem:[%s0 + $0x4] sm:$0x1]
  %v1382 = vunpack.c.l.s4 1966171168
  %v1383 = vunpack.c.0.s8 %v1382
  %v1384 = vlaneseq
  %v1385 = vshrl.u32 %v1384, 7
  %v1386 = vsub.s32 %v1383, %v1385
  %v1387 = vrot.slane %v1375, %v1386
  %v1389 = vunpack.c.l.s4 1966171168
  %v1390 = vunpack.c.0.s8 %v1389
  %v1391 = vlaneseq
  %v1392 = vshrl.u32 %v1391, 7
  %v1393 = vsub.s32 %v1390, %v1392
  %v1394 = vrot.slane %v1387, %v1393
  %1395 = vrot.lane.b32.xlu0 %v1394, 112
  %v1396 = vpop.permute.xlu0 %1395
  %1397 = vrot.lane.b32.xlu0 %v1394, 80
  %v1398 = vpop.permute.xlu0 %1397
  %v1400 = vsel %vm31, %v1396, 0
  %v1403 = vsel %vm31, %v1398, 0
  %1405 = vmatprep.subr.bf16.mxu0 0
  %1406 = vmatpush1.bf16.xpose.msra.mxu0 %v1403
  %1407 = vmatprep.subr.bf16.mxu0 0
  %1408 = vmatpush1.bf16.xpose.msra.mxu0 0
  %1409 = vmatprep.subr.bf16.mxu0 0
  %1410 = vmatpush1.bf16.xpose.msra.mxu0 0
  %1411 = vmatprep.subr.bf16.mxu0 0
  %1412 = vmatpush1.bf16.xpose.msra.mxu0 0
  %1413 = vmatprep.subr.bf16.mxu0 0
  %1414 = vmatpush1.bf16.xpose.msra.mxu0 0
  %1415 = vmatprep.subr.bf16.mxu0 0
  %1416 = vmatpush1.bf16.xpose.msra.mxu0 0
  %1417 = vmatprep.subr.bf16.mxu0 0
  %1418 = vmatpush1.bf16.xpose.msra.mxu0 0
  %1419 = vmatprep.subr.bf16.mxu0 0
  %1420 = vmatpush1.bf16.xpose.msra.mxu0 0
  %1421 = vmatprep.subr.bf16.mxu0 0
  %1422 = vmatpush1.bf16.xpose.msra.mxu0 0
  %1423 = vmatprep.subr.bf16.mxu0 0
  %1424 = vmatpush1.bf16.xpose.msra.mxu0 0
  %1425 = vmatprep.subr.bf16.mxu0 0
  %1426 = vmatpush1.bf16.xpose.msra.mxu0 0
  %1427 = vmatprep.subr.bf16.mxu0 0
  %1428 = vmatpush1.bf16.xpose.msra.mxu0 0
  %1429 = vmatprep.subr.bf16.mxu0 0
  %1430 = vmatpush1.bf16.xpose.msra.mxu0 0
  %1431 = vmatprep.subr.bf16.mxu0 0
  %1432 = vmatpush1.bf16.xpose.msra.mxu0 0
  %1433 = vmatprep.subr.bf16.mxu0 0
  %1434 = vmatpush1.bf16.xpose.msra.mxu0 0
  %1435 = vmatprep.subr.bf16.mxu0 0
  %1436 = vmatpush1.bf16.xpose.msra.mxu0 0
  %1437 = vmatprep.mubr.bf16.mxu0 0
  %1438 = vmatmul.mubr.bf16.gmra.mrb[0].mxu0 %v1400
  %v1439 = vpop.f32.mrb[0].mxu0
  %v1440 = vadd.f32 0.0, %v1439
  %v1441 = vpop.f32.mrb[0].mxu0
  %v1442 = vpop.f32.mrb[0].mxu0
  %v1443 = vpop.f32.mrb[0].mxu0
  %1444 = vdwg.mxu0
  %v1447 = vunpack.c.l.s4 1966171168
  %v1448 = vunpack.c.0.s8 %v1447
  %v1449 = vlaneseq
  %v1450 = vshrl.u32 %v1449, 7
  %v1451 = vsub.s32 %v1448, %v1450
  %v1452 = vrot.slane %v1376, %v1451
  %v1454 = vunpack.c.l.s4 1966171168
  %v1455 = vunpack.c.0.s8 %v1454
  %v1456 = vlaneseq
  %v1457 = vshrl.u32 %v1456, 7
  %v1458 = vsub.s32 %v1455, %v1457
  %v1459 = vrot.slane %v1452, %v1458
  %1460 = vrot.lane.b32.xlu0 %v1459, 112
  %v1461 = vpop.permute.xlu0 %1460
  %1462 = vrot.lane.b32.xlu0 %v1459, 80
  %v1463 = vpop.permute.xlu0 %1462
  %v1465 = vsel %vm31, %v1461, 0
  %v1468 = vsel %vm31, %v1463, 0
  %1470 = vmatprep.subr.bf16.mxu0 0
  %1471 = vmatpush1.bf16.xpose.msra.mxu0 %v1468
  %1472 = vmatprep.subr.bf16.mxu0 0
  %1473 = vmatpush1.bf16.xpose.msra.mxu0 0
  %1474 = vmatprep.subr.bf16.mxu0 0
  %1475 = vmatpush1.bf16.xpose.msra.mxu0 0
  %1476 = vmatprep.subr.bf16.mxu0 0
  %1477 = vmatpush1.bf16.xpose.msra.mxu0 0
  %1478 = vmatprep.subr.bf16.mxu0 0
  %1479 = vmatpush1.bf16.xpose.msra.mxu0 0
  %1480 = vmatprep.subr.bf16.mxu0 0
  %1481 = vmatpush1.bf16.xpose.msra.mxu0 0
  %1482 = vmatprep.subr.bf16.mxu0 0
  %1483 = vmatpush1.bf16.xpose.msra.mxu0 0
  %1484 = vmatprep.subr.bf16.mxu0 0
  %1485 = vmatpush1.bf16.xpose.msra.mxu0 0
  %1486 = vmatprep.subr.bf16.mxu0 0
  %1487 = vmatpush1.bf16.xpose.msra.mxu0 0
  %1488 = vmatprep.subr.bf16.mxu0 0
  %1489 = vmatpush1.bf16.xpose.msra.mxu0 0
  %1490 = vmatprep.subr.bf16.mxu0 0
  %1491 = vmatpush1.bf16.xpose.msra.mxu0 0
  %1492 = vmatprep.subr.bf16.mxu0 0
  %1493 = vmatpush1.bf16.xpose.msra.mxu0 0
  %1494 = vmatprep.subr.bf16.mxu0 0
  %1495 = vmatpush1.bf16.xpose.msra.mxu0 0
  %1496 = vmatprep.subr.bf16.mxu0 0
  %1497 = vmatpush1.bf16.xpose.msra.mxu0 0
  %1498 = vmatprep.subr.bf16.mxu0 0
  %1499 = vmatpush1.bf16.xpose.msra.mxu0 0
  %1500 = vmatprep.subr.bf16.mxu0 0
  %1501 = vmatpush1.bf16.xpose.msra.mxu0 0
  %1502 = vmatprep.mubr.bf16.mxu0 0
  %1503 = vmatmul.mubr.bf16.gmra.mrb[0].mxu0 %v1465
  %v1504 = vpop.f32.mrb[0].mxu0
  %v1505 = vadd.f32 0.0, %v1504
  %v1506 = vpop.f32.mrb[0].mxu0
  %v1507 = vpop.f32.mrb[0].mxu0
  %v1508 = vpop.f32.mrb[0].mxu0
  %1509 = vdwg.mxu0
  %v1512 = vunpack.c.l.s4 1966171168
  %v1513 = vunpack.c.0.s8 %v1512
  %v1514 = vlaneseq
  %v1515 = vshrl.u32 %v1514, 7
  %v1516 = vsub.s32 %v1513, %v1515
  %v1517 = vrot.slane %v1377, %v1516
  %v1519 = vunpack.c.l.s4 1966171168
  %v1520 = vunpack.c.0.s8 %v1519
  %v1521 = vlaneseq
  %v1522 = vshrl.u32 %v1521, 7
  %v1523 = vsub.s32 %v1520, %v1522
  %v1524 = vrot.slane %v1517, %v1523
  %1525 = vrot.lane.b32.xlu0 %v1524, 112
  %v1526 = vpop.permute.xlu0 %1525
  %1527 = vrot.lane.b32.xlu0 %v1524, 80
  %v1528 = vpop.permute.xlu0 %1527
  %v1530 = vsel %vm31, %v1526, 0
  %v1533 = vsel %vm31, %v1528, 0
  %1535 = vmatprep.subr.bf16.mxu0 0
  %1536 = vmatpush1.bf16.xpose.msra.mxu0 %v1533
  %1537 = vmatprep.subr.bf16.mxu0 0
  %1538 = vmatpush1.bf16.xpose.msra.mxu0 0
  %1539 = vmatprep.subr.bf16.mxu0 0
  %1540 = vmatpush1.bf16.xpose.msra.mxu0 0
  %1541 = vmatprep.subr.bf16.mxu0 0
  %1542 = vmatpush1.bf16.xpose.msra.mxu0 0
  %1543 = vmatprep.subr.bf16.mxu0 0
  %1544 = vmatpush1.bf16.xpose.msra.mxu0 0
  %1545 = vmatprep.subr.bf16.mxu0 0
  %1546 = vmatpush1.bf16.xpose.msra.mxu0 0
  %1547 = vmatprep.subr.bf16.mxu0 0
  %1548 = vmatpush1.bf16.xpose.msra.mxu0 0
  %1549 = vmatprep.subr.bf16.mxu0 0
  %1550 = vmatpush1.bf16.xpose.msra.mxu0 0
  %1551 = vmatprep.subr.bf16.mxu0 0
  %1552 = vmatpush1.bf16.xpose.msra.mxu0 0
  %1553 = vmatprep.subr.bf16.mxu0 0
  %1554 = vmatpush1.bf16.xpose.msra.mxu0 0
  %1555 = vmatprep.subr.bf16.mxu0 0
  %1556 = vmatpush1.bf16.xpose.msra.mxu0 0
  %1557 = vmatprep.subr.bf16.mxu0 0
  %1558 = vmatpush1.bf16.xpose.msra.mxu0 0
  %1559 = vmatprep.subr.bf16.mxu0 0
  %1560 = vmatpush1.bf16.xpose.msra.mxu0 0
  %1561 = vmatprep.subr.bf16.mxu0 0
  %1562 = vmatpush1.bf16.xpose.msra.mxu0 0
  %1563 = vmatprep.subr.bf16.mxu0 0
  %1564 = vmatpush1.bf16.xpose.msra.mxu0 0
  %1565 = vmatprep.subr.bf16.mxu0 0
  %1566 = vmatpush1.bf16.xpose.msra.mxu0 0
  %1567 = vmatprep.mubr.bf16.mxu0 0
  %1568 = vmatmul.mubr.bf16.gmra.mrb[0].mxu0 %v1530
  %v1569 = vpop.f32.mrb[0].mxu0
  %v1570 = vadd.f32 0.0, %v1569
  %v1571 = vpop.f32.mrb[0].mxu0
  %v1572 = vpop.f32.mrb[0].mxu0
  %v1573 = vpop.f32.mrb[0].mxu0
  %1574 = vdwg.mxu0
  %v1577 = vunpack.c.l.s4 1966171168
  %v1578 = vunpack.c.0.s8 %v1577
  %v1579 = vlaneseq
  %v1580 = vshrl.u32 %v1579, 7
  %v1581 = vsub.s32 %v1578, %v1580
  %v1582 = vrot.slane %v1378, %v1581
  %v1584 = vunpack.c.l.s4 1966171168
  %v1585 = vunpack.c.0.s8 %v1584
  %v1586 = vlaneseq
  %v1587 = vshrl.u32 %v1586, 7
  %v1588 = vsub.s32 %v1585, %v1587
  %v1589 = vrot.slane %v1582, %v1588
  %1590 = vrot.lane.b32.xlu0 %v1589, 112
  %v1591 = vpop.permute.xlu0 %1590
  %1592 = vrot.lane.b32.xlu0 %v1589, 80
  %v1593 = vpop.permute.xlu0 %1592
  %v1595 = vsel %vm31, %v1591, 0
  %v1598 = vsel %vm31, %v1593, 0
  %1600 = vmatprep.subr.bf16.mxu0 0
  %1601 = vmatpush1.bf16.xpose.msra.mxu0 %v1598
  %1602 = vmatprep.subr.bf16.mxu0 0
  %1603 = vmatpush1.bf16.xpose.msra.mxu0 0
  %1604 = vmatprep.subr.bf16.mxu0 0
  %1605 = vmatpush1.bf16.xpose.msra.mxu0 0
  %1606 = vmatprep.subr.bf16.mxu0 0
  %1607 = vmatpush1.bf16.xpose.msra.mxu0 0
  %1608 = vmatprep.subr.bf16.mxu0 0
  %1609 = vmatpush1.bf16.xpose.msra.mxu0 0
  %1610 = vmatprep.subr.bf16.mxu0 0
  %1611 = vmatpush1.bf16.xpose.msra.mxu0 0
  %1612 = vmatprep.subr.bf16.mxu0 0
  %1613 = vmatpush1.bf16.xpose.msra.mxu0 0
  %1614 = vmatprep.subr.bf16.mxu0 0
  %1615 = vmatpush1.bf16.xpose.msra.mxu0 0
  %1616 = vmatprep.subr.bf16.mxu0 0
  %1617 = vmatpush1.bf16.xpose.msra.mxu0 0
  %1618 = vmatprep.subr.bf16.mxu0 0
  %1619 = vmatpush1.bf16.xpose.msra.mxu0 0
  %1620 = vmatprep.subr.bf16.mxu0 0
  %1621 = vmatpush1.bf16.xpose.msra.mxu0 0
  %1622 = vmatprep.subr.bf16.mxu0 0
  %1623 = vmatpush1.bf16.xpose.msra.mxu0 0
  %1624 = vmatprep.subr.bf16.mxu0 0
  %1625 = vmatpush1.bf16.xpose.msra.mxu0 0
  %1626 = vmatprep.subr.bf16.mxu0 0
  %1627 = vmatpush1.bf16.xpose.msra.mxu0 0
  %1628 = vmatprep.subr.bf16.mxu0 0
  %1629 = vmatpush1.bf16.xpose.msra.mxu0 0
  %1630 = vmatprep.subr.bf16.mxu0 0
  %1631 = vmatpush1.bf16.xpose.msra.mxu0 0
  %1632 = vmatprep.mubr.bf16.mxu0 0
  %1633 = vmatmul.mubr.bf16.gmra.mrb[0].mxu0 %v1595
  %v1634 = vpop.f32.mrb[0].mxu0
  %v1635 = vadd.f32 0.0, %v1634
  %v1636 = vpop.f32.mrb[0].mxu0
  %v1637 = vpop.f32.mrb[0].mxu0
  %v1638 = vpop.f32.mrb[0].mxu0
  %1639 = vdwg.mxu0
  %v1642 = vunpack.c.l.s4 1966171168
  %v1643 = vunpack.c.0.s8 %v1642
  %v1644 = vlaneseq
  %v1645 = vshrl.u32 %v1644, 7
  %v1646 = vsub.s32 %v1643, %v1645
  %v1647 = vrot.slane %v1379, %v1646
  %v1649 = vunpack.c.l.s4 1966171168
  %v1650 = vunpack.c.0.s8 %v1649
  %v1651 = vlaneseq
  %v1652 = vshrl.u32 %v1651, 7
  %v1653 = vsub.s32 %v1650, %v1652
  %v1654 = vrot.slane %v1647, %v1653
  %1655 = vrot.lane.b32.xlu0 %v1654, 112
  %v1656 = vpop.permute.xlu0 %1655
  %1657 = vrot.lane.b32.xlu0 %v1654, 80
  %v1658 = vpop.permute.xlu0 %1657
  %v1660 = vsel %vm31, %v1656, 0
  %v1663 = vsel %vm31, %v1658, 0
  %1665 = vmatprep.subr.bf16.mxu0 0
  %1666 = vmatpush1.bf16.xpose.msra.mxu0 %v1663
  %1667 = vmatprep.subr.bf16.mxu0 0
  %1668 = vmatpush1.bf16.xpose.msra.mxu0 0
  %1669 = vmatprep.subr.bf16.mxu0 0
  %1670 = vmatpush1.bf16.xpose.msra.mxu0 0
  %1671 = vmatprep.subr.bf16.mxu0 0
  %1672 = vmatpush1.bf16.xpose.msra.mxu0 0
  %1673 = vmatprep.subr.bf16.mxu0 0
  %1674 = vmatpush1.bf16.xpose.msra.mxu0 0
  %1675 = vmatprep.subr.bf16.mxu0 0
  %1676 = vmatpush1.bf16.xpose.msra.mxu0 0
  %1677 = vmatprep.subr.bf16.mxu0 0
  %1678 = vmatpush1.bf16.xpose.msra.mxu0 0
  %1679 = vmatprep.subr.bf16.mxu0 0
  %1680 = vmatpush1.bf16.xpose.msra.mxu0 0
  %1681 = vmatprep.subr.bf16.mxu0 0
  %1682 = vmatpush1.bf16.xpose.msra.mxu0 0
  %1683 = vmatprep.subr.bf16.mxu0 0
  %1684 = vmatpush1.bf16.xpose.msra.mxu0 0
  %1685 = vmatprep.subr.bf16.mxu0 0
  %1686 = vmatpush1.bf16.xpose.msra.mxu0 0
  %1687 = vmatprep.subr.bf16.mxu0 0
  %1688 = vmatpush1.bf16.xpose.msra.mxu0 0
  %1689 = vmatprep.subr.bf16.mxu0 0
  %1690 = vmatpush1.bf16.xpose.msra.mxu0 0
  %1691 = vmatprep.subr.bf16.mxu0 0
  %1692 = vmatpush1.bf16.xpose.msra.mxu0 0
  %1693 = vmatprep.subr.bf16.mxu0 0
  %1694 = vmatpush1.bf16.xpose.msra.mxu0 0
  %1695 = vmatprep.subr.bf16.mxu0 0
  %1696 = vmatpush1.bf16.xpose.msra.mxu0 0
  %1697 = vmatprep.mubr.bf16.mxu0 0
  %1698 = vmatmul.mubr.bf16.gmra.mrb[0].mxu0 %v1660
  %v1699 = vpop.f32.mrb[0].mxu0
  %v1700 = vadd.f32 0.0, %v1699
  %v1701 = vpop.f32.mrb[0].mxu0
  %v1702 = vpop.f32.mrb[0].mxu0
  %v1703 = vpop.f32.mrb[0].mxu0
  %1704 = vdwg.mxu0
  %v1705 = vsel %vm330, %v1440, -inf
  %1706 = vmax.xlane.f32.xlu0 %v1705
  %v1707 = vpop.xlane.xlu0 %1706
  %v1708 = vsel %vm330, %v1505, -inf
  %1709 = vmax.xlane.f32.xlu0 %v1708
  %v1710 = vpop.xlane.xlu0 %1709
  %v1711 = vsel %vm330, %v1570, -inf
  %1712 = vmax.xlane.f32.xlu0 %v1711
  %v1713 = vpop.xlane.xlu0 %1712
  %v1714 = vsel %vm330, %v1635, -inf
  %1715 = vmax.xlane.f32.xlu0 %v1714
  %v1716 = vpop.xlane.xlu0 %1715
  %v1717 = vsel %vm330, %v1700, -inf
  %1718 = vmax.xlane.f32.xlu0 %v1717
  %v1719 = vpop.xlane.xlu0 %1718
  %v1720 = vsub.f32 %v1440, %v1707
  %v1721 = vsub.f32 %v1505, %v1710
  %v1722 = vsub.f32 %v1570, %v1713
  %v1723 = vsub.f32 %v1635, %v1716
  %v1724 = vsub.f32 %v1700, %v1719
  %v1725 = vmul.f32 %v1720, 1.442695
  %v1726 = vpow.pop %v1725
  %v1727 = vmul.f32 %v1721, 1.442695
  %v1728 = vpow.pop %v1727
  %v1729 = vmul.f32 %v1722, 1.442695
  %v1730 = vpow.pop %v1729
  %v1731 = vmul.f32 %v1723, 1.442695
  %v1732 = vpow.pop %v1731
  %v1733 = vmul.f32 %v1724, 1.442695
  %v1734 = vpow.pop %v1733
  %v1735 = vsel %vm330, %v1726, 0.0
  %1736 = vadd.xlane.f32.xlu0 %v1735
  %v1737 = vpop.xlane.xlu0 %1736
  %v1738 = vsel %vm330, %v1728, 0.0
  %1739 = vadd.xlane.f32.xlu0 %v1738
  %v1740 = vpop.xlane.xlu0 %1739
  %v1741 = vsel %vm330, %v1730, 0.0
  %1742 = vadd.xlane.f32.xlu0 %v1741
  %v1743 = vpop.xlane.xlu0 %1742
  %v1744 = vsel %vm330, %v1732, 0.0
  %1745 = vadd.xlane.f32.xlu0 %v1744
  %v1746 = vpop.xlane.xlu0 %1745
  %v1747 = vsel %vm330, %v1734, 0.0
  %1748 = vadd.xlane.f32.xlu0 %v1747
  %v1749 = vpop.xlane.xlu0 %1748
  %v1750 = vrcp.pop %v1737
  %v1751 = vrcp.pop %v1740
  %v1752 = vrcp.pop %v1743
  %v1753 = vrcp.pop %v1746
  %v1754 = vrcp.pop %v1749
  %v1755 = vmul.f32 %v1726, %v1750
  %v1756 = vmul.f32 %v1728, %v1751
  %v1757 = vmul.f32 %v1730, %v1752
  %v1758 = vmul.f32 %v1732, %v1753
  %v1759 = vmul.f32 %v1734, %v1754
  %v1760 = vpack.c.bf16 %v1755, %v1755
  %v1761 = vpack.c.bf16 %v1756, %v1756
  %v1762 = vpack.c.bf16 %v1757, %v1757
  %v1763 = vpack.c.bf16 %v1758, %v1758
  %v1764 = vpack.c.bf16 %v1759, %v1759
  %1765 = vrot.lane.b32.xlu0 %v1394, 48
  %v1766 = vpop.permute.xlu0 %1765
  %v1768 = vsel %vm393, %v1760, 0
  %v1771 = vsel %vm397, %v1766, 0
  %1773 = vmatprep.subr.bf16.mxu0 0
  %1774 = vmatpush1.bf16.msra.mxu0 %v1771
  %1775 = vmatprep.subr.bf16.mxu0 0
  %1776 = vmatpush1.bf16.msra.mxu0 0
  %1777 = vmatprep.subr.bf16.mxu0 0
  %1778 = vmatpush1.bf16.msra.mxu0 0
  %1779 = vmatprep.subr.bf16.mxu0 0
  %1780 = vmatpush1.bf16.msra.mxu0 0
  %1781 = vmatprep.subr.bf16.mxu0 0
  %1782 = vmatpush1.bf16.msra.mxu0 0
  %1783 = vmatprep.subr.bf16.mxu0 0
  %1784 = vmatpush1.bf16.msra.mxu0 0
  %1785 = vmatprep.subr.bf16.mxu0 0
  %1786 = vmatpush1.bf16.msra.mxu0 0
  %1787 = vmatprep.subr.bf16.mxu0 0
  %1788 = vmatpush1.bf16.msra.mxu0 0
  %1789 = vmatprep.subr.bf16.mxu0 0
  %1790 = vmatpush1.bf16.msra.mxu0 0
  %1791 = vmatprep.subr.bf16.mxu0 0
  %1792 = vmatpush1.bf16.msra.mxu0 0
  %1793 = vmatprep.subr.bf16.mxu0 0
  %1794 = vmatpush1.bf16.msra.mxu0 0
  %1795 = vmatprep.subr.bf16.mxu0 0
  %1796 = vmatpush1.bf16.msra.mxu0 0
  %1797 = vmatprep.subr.bf16.mxu0 0
  %1798 = vmatpush1.bf16.msra.mxu0 0
  %1799 = vmatprep.subr.bf16.mxu0 0
  %1800 = vmatpush1.bf16.msra.mxu0 0
  %1801 = vmatprep.subr.bf16.mxu0 0
  %1802 = vmatpush1.bf16.msra.mxu0 0
  %1803 = vmatprep.subr.bf16.mxu0 0
  %1804 = vmatpush1.bf16.msra.mxu0 0
  %1805 = vmatprep.mubr.bf16.mxu0 0
  %1806 = vmatmul.mubr.bf16.gmra.mrb[0].mxu0 %v1768
  %v1807 = vpop.f32.mrb[0].mxu0
  %v1808 = vadd.f32 0.0, %v1807
  %v1809 = vpop.f32.mrb[0].mxu0
  %v1810 = vpop.f32.mrb[0].mxu0
  %v1811 = vpop.f32.mrb[0].mxu0
  %1812 = vdwg.mxu0
  %1813 = vrot.lane.b32.xlu0 %v1459, 48
  %v1814 = vpop.permute.xlu0 %1813
  %v1816 = vsel %vm393, %v1761, 0
  %v1819 = vsel %vm397, %v1814, 0
  %1821 = vmatprep.subr.bf16.mxu0 0
  %1822 = vmatpush1.bf16.msra.mxu0 %v1819
  %1823 = vmatprep.subr.bf16.mxu0 0
  %1824 = vmatpush1.bf16.msra.mxu0 0
  %1825 = vmatprep.subr.bf16.mxu0 0
  %1826 = vmatpush1.bf16.msra.mxu0 0
  %1827 = vmatprep.subr.bf16.mxu0 0
  %1828 = vmatpush1.bf16.msra.mxu0 0
  %1829 = vmatprep.subr.bf16.mxu0 0
  %1830 = vmatpush1.bf16.msra.mxu0 0
  %1831 = vmatprep.subr.bf16.mxu0 0
  %1832 = vmatpush1.bf16.msra.mxu0 0
  %1833 = vmatprep.subr.bf16.mxu0 0
  %1834 = vmatpush1.bf16.msra.mxu0 0
  %1835 = vmatprep.subr.bf16.mxu0 0
  %1836 = vmatpush1.bf16.msra.mxu0 0
  %1837 = vmatprep.subr.bf16.mxu0 0
  %1838 = vmatpush1.bf16.msra.mxu0 0
  %1839 = vmatprep.subr.bf16.mxu0 0
  %1840 = vmatpush1.bf16.msra.mxu0 0
  %1841 = vmatprep.subr.bf16.mxu0 0
  %1842 = vmatpush1.bf16.msra.mxu0 0
  %1843 = vmatprep.subr.bf16.mxu0 0
  %1844 = vmatpush1.bf16.msra.mxu0 0
  %1845 = vmatprep.subr.bf16.mxu0 0
  %1846 = vmatpush1.bf16.msra.mxu0 0
  %1847 = vmatprep.subr.bf16.mxu0 0
  %1848 = vmatpush1.bf16.msra.mxu0 0
  %1849 = vmatprep.subr.bf16.mxu0 0
  %1850 = vmatpush1.bf16.msra.mxu0 0
  %1851 = vmatprep.subr.bf16.mxu0 0
  %1852 = vmatpush1.bf16.msra.mxu0 0
  %1853 = vmatprep.mubr.bf16.mxu0 0
  %1854 = vmatmul.mubr.bf16.gmra.mrb[0].mxu0 %v1816
  %v1855 = vpop.f32.mrb[0].mxu0
  %v1856 = vadd.f32 0.0, %v1855
  %v1857 = vpop.f32.mrb[0].mxu0
  %v1858 = vpop.f32.mrb[0].mxu0
  %v1859 = vpop.f32.mrb[0].mxu0
  %1860 = vdwg.mxu0
  %1861 = vrot.lane.b32.xlu0 %v1524, 48
  %v1862 = vpop.permute.xlu0 %1861
  %v1864 = vsel %vm393, %v1762, 0
  %v1867 = vsel %vm397, %v1862, 0
  %1869 = vmatprep.subr.bf16.mxu0 0
  %1870 = vmatpush1.bf16.msra.mxu0 %v1867
  %1871 = vmatprep.subr.bf16.mxu0 0
  %1872 = vmatpush1.bf16.msra.mxu0 0
  %1873 = vmatprep.subr.bf16.mxu0 0
  %1874 = vmatpush1.bf16.msra.mxu0 0
  %1875 = vmatprep.subr.bf16.mxu0 0
  %1876 = vmatpush1.bf16.msra.mxu0 0
  %1877 = vmatprep.subr.bf16.mxu0 0
  %1878 = vmatpush1.bf16.msra.mxu0 0
  %1879 = vmatprep.subr.bf16.mxu0 0
  %1880 = vmatpush1.bf16.msra.mxu0 0
  %1881 = vmatprep.subr.bf16.mxu0 0
  %1882 = vmatpush1.bf16.msra.mxu0 0
  %1883 = vmatprep.subr.bf16.mxu0 0
  %1884 = vmatpush1.bf16.msra.mxu0 0
  %1885 = vmatprep.subr.bf16.mxu0 0
  %1886 = vmatpush1.bf16.msra.mxu0 0
  %1887 = vmatprep.subr.bf16.mxu0 0
  %1888 = vmatpush1.bf16.msra.mxu0 0
  %1889 = vmatprep.subr.bf16.mxu0 0
  %1890 = vmatpush1.bf16.msra.mxu0 0
  %1891 = vmatprep.subr.bf16.mxu0 0
  %1892 = vmatpush1.bf16.msra.mxu0 0
  %1893 = vmatprep.subr.bf16.mxu0 0
  %1894 = vmatpush1.bf16.msra.mxu0 0
  %1895 = vmatprep.subr.bf16.mxu0 0
  %1896 = vmatpush1.bf16.msra.mxu0 0
  %1897 = vmatprep.subr.bf16.mxu0 0
  %1898 = vmatpush1.bf16.msra.mxu0 0
  %1899 = vmatprep.subr.bf16.mxu0 0
  %1900 = vmatpush1.bf16.msra.mxu0 0
  %1901 = vmatprep.mubr.bf16.mxu0 0
  %1902 = vmatmul.mubr.bf16.gmra.mrb[0].mxu0 %v1864
  %v1903 = vpop.f32.mrb[0].mxu0
  %v1904 = vadd.f32 0.0, %v1903
  %v1905 = vpop.f32.mrb[0].mxu0
  %v1906 = vpop.f32.mrb[0].mxu0
  %v1907 = vpop.f32.mrb[0].mxu0
  %1908 = vdwg.mxu0
  %1909 = vrot.lane.b32.xlu0 %v1589, 48
  %v1910 = vpop.permute.xlu0 %1909
  %v1912 = vsel %vm393, %v1763, 0
  %v1915 = vsel %vm397, %v1910, 0
  %1917 = vmatprep.subr.bf16.mxu0 0
  %1918 = vmatpush1.bf16.msra.mxu0 %v1915
  %1919 = vmatprep.subr.bf16.mxu0 0
  %1920 = vmatpush1.bf16.msra.mxu0 0
  %1921 = vmatprep.subr.bf16.mxu0 0
  %1922 = vmatpush1.bf16.msra.mxu0 0
  %1923 = vmatprep.subr.bf16.mxu0 0
  %1924 = vmatpush1.bf16.msra.mxu0 0
  %1925 = vmatprep.subr.bf16.mxu0 0
  %1926 = vmatpush1.bf16.msra.mxu0 0
  %1927 = vmatprep.subr.bf16.mxu0 0
  %1928 = vmatpush1.bf16.msra.mxu0 0
  %1929 = vmatprep.subr.bf16.mxu0 0
  %1930 = vmatpush1.bf16.msra.mxu0 0
  %1931 = vmatprep.subr.bf16.mxu0 0
  %1932 = vmatpush1.bf16.msra.mxu0 0
  %1933 = vmatprep.subr.bf16.mxu0 0
  %1934 = vmatpush1.bf16.msra.mxu0 0
  %1935 = vmatprep.subr.bf16.mxu0 0
  %1936 = vmatpush1.bf16.msra.mxu0 0
  %1937 = vmatprep.subr.bf16.mxu0 0
  %1938 = vmatpush1.bf16.msra.mxu0 0
  %1939 = vmatprep.subr.bf16.mxu0 0
  %1940 = vmatpush1.bf16.msra.mxu0 0
  %1941 = vmatprep.subr.bf16.mxu0 0
  %1942 = vmatpush1.bf16.msra.mxu0 0
  %1943 = vmatprep.subr.bf16.mxu0 0
  %1944 = vmatpush1.bf16.msra.mxu0 0
  %1945 = vmatprep.subr.bf16.mxu0 0
  %1946 = vmatpush1.bf16.msra.mxu0 0
  %1947 = vmatprep.subr.bf16.mxu0 0
  %1948 = vmatpush1.bf16.msra.mxu0 0
  %1949 = vmatprep.mubr.bf16.mxu0 0
  %1950 = vmatmul.mubr.bf16.gmra.mrb[0].mxu0 %v1912
  %v1951 = vpop.f32.mrb[0].mxu0
  %v1952 = vadd.f32 0.0, %v1951
  %v1953 = vpop.f32.mrb[0].mxu0
  %v1954 = vpop.f32.mrb[0].mxu0
  %v1955 = vpop.f32.mrb[0].mxu0
  %1956 = vdwg.mxu0
  %1957 = vrot.lane.b32.xlu0 %v1654, 48
  %v1958 = vpop.permute.xlu0 %1957
  %v1960 = vsel %vm393, %v1764, 0
  %v1963 = vsel %vm397, %v1958, 0
  %1965 = vmatprep.subr.bf16.mxu0 0
  %1966 = vmatpush1.bf16.msra.mxu0 %v1963
  %1967 = vmatprep.subr.bf16.mxu0 0
  %1968 = vmatpush1.bf16.msra.mxu0 0
  %1969 = vmatprep.subr.bf16.mxu0 0
  %1970 = vmatpush1.bf16.msra.mxu0 0
  %1971 = vmatprep.subr.bf16.mxu0 0
  %1972 = vmatpush1.bf16.msra.mxu0 0
  %1973 = vmatprep.subr.bf16.mxu0 0
  %1974 = vmatpush1.bf16.msra.mxu0 0
  %1975 = vmatprep.subr.bf16.mxu0 0
  %1976 = vmatpush1.bf16.msra.mxu0 0
  %1977 = vmatprep.subr.bf16.mxu0 0
  %1978 = vmatpush1.bf16.msra.mxu0 0
  %1979 = vmatprep.subr.bf16.mxu0 0
  %1980 = vmatpush1.bf16.msra.mxu0 0
  %1981 = vmatprep.subr.bf16.mxu0 0
  %1982 = vmatpush1.bf16.msra.mxu0 0
  %1983 = vmatprep.subr.bf16.mxu0 0
  %1984 = vmatpush1.bf16.msra.mxu0 0
  %1985 = vmatprep.subr.bf16.mxu0 0
  %1986 = vmatpush1.bf16.msra.mxu0 0
  %1987 = vmatprep.subr.bf16.mxu0 0
  %1988 = vmatpush1.bf16.msra.mxu0 0
  %1989 = vmatprep.subr.bf16.mxu0 0
  %1990 = vmatpush1.bf16.msra.mxu0 0
  %1991 = vmatprep.subr.bf16.mxu0 0
  %1992 = vmatpush1.bf16.msra.mxu0 0
  %1993 = vmatprep.subr.bf16.mxu0 0
  %1994 = vmatpush1.bf16.msra.mxu0 0
  %1995 = vmatprep.subr.bf16.mxu0 0
  %1996 = vmatpush1.bf16.msra.mxu0 0
  %1997 = vmatprep.mubr.bf16.mxu0 0
  %1998 = vmatmul.mubr.bf16.gmra.mrb[0].mxu0 %v1960
  %v1999 = vpop.f32.mrb[0].mxu0
  %v2000 = vadd.f32 0.0, %v1999
  %v2001 = vpop.f32.mrb[0].mxu0
  %v2002 = vpop.f32.mrb[0].mxu0
  %v2003 = vpop.f32.mrb[0].mxu0
  %2004 = vdwg.mxu0
  %v2005 = vpack.c.bf16 %v1808, %v1808
  %v2006 = vpack.c.bf16 %v1856, %v1856
  %v2007 = vpack.c.bf16 %v1904, %v1904
  %v2008 = vpack.c.bf16 %v1952, %v1952
  %v2009 = vpack.c.bf16 %v2000, %v2000
  %v2016 = vunpack.c.l.s4 1966171168
  %v2017 = vunpack.c.0.s8 %v2016
  %v2018 = vlaneseq
  %v2019 = vshrl.u32 %v2018, 7
  %v2020 = vsub.s32 %v2017, %v2019
  %v2021 = vrot.slane %v2005, %v2020
  %v2023 = vunpack.c.l.s4 1966171168
  %v2024 = vunpack.c.0.s8 %v2023
  %v2025 = vlaneseq
  %v2026 = vshrl.u32 %v2025, 7
  %v2027 = vsub.s32 %v2024, %v2026
  %v2028 = vrot.slane %v2021, %v2027
  %v2030 = vunpack.c.l.s4 1966171168
  %v2031 = vunpack.c.0.s8 %v2030
  %v2032 = vlaneseq
  %v2033 = vshrl.u32 %v2032, 7
  %v2034 = vsub.s32 %v2031, %v2033
  %v2035 = vrot.slane %v2006, %v2034
  %v2037 = vunpack.c.l.s4 1966171168
  %v2038 = vunpack.c.0.s8 %v2037
  %v2039 = vlaneseq
  %v2040 = vshrl.u32 %v2039, 7
  %v2041 = vsub.s32 %v2038, %v2040
  %v2042 = vrot.slane %v2035, %v2041
  %v2044 = vunpack.c.l.s4 1966171168
  %v2045 = vunpack.c.0.s8 %v2044
  %v2046 = vlaneseq
  %v2047 = vshrl.u32 %v2046, 7
  %v2048 = vsub.s32 %v2045, %v2047
  %v2049 = vrot.slane %v2007, %v2048
  %v2051 = vunpack.c.l.s4 1966171168
  %v2052 = vunpack.c.0.s8 %v2051
  %v2053 = vlaneseq
  %v2054 = vshrl.u32 %v2053, 7
  %v2055 = vsub.s32 %v2052, %v2054
  %v2056 = vrot.slane %v2049, %v2055
  %v2058 = vunpack.c.l.s4 1966171168
  %v2059 = vunpack.c.0.s8 %v2058
  %v2060 = vlaneseq
  %v2061 = vshrl.u32 %v2060, 7
  %v2062 = vsub.s32 %v2059, %v2061
  %v2063 = vrot.slane %v2008, %v2062
  %v2065 = vunpack.c.l.s4 1966171168
  %v2066 = vunpack.c.0.s8 %v2065
  %v2067 = vlaneseq
  %v2068 = vshrl.u32 %v2067, 7
  %v2069 = vsub.s32 %v2066, %v2068
  %v2070 = vrot.slane %v2063, %v2069
  %v2072 = vunpack.c.l.s4 1966171168
  %v2073 = vunpack.c.0.s8 %v2072
  %v2074 = vlaneseq
  %v2075 = vshrl.u32 %v2074, 7
  %v2076 = vsub.s32 %v2073, %v2075
  %v2077 = vrot.slane %v2009, %v2076
  %v2079 = vunpack.c.l.s4 1966171168
  %v2080 = vunpack.c.0.s8 %v2079
  %v2081 = vlaneseq
  %v2082 = vshrl.u32 %v2081, 7
  %v2083 = vsub.s32 %v2080, %v2082
  %v2084 = vrot.slane %v2077, %v2083
  %2085 = vrot.lane.b32.xlu0 %v2028, 16
  %v2086 = vpop.permute.xlu0 %2085
  %2087 = vrot.lane.b32.xlu0 %v2042, 16
  %v2088 = vpop.permute.xlu0 %2087
  %2089 = vrot.lane.b32.xlu0 %v2056, 16
  %v2090 = vpop.permute.xlu0 %2089
  %2091 = vrot.lane.b32.xlu0 %v2070, 16
  %v2092 = vpop.permute.xlu0 %2091
  %2093 = vrot.lane.b32.xlu0 %v2084, 16
  %v2094 = vpop.permute.xlu0 %2093
  %vm2100 = vcmask 188544
  %2101 = vst.msk [vmem:[%s1] sm:$0x1] %vm2100, %v2086
  %2102 = vst.msk [vmem:[%s1 + $0x1] sm:$0x1] %vm2100, %v2088
  %2103 = vst.msk [vmem:[%s1 + $0x2] sm:$0x1] %vm2100, %v2090
  %2104 = vst.msk [vmem:[%s1 + $0x3] sm:$0x1] %vm2100, %v2092
  %2105 = vst.msk [vmem:[%s1 + $0x4] sm:$0x1] %vm2100, %v2094
  %v2106 = vld [vmem:[%s0] sm:$0x1]
  %v2107 = vld [vmem:[%s0 + $0x1] sm:$0x1]
  %v2108 = vld [vmem:[%s0 + $0x2] sm:$0x1]
  %v2109 = vld [vmem:[%s0 + $0x3] sm:$0x1]
  %v2110 = vld [vmem:[%s0 + $0x4] sm:$0x1]
  %v2113 = vunpack.c.l.s4 1966171168
  %v2114 = vunpack.c.0.s8 %v2113
  %v2115 = vlaneseq
  %v2116 = vshrl.u32 %v2115, 7
  %v2117 = vsub.s32 %v2114, %v2116
  %v2118 = vrot.slane %v2106, %v2117
  %v2120 = vunpack.c.l.s4 1966171168
  %v2121 = vunpack.c.0.s8 %v2120
  %v2122 = vlaneseq
  %v2123 = vshrl.u32 %v2122, 7
  %v2124 = vsub.s32 %v2121, %v2123
  %v2125 = vrot.slane %v2118, %v2124
  %2126 = vrot.lane.b32.xlu0 %v2125, 104
  %v2127 = vpop.permute.xlu0 %2126
  %2128 = vrot.lane.b32.xlu0 %v2125, 72
  %v2129 = vpop.permute.xlu0 %2128
  %v2131 = vsel %vm31, %v2127, 0
  %v2134 = vsel %vm31, %v2129, 0
  %2136 = vmatprep.subr.bf16.mxu0 0
  %2137 = vmatpush1.bf16.xpose.msra.mxu0 %v2134
  %2138 = vmatprep.subr.bf16.mxu0 0
  %2139 = vmatpush1.bf16.xpose.msra.mxu0 0
  %2140 = vmatprep.subr.bf16.mxu0 0
  %2141 = vmatpush1.bf16.xpose.msra.mxu0 0
  %2142 = vmatprep.subr.bf16.mxu0 0
  %2143 = vmatpush1.bf16.xpose.msra.mxu0 0
  %2144 = vmatprep.subr.bf16.mxu0 0
  %2145 = vmatpush1.bf16.xpose.msra.mxu0 0
  %2146 = vmatprep.subr.bf16.mxu0 0
  %2147 = vmatpush1.bf16.xpose.msra.mxu0 0
  %2148 = vmatprep.subr.bf16.mxu0 0
  %2149 = vmatpush1.bf16.xpose.msra.mxu0 0
  %2150 = vmatprep.subr.bf16.mxu0 0
  %2151 = vmatpush1.bf16.xpose.msra.mxu0 0
  %2152 = vmatprep.subr.bf16.mxu0 0
  %2153 = vmatpush1.bf16.xpose.msra.mxu0 0
  %2154 = vmatprep.subr.bf16.mxu0 0
  %2155 = vmatpush1.bf16.xpose.msra.mxu0 0
  %2156 = vmatprep.subr.bf16.mxu0 0
  %2157 = vmatpush1.bf16.xpose.msra.mxu0 0
  %2158 = vmatprep.subr.bf16.mxu0 0
  %2159 = vmatpush1.bf16.xpose.msra.mxu0 0
  %2160 = vmatprep.subr.bf16.mxu0 0
  %2161 = vmatpush1.bf16.xpose.msra.mxu0 0
  %2162 = vmatprep.subr.bf16.mxu0 0
  %2163 = vmatpush1.bf16.xpose.msra.mxu0 0
  %2164 = vmatprep.subr.bf16.mxu0 0
  %2165 = vmatpush1.bf16.xpose.msra.mxu0 0
  %2166 = vmatprep.subr.bf16.mxu0 0
  %2167 = vmatpush1.bf16.xpose.msra.mxu0 0
  %2168 = vmatprep.mubr.bf16.mxu0 0
  %2169 = vmatmul.mubr.bf16.gmra.mrb[0].mxu0 %v2131
  %v2170 = vpop.f32.mrb[0].mxu0
  %v2171 = vadd.f32 0.0, %v2170
  %v2172 = vpop.f32.mrb[0].mxu0
  %v2173 = vpop.f32.mrb[0].mxu0
  %v2174 = vpop.f32.mrb[0].mxu0
  %2175 = vdwg.mxu0
  %v2178 = vunpack.c.l.s4 1966171168
  %v2179 = vunpack.c.0.s8 %v2178
  %v2180 = vlaneseq
  %v2181 = vshrl.u32 %v2180, 7
  %v2182 = vsub.s32 %v2179, %v2181
  %v2183 = vrot.slane %v2107, %v2182
  %v2185 = vunpack.c.l.s4 1966171168
  %v2186 = vunpack.c.0.s8 %v2185
  %v2187 = vlaneseq
  %v2188 = vshrl.u32 %v2187, 7
  %v2189 = vsub.s32 %v2186, %v2188
  %v2190 = vrot.slane %v2183, %v2189
  %2191 = vrot.lane.b32.xlu0 %v2190, 104
  %v2192 = vpop.permute.xlu0 %2191
  %2193 = vrot.lane.b32.xlu0 %v2190, 72
  %v2194 = vpop.permute.xlu0 %2193
  %v2196 = vsel %vm31, %v2192, 0
  %v2199 = vsel %vm31, %v2194, 0
  %2201 = vmatprep.subr.bf16.mxu0 0
  %2202 = vmatpush1.bf16.xpose.msra.mxu0 %v2199
  %2203 = vmatprep.subr.bf16.mxu0 0
  %2204 = vmatpush1.bf16.xpose.msra.mxu0 0
  %2205 = vmatprep.subr.bf16.mxu0 0
  %2206 = vmatpush1.bf16.xpose.msra.mxu0 0
  %2207 = vmatprep.subr.bf16.mxu0 0
  %2208 = vmatpush1.bf16.xpose.msra.mxu0 0
  %2209 = vmatprep.subr.bf16.mxu0 0
  %2210 = vmatpush1.bf16.xpose.msra.mxu0 0
  %2211 = vmatprep.subr.bf16.mxu0 0
  %2212 = vmatpush1.bf16.xpose.msra.mxu0 0
  %2213 = vmatprep.subr.bf16.mxu0 0
  %2214 = vmatpush1.bf16.xpose.msra.mxu0 0
  %2215 = vmatprep.subr.bf16.mxu0 0
  %2216 = vmatpush1.bf16.xpose.msra.mxu0 0
  %2217 = vmatprep.subr.bf16.mxu0 0
  %2218 = vmatpush1.bf16.xpose.msra.mxu0 0
  %2219 = vmatprep.subr.bf16.mxu0 0
  %2220 = vmatpush1.bf16.xpose.msra.mxu0 0
  %2221 = vmatprep.subr.bf16.mxu0 0
  %2222 = vmatpush1.bf16.xpose.msra.mxu0 0
  %2223 = vmatprep.subr.bf16.mxu0 0
  %2224 = vmatpush1.bf16.xpose.msra.mxu0 0
  %2225 = vmatprep.subr.bf16.mxu0 0
  %2226 = vmatpush1.bf16.xpose.msra.mxu0 0
  %2227 = vmatprep.subr.bf16.mxu0 0
  %2228 = vmatpush1.bf16.xpose.msra.mxu0 0
  %2229 = vmatprep.subr.bf16.mxu0 0
  %2230 = vmatpush1.bf16.xpose.msra.mxu0 0
  %2231 = vmatprep.subr.bf16.mxu0 0
  %2232 = vmatpush1.bf16.xpose.msra.mxu0 0
  %2233 = vmatprep.mubr.bf16.mxu0 0
  %2234 = vmatmul.mubr.bf16.gmra.mrb[0].mxu0 %v2196
  %v2235 = vpop.f32.mrb[0].mxu0
  %v2236 = vadd.f32 0.0, %v2235
  %v2237 = vpop.f32.mrb[0].mxu0
  %v2238 = vpop.f32.mrb[0].mxu0
  %v2239 = vpop.f32.mrb[0].mxu0
  %2240 = vdwg.mxu0
  %v2243 = vunpack.c.l.s4 1966171168
  %v2244 = vunpack.c.0.s8 %v2243
  %v2245 = vlaneseq
  %v2246 = vshrl.u32 %v2245, 7
  %v2247 = vsub.s32 %v2244, %v2246
  %v2248 = vrot.slane %v2108, %v2247
  %v2250 = vunpack.c.l.s4 1966171168
  %v2251 = vunpack.c.0.s8 %v2250
  %v2252 = vlaneseq
  %v2253 = vshrl.u32 %v2252, 7
  %v2254 = vsub.s32 %v2251, %v2253
  %v2255 = vrot.slane %v2248, %v2254
  %2256 = vrot.lane.b32.xlu0 %v2255, 104
  %v2257 = vpop.permute.xlu0 %2256
  %2258 = vrot.lane.b32.xlu0 %v2255, 72
  %v2259 = vpop.permute.xlu0 %2258
  %v2261 = vsel %vm31, %v2257, 0
  %v2264 = vsel %vm31, %v2259, 0
  %2266 = vmatprep.subr.bf16.mxu0 0
  %2267 = vmatpush1.bf16.xpose.msra.mxu0 %v2264
  %2268 = vmatprep.subr.bf16.mxu0 0
  %2269 = vmatpush1.bf16.xpose.msra.mxu0 0
  %2270 = vmatprep.subr.bf16.mxu0 0
  %2271 = vmatpush1.bf16.xpose.msra.mxu0 0
  %2272 = vmatprep.subr.bf16.mxu0 0
  %2273 = vmatpush1.bf16.xpose.msra.mxu0 0
  %2274 = vmatprep.subr.bf16.mxu0 0
  %2275 = vmatpush1.bf16.xpose.msra.mxu0 0
  %2276 = vmatprep.subr.bf16.mxu0 0
  %2277 = vmatpush1.bf16.xpose.msra.mxu0 0
  %2278 = vmatprep.subr.bf16.mxu0 0
  %2279 = vmatpush1.bf16.xpose.msra.mxu0 0
  %2280 = vmatprep.subr.bf16.mxu0 0
  %2281 = vmatpush1.bf16.xpose.msra.mxu0 0
  %2282 = vmatprep.subr.bf16.mxu0 0
  %2283 = vmatpush1.bf16.xpose.msra.mxu0 0
  %2284 = vmatprep.subr.bf16.mxu0 0
  %2285 = vmatpush1.bf16.xpose.msra.mxu0 0
  %2286 = vmatprep.subr.bf16.mxu0 0
  %2287 = vmatpush1.bf16.xpose.msra.mxu0 0
  %2288 = vmatprep.subr.bf16.mxu0 0
  %2289 = vmatpush1.bf16.xpose.msra.mxu0 0
  %2290 = vmatprep.subr.bf16.mxu0 0
  %2291 = vmatpush1.bf16.xpose.msra.mxu0 0
  %2292 = vmatprep.subr.bf16.mxu0 0
  %2293 = vmatpush1.bf16.xpose.msra.mxu0 0
  %2294 = vmatprep.subr.bf16.mxu0 0
  %2295 = vmatpush1.bf16.xpose.msra.mxu0 0
  %2296 = vmatprep.subr.bf16.mxu0 0
  %2297 = vmatpush1.bf16.xpose.msra.mxu0 0
  %2298 = vmatprep.mubr.bf16.mxu0 0
  %2299 = vmatmul.mubr.bf16.gmra.mrb[0].mxu0 %v2261
  %v2300 = vpop.f32.mrb[0].mxu0
  %v2301 = vadd.f32 0.0, %v2300
  %v2302 = vpop.f32.mrb[0].mxu0
  %v2303 = vpop.f32.mrb[0].mxu0
  %v2304 = vpop.f32.mrb[0].mxu0
  %2305 = vdwg.mxu0
  %v2308 = vunpack.c.l.s4 1966171168
  %v2309 = vunpack.c.0.s8 %v2308
  %v2310 = vlaneseq
  %v2311 = vshrl.u32 %v2310, 7
  %v2312 = vsub.s32 %v2309, %v2311
  %v2313 = vrot.slane %v2109, %v2312
  %v2315 = vunpack.c.l.s4 1966171168
  %v2316 = vunpack.c.0.s8 %v2315
  %v2317 = vlaneseq
  %v2318 = vshrl.u32 %v2317, 7
  %v2319 = vsub.s32 %v2316, %v2318
  %v2320 = vrot.slane %v2313, %v2319
  %2321 = vrot.lane.b32.xlu0 %v2320, 104
  %v2322 = vpop.permute.xlu0 %2321
  %2323 = vrot.lane.b32.xlu0 %v2320, 72
  %v2324 = vpop.permute.xlu0 %2323
  %v2326 = vsel %vm31, %v2322, 0
  %v2329 = vsel %vm31, %v2324, 0
  %2331 = vmatprep.subr.bf16.mxu0 0
  %2332 = vmatpush1.bf16.xpose.msra.mxu0 %v2329
  %2333 = vmatprep.subr.bf16.mxu0 0
  %2334 = vmatpush1.bf16.xpose.msra.mxu0 0
  %2335 = vmatprep.subr.bf16.mxu0 0
  %2336 = vmatpush1.bf16.xpose.msra.mxu0 0
  %2337 = vmatprep.subr.bf16.mxu0 0
  %2338 = vmatpush1.bf16.xpose.msra.mxu0 0
  %2339 = vmatprep.subr.bf16.mxu0 0
  %2340 = vmatpush1.bf16.xpose.msra.mxu0 0
  %2341 = vmatprep.subr.bf16.mxu0 0
  %2342 = vmatpush1.bf16.xpose.msra.mxu0 0
  %2343 = vmatprep.subr.bf16.mxu0 0
  %2344 = vmatpush1.bf16.xpose.msra.mxu0 0
  %2345 = vmatprep.subr.bf16.mxu0 0
  %2346 = vmatpush1.bf16.xpose.msra.mxu0 0
  %2347 = vmatprep.subr.bf16.mxu0 0
  %2348 = vmatpush1.bf16.xpose.msra.mxu0 0
  %2349 = vmatprep.subr.bf16.mxu0 0
  %2350 = vmatpush1.bf16.xpose.msra.mxu0 0
  %2351 = vmatprep.subr.bf16.mxu0 0
  %2352 = vmatpush1.bf16.xpose.msra.mxu0 0
  %2353 = vmatprep.subr.bf16.mxu0 0
  %2354 = vmatpush1.bf16.xpose.msra.mxu0 0
  %2355 = vmatprep.subr.bf16.mxu0 0
  %2356 = vmatpush1.bf16.xpose.msra.mxu0 0
  %2357 = vmatprep.subr.bf16.mxu0 0
  %2358 = vmatpush1.bf16.xpose.msra.mxu0 0
  %2359 = vmatprep.subr.bf16.mxu0 0
  %2360 = vmatpush1.bf16.xpose.msra.mxu0 0
  %2361 = vmatprep.subr.bf16.mxu0 0
  %2362 = vmatpush1.bf16.xpose.msra.mxu0 0
  %2363 = vmatprep.mubr.bf16.mxu0 0
  %2364 = vmatmul.mubr.bf16.gmra.mrb[0].mxu0 %v2326
  %v2365 = vpop.f32.mrb[0].mxu0
  %v2366 = vadd.f32 0.0, %v2365
  %v2367 = vpop.f32.mrb[0].mxu0
  %v2368 = vpop.f32.mrb[0].mxu0
  %v2369 = vpop.f32.mrb[0].mxu0
  %2370 = vdwg.mxu0
  %v2373 = vunpack.c.l.s4 1966171168
  %v2374 = vunpack.c.0.s8 %v2373
  %v2375 = vlaneseq
  %v2376 = vshrl.u32 %v2375, 7
  %v2377 = vsub.s32 %v2374, %v2376
  %v2378 = vrot.slane %v2110, %v2377
  %v2380 = vunpack.c.l.s4 1966171168
  %v2381 = vunpack.c.0.s8 %v2380
  %v2382 = vlaneseq
  %v2383 = vshrl.u32 %v2382, 7
  %v2384 = vsub.s32 %v2381, %v2383
  %v2385 = vrot.slane %v2378, %v2384
  %2386 = vrot.lane.b32.xlu0 %v2385, 104
  %v2387 = vpop.permute.xlu0 %2386
  %2388 = vrot.lane.b32.xlu0 %v2385, 72
  %v2389 = vpop.permute.xlu0 %2388
  %v2391 = vsel %vm31, %v2387, 0
  %v2394 = vsel %vm31, %v2389, 0
  %2396 = vmatprep.subr.bf16.mxu0 0
  %2397 = vmatpush1.bf16.xpose.msra.mxu0 %v2394
  %2398 = vmatprep.subr.bf16.mxu0 0
  %2399 = vmatpush1.bf16.xpose.msra.mxu0 0
  %2400 = vmatprep.subr.bf16.mxu0 0
  %2401 = vmatpush1.bf16.xpose.msra.mxu0 0
  %2402 = vmatprep.subr.bf16.mxu0 0
  %2403 = vmatpush1.bf16.xpose.msra.mxu0 0
  %2404 = vmatprep.subr.bf16.mxu0 0
  %2405 = vmatpush1.bf16.xpose.msra.mxu0 0
  %2406 = vmatprep.subr.bf16.mxu0 0
  %2407 = vmatpush1.bf16.xpose.msra.mxu0 0
  %2408 = vmatprep.subr.bf16.mxu0 0
  %2409 = vmatpush1.bf16.xpose.msra.mxu0 0
  %2410 = vmatprep.subr.bf16.mxu0 0
  %2411 = vmatpush1.bf16.xpose.msra.mxu0 0
  %2412 = vmatprep.subr.bf16.mxu0 0
  %2413 = vmatpush1.bf16.xpose.msra.mxu0 0
  %2414 = vmatprep.subr.bf16.mxu0 0
  %2415 = vmatpush1.bf16.xpose.msra.mxu0 0
  %2416 = vmatprep.subr.bf16.mxu0 0
  %2417 = vmatpush1.bf16.xpose.msra.mxu0 0
  %2418 = vmatprep.subr.bf16.mxu0 0
  %2419 = vmatpush1.bf16.xpose.msra.mxu0 0
  %2420 = vmatprep.subr.bf16.mxu0 0
  %2421 = vmatpush1.bf16.xpose.msra.mxu0 0
  %2422 = vmatprep.subr.bf16.mxu0 0
  %2423 = vmatpush1.bf16.xpose.msra.mxu0 0
  %2424 = vmatprep.subr.bf16.mxu0 0
  %2425 = vmatpush1.bf16.xpose.msra.mxu0 0
  %2426 = vmatprep.subr.bf16.mxu0 0
  %2427 = vmatpush1.bf16.xpose.msra.mxu0 0
  %2428 = vmatprep.mubr.bf16.mxu0 0
  %2429 = vmatmul.mubr.bf16.gmra.mrb[0].mxu0 %v2391
  %v2430 = vpop.f32.mrb[0].mxu0
  %v2431 = vadd.f32 0.0, %v2430
  %v2432 = vpop.f32.mrb[0].mxu0
  %v2433 = vpop.f32.mrb[0].mxu0
  %v2434 = vpop.f32.mrb[0].mxu0
  %2435 = vdwg.mxu0
  %v2436 = vsel %vm330, %v2171, -inf
  %2437 = vmax.xlane.f32.xlu0 %v2436
  %v2438 = vpop.xlane.xlu0 %2437
  %v2439 = vsel %vm330, %v2236, -inf
  %2440 = vmax.xlane.f32.xlu0 %v2439
  %v2441 = vpop.xlane.xlu0 %2440
  %v2442 = vsel %vm330, %v2301, -inf
  %2443 = vmax.xlane.f32.xlu0 %v2442
  %v2444 = vpop.xlane.xlu0 %2443
  %v2445 = vsel %vm330, %v2366, -inf
  %2446 = vmax.xlane.f32.xlu0 %v2445
  %v2447 = vpop.xlane.xlu0 %2446
  %v2448 = vsel %vm330, %v2431, -inf
  %2449 = vmax.xlane.f32.xlu0 %v2448
  %v2450 = vpop.xlane.xlu0 %2449
  %v2451 = vsub.f32 %v2171, %v2438
  %v2452 = vsub.f32 %v2236, %v2441
  %v2453 = vsub.f32 %v2301, %v2444
  %v2454 = vsub.f32 %v2366, %v2447
  %v2455 = vsub.f32 %v2431, %v2450
  %v2456 = vmul.f32 %v2451, 1.442695
  %v2457 = vpow.pop %v2456
  %v2458 = vmul.f32 %v2452, 1.442695
  %v2459 = vpow.pop %v2458
  %v2460 = vmul.f32 %v2453, 1.442695
  %v2461 = vpow.pop %v2460
  %v2462 = vmul.f32 %v2454, 1.442695
  %v2463 = vpow.pop %v2462
  %v2464 = vmul.f32 %v2455, 1.442695
  %v2465 = vpow.pop %v2464
  %v2466 = vsel %vm330, %v2457, 0.0
  %2467 = vadd.xlane.f32.xlu0 %v2466
  %v2468 = vpop.xlane.xlu0 %2467
  %v2469 = vsel %vm330, %v2459, 0.0
  %2470 = vadd.xlane.f32.xlu0 %v2469
  %v2471 = vpop.xlane.xlu0 %2470
  %v2472 = vsel %vm330, %v2461, 0.0
  %2473 = vadd.xlane.f32.xlu0 %v2472
  %v2474 = vpop.xlane.xlu0 %2473
  %v2475 = vsel %vm330, %v2463, 0.0
  %2476 = vadd.xlane.f32.xlu0 %v2475
  %v2477 = vpop.xlane.xlu0 %2476
  %v2478 = vsel %vm330, %v2465, 0.0
  %2479 = vadd.xlane.f32.xlu0 %v2478
  %v2480 = vpop.xlane.xlu0 %2479
  %v2481 = vrcp.pop %v2468
  %v2482 = vrcp.pop %v2471
  %v2483 = vrcp.pop %v2474
  %v2484 = vrcp.pop %v2477
  %v2485 = vrcp.pop %v2480
  %v2486 = vmul.f32 %v2457, %v2481
  %v2487 = vmul.f32 %v2459, %v2482
  %v2488 = vmul.f32 %v2461, %v2483
  %v2489 = vmul.f32 %v2463, %v2484
  %v2490 = vmul.f32 %v2465, %v2485
  %v2491 = vpack.c.bf16 %v2486, %v2486
  %v2492 = vpack.c.bf16 %v2487, %v2487
  %v2493 = vpack.c.bf16 %v2488, %v2488
  %v2494 = vpack.c.bf16 %v2489, %v2489
  %v2495 = vpack.c.bf16 %v2490, %v2490
  %2496 = vrot.lane.b32.xlu0 %v2125, 40
  %v2497 = vpop.permute.xlu0 %2496
  %v2499 = vsel %vm393, %v2491, 0
  %v2502 = vsel %vm397, %v2497, 0
  %2504 = vmatprep.subr.bf16.mxu0 0
  %2505 = vmatpush1.bf16.msra.mxu0 %v2502
  %2506 = vmatprep.subr.bf16.mxu0 0
  %2507 = vmatpush1.bf16.msra.mxu0 0
  %2508 = vmatprep.subr.bf16.mxu0 0
  %2509 = vmatpush1.bf16.msra.mxu0 0
  %2510 = vmatprep.subr.bf16.mxu0 0
  %2511 = vmatpush1.bf16.msra.mxu0 0
  %2512 = vmatprep.subr.bf16.mxu0 0
  %2513 = vmatpush1.bf16.msra.mxu0 0
  %2514 = vmatprep.subr.bf16.mxu0 0
  %2515 = vmatpush1.bf16.msra.mxu0 0
  %2516 = vmatprep.subr.bf16.mxu0 0
  %2517 = vmatpush1.bf16.msra.mxu0 0
  %2518 = vmatprep.subr.bf16.mxu0 0
  %2519 = vmatpush1.bf16.msra.mxu0 0
  %2520 = vmatprep.subr.bf16.mxu0 0
  %2521 = vmatpush1.bf16.msra.mxu0 0
  %2522 = vmatprep.subr.bf16.mxu0 0
  %2523 = vmatpush1.bf16.msra.mxu0 0
  %2524 = vmatprep.subr.bf16.mxu0 0
  %2525 = vmatpush1.bf16.msra.mxu0 0
  %2526 = vmatprep.subr.bf16.mxu0 0
  %2527 = vmatpush1.bf16.msra.mxu0 0
  %2528 = vmatprep.subr.bf16.mxu0 0
  %2529 = vmatpush1.bf16.msra.mxu0 0
  %2530 = vmatprep.subr.bf16.mxu0 0
  %2531 = vmatpush1.bf16.msra.mxu0 0
  %2532 = vmatprep.subr.bf16.mxu0 0
  %2533 = vmatpush1.bf16.msra.mxu0 0
  %2534 = vmatprep.subr.bf16.mxu0 0
  %2535 = vmatpush1.bf16.msra.mxu0 0
  %2536 = vmatprep.mubr.bf16.mxu0 0
  %2537 = vmatmul.mubr.bf16.gmra.mrb[0].mxu0 %v2499
  %v2538 = vpop.f32.mrb[0].mxu0
  %v2539 = vadd.f32 0.0, %v2538
  %v2540 = vpop.f32.mrb[0].mxu0
  %v2541 = vpop.f32.mrb[0].mxu0
  %v2542 = vpop.f32.mrb[0].mxu0
  %2543 = vdwg.mxu0
  %2544 = vrot.lane.b32.xlu0 %v2190, 40
  %v2545 = vpop.permute.xlu0 %2544
  %v2547 = vsel %vm393, %v2492, 0
  %v2550 = vsel %vm397, %v2545, 0
  %2552 = vmatprep.subr.bf16.mxu0 0
  %2553 = vmatpush1.bf16.msra.mxu0 %v2550
  %2554 = vmatprep.subr.bf16.mxu0 0
  %2555 = vmatpush1.bf16.msra.mxu0 0
  %2556 = vmatprep.subr.bf16.mxu0 0
  %2557 = vmatpush1.bf16.msra.mxu0 0
  %2558 = vmatprep.subr.bf16.mxu0 0
  %2559 = vmatpush1.bf16.msra.mxu0 0
  %2560 = vmatprep.subr.bf16.mxu0 0
  %2561 = vmatpush1.bf16.msra.mxu0 0
  %2562 = vmatprep.subr.bf16.mxu0 0
  %2563 = vmatpush1.bf16.msra.mxu0 0
  %2564 = vmatprep.subr.bf16.mxu0 0
  %2565 = vmatpush1.bf16.msra.mxu0 0
  %2566 = vmatprep.subr.bf16.mxu0 0
  %2567 = vmatpush1.bf16.msra.mxu0 0
  %2568 = vmatprep.subr.bf16.mxu0 0
  %2569 = vmatpush1.bf16.msra.mxu0 0
  %2570 = vmatprep.subr.bf16.mxu0 0
  %2571 = vmatpush1.bf16.msra.mxu0 0
  %2572 = vmatprep.subr.bf16.mxu0 0
  %2573 = vmatpush1.bf16.msra.mxu0 0
  %2574 = vmatprep.subr.bf16.mxu0 0
  %2575 = vmatpush1.bf16.msra.mxu0 0
  %2576 = vmatprep.subr.bf16.mxu0 0
  %2577 = vmatpush1.bf16.msra.mxu0 0
  %2578 = vmatprep.subr.bf16.mxu0 0
  %2579 = vmatpush1.bf16.msra.mxu0 0
  %2580 = vmatprep.subr.bf16.mxu0 0
  %2581 = vmatpush1.bf16.msra.mxu0 0
  %2582 = vmatprep.subr.bf16.mxu0 0
  %2583 = vmatpush1.bf16.msra.mxu0 0
  %2584 = vmatprep.mubr.bf16.mxu0 0
  %2585 = vmatmul.mubr.bf16.gmra.mrb[0].mxu0 %v2547
  %v2586 = vpop.f32.mrb[0].mxu0
  %v2587 = vadd.f32 0.0, %v2586
  %v2588 = vpop.f32.mrb[0].mxu0
  %v2589 = vpop.f32.mrb[0].mxu0
  %v2590 = vpop.f32.mrb[0].mxu0
  %2591 = vdwg.mxu0
  %2592 = vrot.lane.b32.xlu0 %v2255, 40
  %v2593 = vpop.permute.xlu0 %2592
  %v2595 = vsel %vm393, %v2493, 0
  %v2598 = vsel %vm397, %v2593, 0
  %2600 = vmatprep.subr.bf16.mxu0 0
  %2601 = vmatpush1.bf16.msra.mxu0 %v2598
  %2602 = vmatprep.subr.bf16.mxu0 0
  %2603 = vmatpush1.bf16.msra.mxu0 0
  %2604 = vmatprep.subr.bf16.mxu0 0
  %2605 = vmatpush1.bf16.msra.mxu0 0
  %2606 = vmatprep.subr.bf16.mxu0 0
  %2607 = vmatpush1.bf16.msra.mxu0 0
  %2608 = vmatprep.subr.bf16.mxu0 0
  %2609 = vmatpush1.bf16.msra.mxu0 0
  %2610 = vmatprep.subr.bf16.mxu0 0
  %2611 = vmatpush1.bf16.msra.mxu0 0
  %2612 = vmatprep.subr.bf16.mxu0 0
  %2613 = vmatpush1.bf16.msra.mxu0 0
  %2614 = vmatprep.subr.bf16.mxu0 0
  %2615 = vmatpush1.bf16.msra.mxu0 0
  %2616 = vmatprep.subr.bf16.mxu0 0
  %2617 = vmatpush1.bf16.msra.mxu0 0
  %2618 = vmatprep.subr.bf16.mxu0 0
  %2619 = vmatpush1.bf16.msra.mxu0 0
  %2620 = vmatprep.subr.bf16.mxu0 0
  %2621 = vmatpush1.bf16.msra.mxu0 0
  %2622 = vmatprep.subr.bf16.mxu0 0
  %2623 = vmatpush1.bf16.msra.mxu0 0
  %2624 = vmatprep.subr.bf16.mxu0 0
  %2625 = vmatpush1.bf16.msra.mxu0 0
  %2626 = vmatprep.subr.bf16.mxu0 0
  %2627 = vmatpush1.bf16.msra.mxu0 0
  %2628 = vmatprep.subr.bf16.mxu0 0
  %2629 = vmatpush1.bf16.msra.mxu0 0
  %2630 = vmatprep.subr.bf16.mxu0 0
  %2631 = vmatpush1.bf16.msra.mxu0 0
  %2632 = vmatprep.mubr.bf16.mxu0 0
  %2633 = vmatmul.mubr.bf16.gmra.mrb[0].mxu0 %v2595
  %v2634 = vpop.f32.mrb[0].mxu0
  %v2635 = vadd.f32 0.0, %v2634
  %v2636 = vpop.f32.mrb[0].mxu0
  %v2637 = vpop.f32.mrb[0].mxu0
  %v2638 = vpop.f32.mrb[0].mxu0
  %2639 = vdwg.mxu0
  %2640 = vrot.lane.b32.xlu0 %v2320, 40
  %v2641 = vpop.permute.xlu0 %2640
  %v2643 = vsel %vm393, %v2494, 0
  %v2646 = vsel %vm397, %v2641, 0
  %2648 = vmatprep.subr.bf16.mxu0 0
  %2649 = vmatpush1.bf16.msra.mxu0 %v2646
  %2650 = vmatprep.subr.bf16.mxu0 0
  %2651 = vmatpush1.bf16.msra.mxu0 0
  %2652 = vmatprep.subr.bf16.mxu0 0
  %2653 = vmatpush1.bf16.msra.mxu0 0
  %2654 = vmatprep.subr.bf16.mxu0 0
  %2655 = vmatpush1.bf16.msra.mxu0 0
  %2656 = vmatprep.subr.bf16.mxu0 0
  %2657 = vmatpush1.bf16.msra.mxu0 0
  %2658 = vmatprep.subr.bf16.mxu0 0
  %2659 = vmatpush1.bf16.msra.mxu0 0
  %2660 = vmatprep.subr.bf16.mxu0 0
  %2661 = vmatpush1.bf16.msra.mxu0 0
  %2662 = vmatprep.subr.bf16.mxu0 0
  %2663 = vmatpush1.bf16.msra.mxu0 0
  %2664 = vmatprep.subr.bf16.mxu0 0
  %2665 = vmatpush1.bf16.msra.mxu0 0
  %2666 = vmatprep.subr.bf16.mxu0 0
  %2667 = vmatpush1.bf16.msra.mxu0 0
  %2668 = vmatprep.subr.bf16.mxu0 0
  %2669 = vmatpush1.bf16.msra.mxu0 0
  %2670 = vmatprep.subr.bf16.mxu0 0
  %2671 = vmatpush1.bf16.msra.mxu0 0
  %2672 = vmatprep.subr.bf16.mxu0 0
  %2673 = vmatpush1.bf16.msra.mxu0 0
  %2674 = vmatprep.subr.bf16.mxu0 0
  %2675 = vmatpush1.bf16.msra.mxu0 0
  %2676 = vmatprep.subr.bf16.mxu0 0
  %2677 = vmatpush1.bf16.msra.mxu0 0
  %2678 = vmatprep.subr.bf16.mxu0 0
  %2679 = vmatpush1.bf16.msra.mxu0 0
  %2680 = vmatprep.mubr.bf16.mxu0 0
  %2681 = vmatmul.mubr.bf16.gmra.mrb[0].mxu0 %v2643
  %v2682 = vpop.f32.mrb[0].mxu0
  %v2683 = vadd.f32 0.0, %v2682
  %v2684 = vpop.f32.mrb[0].mxu0
  %v2685 = vpop.f32.mrb[0].mxu0
  %v2686 = vpop.f32.mrb[0].mxu0
  %2687 = vdwg.mxu0
  %2688 = vrot.lane.b32.xlu0 %v2385, 40
  %v2689 = vpop.permute.xlu0 %2688
  %v2691 = vsel %vm393, %v2495, 0
  %v2694 = vsel %vm397, %v2689, 0
  %2696 = vmatprep.subr.bf16.mxu0 0
  %2697 = vmatpush1.bf16.msra.mxu0 %v2694
  %2698 = vmatprep.subr.bf16.mxu0 0
  %2699 = vmatpush1.bf16.msra.mxu0 0
  %2700 = vmatprep.subr.bf16.mxu0 0
  %2701 = vmatpush1.bf16.msra.mxu0 0
  %2702 = vmatprep.subr.bf16.mxu0 0
  %2703 = vmatpush1.bf16.msra.mxu0 0
  %2704 = vmatprep.subr.bf16.mxu0 0
  %2705 = vmatpush1.bf16.msra.mxu0 0
  %2706 = vmatprep.subr.bf16.mxu0 0
  %2707 = vmatpush1.bf16.msra.mxu0 0
  %2708 = vmatprep.subr.bf16.mxu0 0
  %2709 = vmatpush1.bf16.msra.mxu0 0
  %2710 = vmatprep.subr.bf16.mxu0 0
  %2711 = vmatpush1.bf16.msra.mxu0 0
  %2712 = vmatprep.subr.bf16.mxu0 0
  %2713 = vmatpush1.bf16.msra.mxu0 0
  %2714 = vmatprep.subr.bf16.mxu0 0
  %2715 = vmatpush1.bf16.msra.mxu0 0
  %2716 = vmatprep.subr.bf16.mxu0 0
  %2717 = vmatpush1.bf16.msra.mxu0 0
  %2718 = vmatprep.subr.bf16.mxu0 0
  %2719 = vmatpush1.bf16.msra.mxu0 0
  %2720 = vmatprep.subr.bf16.mxu0 0
  %2721 = vmatpush1.bf16.msra.mxu0 0
  %2722 = vmatprep.subr.bf16.mxu0 0
  %2723 = vmatpush1.bf16.msra.mxu0 0
  %2724 = vmatprep.subr.bf16.mxu0 0
  %2725 = vmatpush1.bf16.msra.mxu0 0
  %2726 = vmatprep.subr.bf16.mxu0 0
  %2727 = vmatpush1.bf16.msra.mxu0 0
  %2728 = vmatprep.mubr.bf16.mxu0 0
  %2729 = vmatmul.mubr.bf16.gmra.mrb[0].mxu0 %v2691
  %v2730 = vpop.f32.mrb[0].mxu0
  %v2731 = vadd.f32 0.0, %v2730
  %v2732 = vpop.f32.mrb[0].mxu0
  %v2733 = vpop.f32.mrb[0].mxu0
  %v2734 = vpop.f32.mrb[0].mxu0
  %2735 = vdwg.mxu0
  %v2736 = vpack.c.bf16 %v2539, %v2539
  %v2737 = vpack.c.bf16 %v2587, %v2587
  %v2738 = vpack.c.bf16 %v2635, %v2635
  %v2739 = vpack.c.bf16 %v2683, %v2683
  %v2740 = vpack.c.bf16 %v2731, %v2731
  %v2747 = vunpack.c.l.s4 1966171168
  %v2748 = vunpack.c.0.s8 %v2747
  %v2749 = vlaneseq
  %v2750 = vshrl.u32 %v2749, 7
  %v2751 = vsub.s32 %v2748, %v2750
  %v2752 = vrot.slane %v2736, %v2751
  %v2754 = vunpack.c.l.s4 1966171168
  %v2755 = vunpack.c.0.s8 %v2754
  %v2756 = vlaneseq
  %v2757 = vshrl.u32 %v2756, 7
  %v2758 = vsub.s32 %v2755, %v2757
  %v2759 = vrot.slane %v2752, %v2758
  %v2761 = vunpack.c.l.s4 1966171168
  %v2762 = vunpack.c.0.s8 %v2761
  %v2763 = vlaneseq
  %v2764 = vshrl.u32 %v2763, 7
  %v2765 = vsub.s32 %v2762, %v2764
  %v2766 = vrot.slane %v2737, %v2765
  %v2768 = vunpack.c.l.s4 1966171168
  %v2769 = vunpack.c.0.s8 %v2768
  %v2770 = vlaneseq
  %v2771 = vshrl.u32 %v2770, 7
  %v2772 = vsub.s32 %v2769, %v2771
  %v2773 = vrot.slane %v2766, %v2772
  %v2775 = vunpack.c.l.s4 1966171168
  %v2776 = vunpack.c.0.s8 %v2775
  %v2777 = vlaneseq
  %v2778 = vshrl.u32 %v2777, 7
  %v2779 = vsub.s32 %v2776, %v2778
  %v2780 = vrot.slane %v2738, %v2779
  %v2782 = vunpack.c.l.s4 1966171168
  %v2783 = vunpack.c.0.s8 %v2782
  %v2784 = vlaneseq
  %v2785 = vshrl.u32 %v2784, 7
  %v2786 = vsub.s32 %v2783, %v2785
  %v2787 = vrot.slane %v2780, %v2786
  %v2789 = vunpack.c.l.s4 1966171168
  %v2790 = vunpack.c.0.s8 %v2789
  %v2791 = vlaneseq
  %v2792 = vshrl.u32 %v2791, 7
  %v2793 = vsub.s32 %v2790, %v2792
  %v2794 = vrot.slane %v2739, %v2793
  %v2796 = vunpack.c.l.s4 1966171168
  %v2797 = vunpack.c.0.s8 %v2796
  %v2798 = vlaneseq
  %v2799 = vshrl.u32 %v2798, 7
  %v2800 = vsub.s32 %v2797, %v2799
  %v2801 = vrot.slane %v2794, %v2800
  %v2803 = vunpack.c.l.s4 1966171168
  %v2804 = vunpack.c.0.s8 %v2803
  %v2805 = vlaneseq
  %v2806 = vshrl.u32 %v2805, 7
  %v2807 = vsub.s32 %v2804, %v2806
  %v2808 = vrot.slane %v2740, %v2807
  %v2810 = vunpack.c.l.s4 1966171168
  %v2811 = vunpack.c.0.s8 %v2810
  %v2812 = vlaneseq
  %v2813 = vshrl.u32 %v2812, 7
  %v2814 = vsub.s32 %v2811, %v2813
  %v2815 = vrot.slane %v2808, %v2814
  %2816 = vrot.lane.b32.xlu0 %v2759, 24
  %v2817 = vpop.permute.xlu0 %2816
  %2818 = vrot.lane.b32.xlu0 %v2773, 24
  %v2819 = vpop.permute.xlu0 %2818
  %2820 = vrot.lane.b32.xlu0 %v2787, 24
  %v2821 = vpop.permute.xlu0 %2820
  %2822 = vrot.lane.b32.xlu0 %v2801, 24
  %v2823 = vpop.permute.xlu0 %2822
  %2824 = vrot.lane.b32.xlu0 %v2815, 24
  %v2825 = vpop.permute.xlu0 %2824
  %vm2831 = vcmask 254144
  %2832 = vst.msk [vmem:[%s1] sm:$0x1] %vm2831, %v2817
  %2833 = vst.msk [vmem:[%s1 + $0x1] sm:$0x1] %vm2831, %v2819
  %2834 = vst.msk [vmem:[%s1 + $0x2] sm:$0x1] %vm2831, %v2821
  %2835 = vst.msk [vmem:[%s1 + $0x3] sm:$0x1] %vm2831, %v2823
  %2836 = vst.msk [vmem:[%s1 + $0x4] sm:$0x1] %vm2831, %v2825
  // Predicated region
  $region6: #{vit_forward.14} parent=0 // pred_check
    _
  $region7: #{vit_forward.14} parent=0 // pred_check_branch
    %2838 = sbr.rel (0) target = $region9
  $region8: #{vit_forward.14} parent=0 // pred_region
    _
  $region9: #{vit_forward.14} parent=0 // pred_fallthru
    _
  // Predicated region
  $region10: #{vit_forward.14} parent=0 // pred_check
    _
  $region11: #{vit_forward.14} parent=0 // pred_check_branch
    %2840 = sbr.rel (0) target = $region13
  $region12: #{vit_forward.14} parent=0 // pred_region
    _
  $region13: #{vit_forward.14} parent=0 // pred_fallthru
    _

</llo_original>
